<compile_context>
chip_gen: v5e
topology: v5e:2x2
jax: 0.10.0
libtpu: 0.0.40
codegen_flags: <defaults>
</compile_context>

<pallas_src>
import functools

import jax
import jax.numpy as jnp
from jax.experimental import pallas as pl
from jax.experimental.pallas import tpu as pltpu


# ----------------------------------------------------------------------------
# Kernels
# ----------------------------------------------------------------------------
def _conv_bn_kernel(p_ref, w_ref, b_ref, s_ref, t_ref, o_ref):
    """One lane-dense row tile of: BN(ReLU(W @ P + b)).  W resident, P streamed."""
    y = jnp.dot(w_ref[...], p_ref[...], preferred_element_type=jnp.float32)
    y = jnp.maximum(y + b_ref[...], 0.0)                 # Conv bias + ReLU
    o_ref[...] = (y * s_ref[...] + t_ref[...]).astype(o_ref.dtype)  # folded BN


def _transition_pool_kernel(q0_ref, q1_ref, q2_ref, q3_ref, w_ref, b_ref, o_ref):
    """Fused transition 1x1 conv + 2x2 max-pool (4 pool phases per column)."""
    w = w_ref[...]
    y = jnp.dot(w, q0_ref[...], preferred_element_type=jnp.float32)
    y = jnp.maximum(y, jnp.dot(w, q1_ref[...], preferred_element_type=jnp.float32))
    y = jnp.maximum(y, jnp.dot(w, q2_ref[...], preferred_element_type=jnp.float32))
    y = jnp.maximum(y, jnp.dot(w, q3_ref[...], preferred_element_type=jnp.float32))
    o_ref[...] = (y + b_ref[...]).astype(o_ref.dtype)


def _head_kernel(p_ref, w_ref, b_ref, pool_ref, o_ref):
    """block5 conv (GEMM) + ReLU + AvgPool2d(6) + log_softmax for a batch tile."""
    y = jnp.dot(p_ref[...], w_ref[...], preferred_element_type=jnp.float32)
    y = jnp.maximum(y + b_ref[...], 0.0)                              # (BT*36, 10)
    avg = jnp.dot(pool_ref[...], y, preferred_element_type=jnp.float32)  # (BT, 10)
    m = jnp.max(avg, axis=-1, keepdims=True)
    s = avg - m
    lse = jnp.log(jnp.sum(jnp.exp(s), axis=-1, keepdims=True))
    o_ref[...] = s - lse                                              # log_softmax


# ----------------------------------------------------------------------------
# Pallas wrappers
# ----------------------------------------------------------------------------
def _row_tile(r):
    for tr in (1024, 512, 256):
        if r >= 2 * tr:
            return tr
    return 128


def _pad_cols(x, multiple):
    r = x.shape[-1]
    rp = pl.cdiv(r, multiple) * multiple
    if rp != r:
        x = jnp.pad(x, ((0, 0), (0, rp - r)))
    return x


def conv_bn_layer(patches, w, b, scale, shift):
    """patches: (K, R) bf16; w: (Cout, K) bf16; b/scale/shift: (Cout, 1) f32."""
    K, R = patches.shape
    Cout = w.shape[0]
    tr = _row_tile(R)
    patches = _pad_cols(patches, tr)
    Rp = patches.shape[1]
    out = pl.pallas_call(
        _conv_bn_kernel,
        out_shape=jax.ShapeDtypeStruct((Cout, Rp), jnp.bfloat16),
        grid=(Rp // tr,),
        in_specs=[
            pl.BlockSpec((K, tr), lambda i: (0, i)),      # streamed patch tile
            pl.BlockSpec((Cout, K), lambda i: (0, 0)),    # resident weight
            pl.BlockSpec((Cout, 1), lambda i: (0, 0)),    # resident bias
            pl.BlockSpec((Cout, 1), lambda i: (0, 0)),    # resident BN scale
            pl.BlockSpec((Cout, 1), lambda i: (0, 0)),    # resident BN shift
        ],
        out_specs=pl.BlockSpec((Cout, tr), lambda i: (0, i)),
        compiler_params=pltpu.CompilerParams(dimension_semantics=("parallel",)),
    )(patches, w, b, scale, shift)
    return out[:, :R]


def transition_pool_layer(quads, w, b):
    """quads: 4 x (Cin, R) bf16 (2x2 pool phases); w: (Cout, Cin); b: (Cout, 1)."""
    Cin, R = quads[0].shape
    Cout = w.shape[0]
    tr = _row_tile(R)
    quads = [_pad_cols(q, tr) for q in quads]
    Rp = quads[0].shape[1]
    out = pl.pallas_call(
        _transition_pool_kernel,
        out_shape=jax.ShapeDtypeStruct((Cout, Rp), jnp.bfloat16),
        grid=(Rp // tr,),
        in_specs=[pl.BlockSpec((Cin, tr), lambda i: (0, i))] * 4
                 + [pl.BlockSpec((Cout, Cin), lambda i: (0, 0)),
                    pl.BlockSpec((Cout, 1), lambda i: (0, 0))],
        out_specs=pl.BlockSpec((Cout, tr), lambda i: (0, i)),
        compiler_params=pltpu.CompilerParams(dimension_semantics=("parallel",)),
    )(*quads, w, b)
    return out[:, :R]


def head_layer(patches, w, b, n_images, bt=8):
    """patches: (N*36, 126) bf16 row-major; returns (N, 10) f32 log-probs."""
    S = 36                                    # 6x6 block5 output positions
    K = patches.shape[1]
    Cout = w.shape[1]
    n_pad = pl.cdiv(n_images, bt) * bt
    if n_pad * S != patches.shape[0]:
        patches = jnp.pad(patches, ((0, n_pad * S - patches.shape[0]), (0, 0)))
    # Block-local AvgPool2d(6) matrix: row i averages rows [i*36, (i+1)*36).
    pool = jnp.repeat(jnp.eye(bt, dtype=jnp.float32), S, axis=1) / float(S)
    out = pl.pallas_call(
        _head_kernel,
        out_shape=jax.ShapeDtypeStruct((n_pad, Cout), jnp.float32),
        grid=(n_pad // bt,),
        in_specs=[
            pl.BlockSpec((bt * S, K), lambda i: (i, 0)),   # streamed patch tile
            pl.BlockSpec((K, Cout), lambda i: (0, 0)),     # resident weight
            pl.BlockSpec((1, Cout), lambda i: (0, 0)),     # resident bias
            pl.BlockSpec((bt, bt * S), lambda i: (0, 0)),  # resident pool matrix
        ],
        out_specs=pl.BlockSpec((bt, Cout), lambda i: (i, 0)),
        compiler_params=pltpu.CompilerParams(dimension_semantics=("parallel",)),
    )(patches, w, b, pool)
    return out[:n_images]


# ----------------------------------------------------------------------------
# Glue: channel-major im2col, parameters, forward
# ----------------------------------------------------------------------------
def im2col_cm(x, kh, kw):
    """x: (C, N, H, W) -> ((kh*kw*C, N*Ho*Wo), (Ho, Wo)), valid-conv patches."""
    C, N, H, W = x.shape
    Ho, Wo = H - kh + 1, W - kw + 1
    cols = [x[:, :, i:i + Ho, j:j + Wo] for i in range(kh) for j in range(kw)]
    p = jnp.concatenate(cols, axis=0).reshape(kh * kw * C, N * Ho * Wo)
    return p, (Ho, Wo)


def init_params(key):
    """Deterministic synthetic parameters matching Model3's shapes."""
    eps = 1e-5
    p = {}

    def conv_t(key, kh, kw, cin, cout):
        kw_, kb_ = jax.random.split(key)
        w = 0.1 * jax.random.normal(kw_, (kh, kw, cin, cout), jnp.float32)  # HWIO
        b = 0.05 * jax.random.normal(kb_, (cout, 1), jnp.float32)
        return jnp.transpose(w.reshape(kh * kw * cin, cout)), b             # (Cout, K)

    def bn(key, c):
        k1, k2, k3, k4 = jax.random.split(key, 4)
        gamma = 1.0 + 0.1 * jax.random.normal(k1, (c, 1), jnp.float32)
        beta = 0.1 * jax.random.normal(k2, (c, 1), jnp.float32)
        rmean = 0.1 * jax.random.normal(k3, (c, 1), jnp.float32)
        rvar = 1.0 + 0.1 * jnp.abs(jax.random.normal(k4, (c, 1), jnp.float32))
        scale = gamma / jnp.sqrt(rvar + eps)
        shift = beta - rmean * scale
        return scale, shift

    keys = jax.random.split(key, 10)
    p["w1"], p["b1"] = conv_t(keys[0], 3, 3, 1, 16)
    p["s1"], p["t1"] = bn(keys[1], 16)
    p["w2"], p["b2"] = conv_t(keys[2], 3, 3, 16, 12)
    p["s2"], p["t2"] = bn(keys[3], 12)
    p["wt"], p["bt"] = conv_t(keys[4], 1, 1, 12, 24)       # transition 1x1 (no BN)
    p["w3"], p["b3"] = conv_t(keys[5], 3, 3, 24, 12)
    p["s3"], p["t3"] = bn(keys[6], 12)
    p["w4"], p["b4"] = conv_t(keys[7], 3, 3, 12, 14)
    p["s4"], p["t4"] = bn(keys[8], 14)
    kw_, kb_ = jax.random.split(keys[9])                    # block5 head (row-major)
    p["w5"] = 0.1 * jax.random.normal(kw_, (3, 3, 14, 10), jnp.float32).reshape(126, 10)
    p["b5"] = 0.05 * jax.random.normal(kb_, (1, 10), jnp.float32)
    return p


def forward(params, x_nchw):
    bf16 = jnp.bfloat16
    N = x_nchw.shape[0]
    x = jnp.transpose(x_nchw.astype(jnp.float32), (1, 0, 2, 3))   # (1, N, 28, 28)

    def wq(name):
        return params[name].astype(bf16)

    # block1: Conv(1->16,3) + ReLU + BN   (Dropout = identity in eval)
    p, (h, w) = im2col_cm(x, 3, 3)
    a = conv_bn_layer(p.astype(bf16), wq("w1"), params["b1"], params["s1"], params["t1"])
    x = a.reshape(16, N, h, w)

    # block2: Conv(16->12,3) + ReLU + BN
    p, (h, w) = im2col_cm(x, 3, 3)
    a = conv_bn_layer(p.astype(bf16), wq("w2"), params["b2"], params["s2"], params["t2"])
    x = a.reshape(12, N, h, w)

    # transition_block1 (Conv 12->24, 1x1, no ReLU/BN) fused with MaxPool2d(2,2)
    quads = [x[:, :, i::2, j::2].reshape(12, -1) for i in (0, 1) for j in (0, 1)]
    a = transition_pool_layer(quads, wq("wt"), params["bt"])
    h, w = h // 2, w // 2
    x = a.reshape(24, N, h, w)

    # block3: Conv(24->12,3) + ReLU + BN
    p, (h, w) = im2col_cm(x, 3, 3)
    a = conv_bn_layer(p.astype(bf16), wq("w3"), params["b3"], params["s3"], params["t3"])
    x = a.reshape(12, N, h, w)

    # block4: Conv(12->14,3) + ReLU + BN
    p, (h, w) = im2col_cm(x, 3, 3)
    a = conv_bn_layer(p.astype(bf16), wq("w4"), params["b4"], params["s4"], params["t4"])
    x = a.reshape(14, N, h, w)

    # block5: Conv(14->10,3) + ReLU + AvgPool2d(6) + log_softmax (fused head)
    x_nhwc = jnp.transpose(x, (1, 2, 3, 0))                       # (N, 8, 8, 14)
    cols = [x_nhwc[:, i:i + 6, j:j + 6, :] for i in range(3) for j in range(3)]
    p5 = jnp.concatenate(cols, axis=-1).reshape(N * 36, 126)
    return head_layer(p5.astype(bf16), wq("w5"), params["b5"], N)  # (N, 10)


if __name__ == "__main__":
    key = jax.random.PRNGKey(0)
    k_params, k_x = jax.random.split(key)
    params = init_params(k_params)
    # MNIST-like input implied by the architecture: 28x28 single-channel (NCHW).
    x = jax.random.normal(k_x, (2, 1, 28, 28), jnp.float32)
    fwd = jax.jit(forward)
    out = fwd(params, x)
    jax.block_until_ready(out)
    assert out.shape == (2, 10)
    assert bool(jnp.all(jnp.isfinite(out)))
    print("KERNEL_OK")
</pallas_src>

<mosaic_0001>
module attributes {stable_mosaic.version = 11 : i64} {
  func.func @_conv_bn_kernel(%arg0: i32, %arg1: memref<9x512xbf16, #tpu.memory_space<vmem>>, %arg2: memref<16x9xbf16, #tpu.memory_space<vmem>>, %arg3: memref<16x1xf32, #tpu.memory_space<vmem>>, %arg4: memref<16x1xf32, #tpu.memory_space<vmem>>, %arg5: memref<16x1xf32, #tpu.memory_space<vmem>>, %arg6: memref<16x512xbf16, #tpu.memory_space<vmem>>) attributes {dimension_semantics = [#tpu.dimension_semantics<parallel>], iteration_bounds = array<i64: 3>, scalar_prefetch = 0 : i64, scratch_operands = 0 : i64, tpu.core_type = #tpu.core_type<tc>, window_params = [{transform_indices = @transform_0, window_bounds = array<i64: 9, 512>}, {pipeline_mode = #tpu.pipeline_mode<synchronous>, transform_indices = @transform_1, window_bounds = array<i64: 16, 9>}, {pipeline_mode = #tpu.pipeline_mode<synchronous>, transform_indices = @transform_2, window_bounds = array<i64: 16, 1>}, {pipeline_mode = #tpu.pipeline_mode<synchronous>, transform_indices = @transform_3, window_bounds = array<i64: 16, 1>}, {pipeline_mode = #tpu.pipeline_mode<synchronous>, transform_indices = @transform_4, window_bounds = array<i64: 16, 1>}, {transform_indices = @transform_5, window_bounds = array<i64: 16, 512>}]} {
    %c0 = arith.constant 0 : index
    %c0_0 = arith.constant 0 : index
    %0 = vector.load %arg2[%c0, %c0_0] : memref<16x9xbf16, #tpu.memory_space<vmem>>, vector<16x9xbf16>
    %c0_1 = arith.constant 0 : index
    %c0_2 = arith.constant 0 : index
    %1 = vector.load %arg1[%c0_1, %c0_2] : memref<9x512xbf16, #tpu.memory_space<vmem>>, vector<9x512xbf16>
    %cst = arith.constant dense<0.000000e+00> : vector<16x512xf32>
    %2 = tpu.matmul %0, %1, %cst {dimension_numbers = #tpu.dot_dimension_numbers<[1], [0], [0], [1], [0, 0, 1, 1], [], []>} : vector<16x9xbf16>, vector<9x512xbf16>, vector<16x512xf32> -> vector<16x512xf32>
    %c0_3 = arith.constant 0 : index
    %c0_4 = arith.constant 0 : index
    %3 = vector.load %arg3[%c0_3, %c0_4] : memref<16x1xf32, #tpu.memory_space<vmem>>, vector<16x1xf32>
    %4 = vector.broadcast %3 : vector<16x1xf32> to vector<16x512xf32>
    %5 = arith.addf %2, %4 : vector<16x512xf32>
    %cst_5 = arith.constant 0.000000e+00 : f32
    %6 = vector.broadcast %cst_5 : f32 to vector<16x512xf32>
    %7 = arith.maximumf %5, %6 : vector<16x512xf32>
    %c0_6 = arith.constant 0 : index
    %c0_7 = arith.constant 0 : index
    %8 = vector.load %arg4[%c0_6, %c0_7] : memref<16x1xf32, #tpu.memory_space<vmem>>, vector<16x1xf32>
    %9 = vector.broadcast %8 : vector<16x1xf32> to vector<16x512xf32>
    %10 = arith.mulf %7, %9 : vector<16x512xf32>
    %c0_8 = arith.constant 0 : index
    %c0_9 = arith.constant 0 : index
    %11 = vector.load %arg5[%c0_8, %c0_9] : memref<16x1xf32, #tpu.memory_space<vmem>>, vector<16x1xf32>
    %12 = vector.broadcast %11 : vector<16x1xf32> to vector<16x512xf32>
    %13 = arith.addf %10, %12 : vector<16x512xf32>
    %14 = arith.truncf %13 : vector<16x512xf32> to vector<16x512xbf16>
    %c0_10 = arith.constant 0 : index
    %c0_11 = arith.constant 0 : index
    %15 = vector.load %arg6[%c0_10, %c0_11] : memref<16x512xbf16, #tpu.memory_space<vmem>>, vector<16x512xbf16>
    tpu.vector_store %arg6[%c0_10, %c0_11], %14 {strides = array<i32>} : memref<16x512xbf16, #tpu.memory_space<vmem>>, vector<16x512xbf16>,
    return
  }
  func.func @transform_0(%arg0: i32) -> (i32, i32) {
    %c0_i32 = arith.constant 0 : i32
    %c0_i32_0 = arith.constant 0 : i32
    return %c0_i32, %arg0 : i32, i32
  }
  func.func @transform_1(%arg0: i32) -> (i32, i32) {
    %c0_i32 = arith.constant 0 : i32
    %c0_i32_0 = arith.constant 0 : i32
    %c0_i32_1 = arith.constant 0 : i32
    return %c0_i32, %c0_i32_0 : i32, i32
  }
  func.func @transform_2(%arg0: i32) -> (i32, i32) {
    %c0_i32 = arith.constant 0 : i32
    %c0_i32_0 = arith.constant 0 : i32
    %c0_i32_1 = arith.constant 0 : i32
    return %c0_i32, %c0_i32_0 : i32, i32
  }
  func.func @transform_3(%arg0: i32) -> (i32, i32) {
    %c0_i32 = arith.constant 0 : i32
    %c0_i32_0 = arith.constant 0 : i32
    %c0_i32_1 = arith.constant 0 : i32
    return %c0_i32, %c0_i32_0 : i32, i32
  }
  func.func @transform_4(%arg0: i32) -> (i32, i32) {
    %c0_i32 = arith.constant 0 : i32
    %c0_i32_0 = arith.constant 0 : i32
    %c0_i32_1 = arith.constant 0 : i32
    return %c0_i32, %c0_i32_0 : i32, i32
  }
  func.func @transform_5(%arg0: i32) -> (i32, i32) {
    %c0_i32 = arith.constant 0 : i32
    %c0_i32_0 = arith.constant 0 : i32
    return %c0_i32, %arg0 : i32, i32
  }
}

module attributes {stable_mosaic.version = 11 : i64} {
  func.func @_conv_bn_kernel(%arg0: i32, %arg1: memref<144x512xbf16, #tpu.memory_space<vmem>>, %arg2: memref<12x144xbf16, #tpu.memory_space<vmem>>, %arg3: memref<12x1xf32, #tpu.memory_space<vmem>>, %arg4: memref<12x1xf32, #tpu.memory_space<vmem>>, %arg5: memref<12x1xf32, #tpu.memory_space<vmem>>, %arg6: memref<12x512xbf16, #tpu.memory_space<vmem>>) attributes {dimension_semantics = [#tpu.dimension_semantics<parallel>], iteration_bounds = array<i64: 3>, scalar_prefetch = 0 : i64, scratch_operands = 0 : i64, tpu.core_type = #tpu.core_type<tc>, window_params = [{transform_indices = @transform_0, window_bounds = array<i64: 144, 512>}, {pipeline_mode = #tpu.pipeline_mode<synchronous>, transform_indices = @transform_1, window_bounds = array<i64: 12, 144>}, {pipeline_mode = #tpu.pipeline_mode<synchronous>, transform_indices = @transform_2, window_bounds = array<i64: 12, 1>}, {pipeline_mode = #tpu.pipeline_mode<synchronous>, transform_indices = @transform_3, window_bounds = array<i64: 12, 1>}, {pipeline_mode = #tpu.pipeline_mode<synchronous>, transform_indices = @transform_4, window_bounds = array<i64: 12, 1>}, {transform_indices = @transform_5, window_bounds = array<i64: 12, 512>}]} {
    %c0 = arith.constant 0 : index
    %c0_0 = arith.constant 0 : index
    %0 = vector.load %arg2[%c0, %c0_0] : memref<12x144xbf16, #tpu.memory_space<vmem>>, vector<12x144xbf16>
    %c0_1 = arith.constant 0 : index
    %c0_2 = arith.constant 0 : index
    %1 = vector.load %arg1[%c0_1, %c0_2] : memref<144x512xbf16, #tpu.memory_space<vmem>>, vector<144x512xbf16>
    %cst = arith.constant dense<0.000000e+00> : vector<12x512xf32>
    %2 = tpu.matmul %0, %1, %cst {dimension_numbers = #tpu.dot_dimension_numbers<[1], [0], [0], [1], [0, 0, 1, 1], [], []>} : vector<12x144xbf16>, vector<144x512xbf16>, vector<12x512xf32> -> vector<12x512xf32>
    %c0_3 = arith.constant 0 : index
    %c0_4 = arith.constant 0 : index
    %3 = vector.load %arg3[%c0_3, %c0_4] : memref<12x1xf32, #tpu.memory_space<vmem>>, vector<12x1xf32>
    %4 = vector.broadcast %3 : vector<12x1xf32> to vector<12x512xf32>
    %5 = arith.addf %2, %4 : vector<12x512xf32>
    %cst_5 = arith.constant 0.000000e+00 : f32
    %6 = vector.broadcast %cst_5 : f32 to vector<12x512xf32>
    %7 = arith.maximumf %5, %6 : vector<12x512xf32>
    %c0_6 = arith.constant 0 : index
    %c0_7 = arith.constant 0 : index
    %8 = vector.load %arg4[%c0_6, %c0_7] : memref<12x1xf32, #tpu.memory_space<vmem>>, vector<12x1xf32>
    %9 = vector.broadcast %8 : vector<12x1xf32> to vector<12x512xf32>
    %10 = arith.mulf %7, %9 : vector<12x512xf32>
    %c0_8 = arith.constant 0 : index
    %c0_9 = arith.constant 0 : index
    %11 = vector.load %arg5[%c0_8, %c0_9] : memref<12x1xf32, #tpu.memory_space<vmem>>, vector<12x1xf32>
    %12 = vector.broadcast %11 : vector<12x1xf32> to vector<12x512xf32>
    %13 = arith.addf %10, %12 : vector<12x512xf32>
    %14 = arith.truncf %13 : vector<12x512xf32> to vector<12x512xbf16>
    %c0_10 = arith.constant 0 : index
    %c0_11 = arith.constant 0 : index
    %15 = vector.load %arg6[%c0_10, %c0_11] : memref<12x512xbf16, #tpu.memory_space<vmem>>, vector<12x512xbf16>
    tpu.vector_store %arg6[%c0_10, %c0_11], %14 {strides = array<i32>} : memref<12x512xbf16, #tpu.memory_space<vmem>>, vector<12x512xbf16>,
    return
  }
  func.func @transform_0(%arg0: i32) -> (i32, i32) {
    %c0_i32 = arith.constant 0 : i32
    %c0_i32_0 = arith.constant 0 : i32
    return %c0_i32, %arg0 : i32, i32
  }
  func.func @transform_1(%arg0: i32) -> (i32, i32) {
    %c0_i32 = arith.constant 0 : i32
    %c0_i32_0 = arith.constant 0 : i32
    %c0_i32_1 = arith.constant 0 : i32
    return %c0_i32, %c0_i32_0 : i32, i32
  }
  func.func @transform_2(%arg0: i32) -> (i32, i32) {
    %c0_i32 = arith.constant 0 : i32
    %c0_i32_0 = arith.constant 0 : i32
    %c0_i32_1 = arith.constant 0 : i32
    return %c0_i32, %c0_i32_0 : i32, i32
  }
  func.func @transform_3(%arg0: i32) -> (i32, i32) {
    %c0_i32 = arith.constant 0 : i32
    %c0_i32_0 = arith.constant 0 : i32
    %c0_i32_1 = arith.constant 0 : i32
    return %c0_i32, %c0_i32_0 : i32, i32
  }
  func.func @transform_4(%arg0: i32) -> (i32, i32) {
    %c0_i32 = arith.constant 0 : i32
    %c0_i32_0 = arith.constant 0 : i32
    %c0_i32_1 = arith.constant 0 : i32
    return %c0_i32, %c0_i32_0 : i32, i32
  }
  func.func @transform_5(%arg0: i32) -> (i32, i32) {
    %c0_i32 = arith.constant 0 : i32
    %c0_i32_0 = arith.constant 0 : i32
    return %c0_i32, %arg0 : i32, i32
  }
}

module attributes {stable_mosaic.version = 11 : i64} {
  func.func @_transition_pool_kernel(%arg0: i32, %arg1: memref<12x128xbf16, #tpu.memory_space<vmem>>, %arg2: memref<12x128xbf16, #tpu.memory_space<vmem>>, %arg3: memref<12x128xbf16, #tpu.memory_space<vmem>>, %arg4: memref<12x128xbf16, #tpu.memory_space<vmem>>, %arg5: memref<24x12xbf16, #tpu.memory_space<vmem>>, %arg6: memref<24x1xf32, #tpu.memory_space<vmem>>, %arg7: memref<24x128xbf16, #tpu.memory_space<vmem>>) attributes {dimension_semantics = [#tpu.dimension_semantics<parallel>], iteration_bounds = array<i64: 3>, scalar_prefetch = 0 : i64, scratch_operands = 0 : i64, tpu.core_type = #tpu.core_type<tc>, window_params = [{transform_indices = @transform_0, window_bounds = array<i64: 12, 128>}, {transform_indices = @transform_1, window_bounds = array<i64: 12, 128>}, {transform_indices = @transform_2, window_bounds = array<i64: 12, 128>}, {transform_indices = @transform_3, window_bounds = array<i64: 12, 128>}, {pipeline_mode = #tpu.pipeline_mode<synchronous>, transform_indices = @transform_4, window_bounds = array<i64: 24, 12>}, {pipeline_mode = #tpu.pipeline_mode<synchronous>, transform_indices = @transform_5, window_bounds = array<i64: 24, 1>}, {transform_indices = @transform_6, window_bounds = array<i64: 24, 128>}]} {
    %c0 = arith.constant 0 : index
    %c0_0 = arith.constant 0 : index
    %0 = vector.load %arg5[%c0, %c0_0] : memref<24x12xbf16, #tpu.memory_space<vmem>>, vector<24x12xbf16>
    %c0_1 = arith.constant 0 : index
    %c0_2 = arith.constant 0 : index
    %1 = vector.load %arg1[%c0_1, %c0_2] : memref<12x128xbf16, #tpu.memory_space<vmem>>, vector<12x128xbf16>
    %cst = arith.constant dense<0.000000e+00> : vector<24x128xf32>
    %2 = tpu.matmul %0, %1, %cst {dimension_numbers = #tpu.dot_dimension_numbers<[1], [0], [0], [1], [0, 0, 1, 1], [], []>} : vector<24x12xbf16>, vector<12x128xbf16>, vector<24x128xf32> -> vector<24x128xf32>
    %c0_3 = arith.constant 0 : index
    %c0_4 = arith.constant 0 : index
    %3 = vector.load %arg2[%c0_3, %c0_4] : memref<12x128xbf16, #tpu.memory_space<vmem>>, vector<12x128xbf16>
    %cst_5 = arith.constant dense<0.000000e+00> : vector<24x128xf32>
    %4 = tpu.matmul %0, %3, %cst_5 {dimension_numbers = #tpu.dot_dimension_numbers<[1], [0], [0], [1], [0, 0, 1, 1], [], []>} : vector<24x12xbf16>, vector<12x128xbf16>, vector<24x128xf32> -> vector<24x128xf32>
    %5 = arith.maximumf %2, %4 : vector<24x128xf32>
    %c0_6 = arith.constant 0 : index
    %c0_7 = arith.constant 0 : index
    %6 = vector.load %arg3[%c0_6, %c0_7] : memref<12x128xbf16, #tpu.memory_space<vmem>>, vector<12x128xbf16>
    %cst_8 = arith.constant dense<0.000000e+00> : vector<24x128xf32>
    %7 = tpu.matmul %0, %6, %cst_8 {dimension_numbers = #tpu.dot_dimension_numbers<[1], [0], [0], [1], [0, 0, 1, 1], [], []>} : vector<24x12xbf16>, vector<12x128xbf16>, vector<24x128xf32> -> vector<24x128xf32>
    %8 = arith.maximumf %5, %7 : vector<24x128xf32>
    %c0_9 = arith.constant 0 : index
    %c0_10 = arith.constant 0 : index
    %9 = vector.load %arg4[%c0_9, %c0_10] : memref<12x128xbf16, #tpu.memory_space<vmem>>, vector<12x128xbf16>
    %cst_11 = arith.constant dense<0.000000e+00> : vector<24x128xf32>
    %10 = tpu.matmul %0, %9, %cst_11 {dimension_numbers = #tpu.dot_dimension_numbers<[1], [0], [0], [1], [0, 0, 1, 1], [], []>} : vector<24x12xbf16>, vector<12x128xbf16>, vector<24x128xf32> -> vector<24x128xf32>
    %11 = arith.maximumf %8, %10 : vector<24x128xf32>
    %c0_12 = arith.constant 0 : index
    %c0_13 = arith.constant 0 : index
    %12 = vector.load %arg6[%c0_12, %c0_13] : memref<24x1xf32, #tpu.memory_space<vmem>>, vector<24x1xf32>
    %13 = vector.broadcast %12 : vector<24x1xf32> to vector<24x128xf32>
    %14 = arith.addf %11, %13 : vector<24x128xf32>
    %15 = arith.truncf %14 : vector<24x128xf32> to vector<24x128xbf16>
    %c0_14 = arith.constant 0 : index
    %c0_15 = arith.constant 0 : index
    %16 = vector.load %arg7[%c0_14, %c0_15] : memref<24x128xbf16, #tpu.memory_space<vmem>>, vector<24x128xbf16>
    tpu.vector_store %arg7[%c0_14, %c0_15], %15 {strides = array<i32>} : memref<24x128xbf16, #tpu.memory_space<vmem>>, vector<24x128xbf16>,
    return
  }
  func.func @transform_0(%arg0: i32) -> (i32, i32) {
    %c0_i32 = arith.constant 0 : i32
    %c0_i32_0 = arith.constant 0 : i32
    return %c0_i32, %arg0 : i32, i32
  }
  func.func @transform_1(%arg0: i32) -> (i32, i32) {
    %c0_i32 = arith.constant 0 : i32
    %c0_i32_0 = arith.constant 0 : i32
    return %c0_i32, %arg0 : i32, i32
  }
  func.func @transform_2(%arg0: i32) -> (i32, i32) {
    %c0_i32 = arith.constant 0 : i32
    %c0_i32_0 = arith.constant 0 : i32
    return %c0_i32, %arg0 : i32, i32
  }
  func.func @transform_3(%arg0: i32) -> (i32, i32) {
    %c0_i32 = arith.constant 0 : i32
    %c0_i32_0 = arith.constant 0 : i32
    return %c0_i32, %arg0 : i32, i32
  }
  func.func @transform_4(%arg0: i32) -> (i32, i32) {
    %c0_i32 = arith.constant 0 : i32
    %c0_i32_0 = arith.constant 0 : i32
    %c0_i32_1 = arith.constant 0 : i32
    return %c0_i32, %c0_i32_0 : i32, i32
  }
  func.func @transform_5(%arg0: i32) -> (i32, i32) {
    %c0_i32 = arith.constant 0 : i32
    %c0_i32_0 = arith.constant 0 : i32
    %c0_i32_1 = arith.constant 0 : i32
    return %c0_i32, %c0_i32_0 : i32, i32
  }
  func.func @transform_6(%arg0: i32) -> (i32, i32) {
    %c0_i32 = arith.constant 0 : i32
    %c0_i32_0 = arith.constant 0 : i32
    return %c0_i32, %arg0 : i32, i32
  }
}

module attributes {stable_mosaic.version = 11 : i64} {
  func.func @_conv_bn_kernel(%arg0: i32, %arg1: memref<216x128xbf16, #tpu.memory_space<vmem>>, %arg2: memref<12x216xbf16, #tpu.memory_space<vmem>>, %arg3: memref<12x1xf32, #tpu.memory_space<vmem>>, %arg4: memref<12x1xf32, #tpu.memory_space<vmem>>, %arg5: memref<12x1xf32, #tpu.memory_space<vmem>>, %arg6: memref<12x128xbf16, #tpu.memory_space<vmem>>) attributes {dimension_semantics = [#tpu.dimension_semantics<parallel>], iteration_bounds = array<i64: 2>, scalar_prefetch = 0 : i64, scratch_operands = 0 : i64, tpu.core_type = #tpu.core_type<tc>, window_params = [{transform_indices = @transform_0, window_bounds = array<i64: 216, 128>}, {pipeline_mode = #tpu.pipeline_mode<synchronous>, transform_indices = @transform_1, window_bounds = array<i64: 12, 216>}, {pipeline_mode = #tpu.pipeline_mode<synchronous>, transform_indices = @transform_2, window_bounds = array<i64: 12, 1>}, {pipeline_mode = #tpu.pipeline_mode<synchronous>, transform_indices = @transform_3, window_bounds = array<i64: 12, 1>}, {pipeline_mode = #tpu.pipeline_mode<synchronous>, transform_indices = @transform_4, window_bounds = array<i64: 12, 1>}, {transform_indices = @transform_5, window_bounds = array<i64: 12, 128>}]} {
    %c0 = arith.constant 0 : index
    %c0_0 = arith.constant 0 : index
    %0 = vector.load %arg2[%c0, %c0_0] : memref<12x216xbf16, #tpu.memory_space<vmem>>, vector<12x216xbf16>
    %c0_1 = arith.constant 0 : index
    %c0_2 = arith.constant 0 : index
    %1 = vector.load %arg1[%c0_1, %c0_2] : memref<216x128xbf16, #tpu.memory_space<vmem>>, vector<216x128xbf16>
    %cst = arith.constant dense<0.000000e+00> : vector<12x128xf32>
    %2 = tpu.matmul %0, %1, %cst {dimension_numbers = #tpu.dot_dimension_numbers<[1], [0], [0], [1], [0, 0, 1, 1], [], []>} : vector<12x216xbf16>, vector<216x128xbf16>, vector<12x128xf32> -> vector<12x128xf32>
    %c0_3 = arith.constant 0 : index
    %c0_4 = arith.constant 0 : index
    %3 = vector.load %arg3[%c0_3, %c0_4] : memref<12x1xf32, #tpu.memory_space<vmem>>, vector<12x1xf32>
    %4 = vector.broadcast %3 : vector<12x1xf32> to vector<12x128xf32>
    %5 = arith.addf %2, %4 : vector<12x128xf32>
    %cst_5 = arith.constant 0.000000e+00 : f32
    %6 = vector.broadcast %cst_5 : f32 to vector<12x128xf32>
    %7 = arith.maximumf %5, %6 : vector<12x128xf32>
    %c0_6 = arith.constant 0 : index
    %c0_7 = arith.constant 0 : index
    %8 = vector.load %arg4[%c0_6, %c0_7] : memref<12x1xf32, #tpu.memory_space<vmem>>, vector<12x1xf32>
    %9 = vector.broadcast %8 : vector<12x1xf32> to vector<12x128xf32>
    %10 = arith.mulf %7, %9 : vector<12x128xf32>
    %c0_8 = arith.constant 0 : index
    %c0_9 = arith.constant 0 : index
    %11 = vector.load %arg5[%c0_8, %c0_9] : memref<12x1xf32, #tpu.memory_space<vmem>>, vector<12x1xf32>
    %12 = vector.broadcast %11 : vector<12x1xf32> to vector<12x128xf32>
    %13 = arith.addf %10, %12 : vector<12x128xf32>
    %14 = arith.truncf %13 : vector<12x128xf32> to vector<12x128xbf16>
    %c0_10 = arith.constant 0 : index
    %c0_11 = arith.constant 0 : index
    %15 = vector.load %arg6[%c0_10, %c0_11] : memref<12x128xbf16, #tpu.memory_space<vmem>>, vector<12x128xbf16>
    tpu.vector_store %arg6[%c0_10, %c0_11], %14 {strides = array<i32>} : memref<12x128xbf16, #tpu.memory_space<vmem>>, vector<12x128xbf16>,
    return
  }
  func.func @transform_0(%arg0: i32) -> (i32, i32) {
    %c0_i32 = arith.constant 0 : i32
    %c0_i32_0 = arith.constant 0 : i32
    return %c0_i32, %arg0 : i32, i32
  }
  func.func @transform_1(%arg0: i32) -> (i32, i32) {
    %c0_i32 = arith.constant 0 : i32
    %c0_i32_0 = arith.constant 0 : i32
    %c0_i32_1 = arith.constant 0 : i32
    return %c0_i32, %c0_i32_0 : i32, i32
  }
  func.func @transform_2(%arg0: i32) -> (i32, i32) {
    %c0_i32 = arith.constant 0 : i32
    %c0_i32_0 = arith.constant 0 : i32
    %c0_i32_1 = arith.constant 0 : i32
    return %c0_i32, %c0_i32_0 : i32, i32
  }
  func.func @transform_3(%arg0: i32) -> (i32, i32) {
    %c0_i32 = arith.constant 0 : i32
    %c0_i32_0 = arith.constant 0 : i32
    %c0_i32_1 = arith.constant 0 : i32
    return %c0_i32, %c0_i32_0 : i32, i32
  }
  func.func @transform_4(%arg0: i32) -> (i32, i32) {
    %c0_i32 = arith.constant 0 : i32
    %c0_i32_0 = arith.constant 0 : i32
    %c0_i32_1 = arith.constant 0 : i32
    return %c0_i32, %c0_i32_0 : i32, i32
  }
  func.func @transform_5(%arg0: i32) -> (i32, i32) {
    %c0_i32 = arith.constant 0 : i32
    %c0_i32_0 = arith.constant 0 : i32
    return %c0_i32, %arg0 : i32, i32
  }
}

module attributes {stable_mosaic.version = 11 : i64} {
  func.func @_conv_bn_kernel(%arg0: i32, %arg1: memref<108x128xbf16, #tpu.memory_space<vmem>>, %arg2: memref<14x108xbf16, #tpu.memory_space<vmem>>, %arg3: memref<14x1xf32, #tpu.memory_space<vmem>>, %arg4: memref<14x1xf32, #tpu.memory_space<vmem>>, %arg5: memref<14x1xf32, #tpu.memory_space<vmem>>, %arg6: memref<14x128xbf16, #tpu.memory_space<vmem>>) attributes {dimension_semantics = [#tpu.dimension_semantics<parallel>], iteration_bounds = array<i64: 1>, scalar_prefetch = 0 : i64, scratch_operands = 0 : i64, tpu.core_type = #tpu.core_type<tc>, window_params = [{transform_indices = @transform_0, window_bounds = array<i64: 108, 128>}, {pipeline_mode = #tpu.pipeline_mode<synchronous>, transform_indices = @transform_1, window_bounds = array<i64: 14, 108>}, {pipeline_mode = #tpu.pipeline_mode<synchronous>, transform_indices = @transform_2, window_bounds = array<i64: 14, 1>}, {pipeline_mode = #tpu.pipeline_mode<synchronous>, transform_indices = @transform_3, window_bounds = array<i64: 14, 1>}, {pipeline_mode = #tpu.pipeline_mode<synchronous>, transform_indices = @transform_4, window_bounds = array<i64: 14, 1>}, {transform_indices = @transform_5, window_bounds = array<i64: 14, 128>}]} {
    %c0 = arith.constant 0 : index
    %c0_0 = arith.constant 0 : index
    %0 = vector.load %arg2[%c0, %c0_0] : memref<14x108xbf16, #tpu.memory_space<vmem>>, vector<14x108xbf16>
    %c0_1 = arith.constant 0 : index
    %c0_2 = arith.constant 0 : index
    %1 = vector.load %arg1[%c0_1, %c0_2] : memref<108x128xbf16, #tpu.memory_space<vmem>>, vector<108x128xbf16>
    %cst = arith.constant dense<0.000000e+00> : vector<14x128xf32>
    %2 = tpu.matmul %0, %1, %cst {dimension_numbers = #tpu.dot_dimension_numbers<[1], [0], [0], [1], [0, 0, 1, 1], [], []>} : vector<14x108xbf16>, vector<108x128xbf16>, vector<14x128xf32> -> vector<14x128xf32>
    %c0_3 = arith.constant 0 : index
    %c0_4 = arith.constant 0 : index
    %3 = vector.load %arg3[%c0_3, %c0_4] : memref<14x1xf32, #tpu.memory_space<vmem>>, vector<14x1xf32>
    %4 = vector.broadcast %3 : vector<14x1xf32> to vector<14x128xf32>
    %5 = arith.addf %2, %4 : vector<14x128xf32>
    %cst_5 = arith.constant 0.000000e+00 : f32
    %6 = vector.broadcast %cst_5 : f32 to vector<14x128xf32>
    %7 = arith.maximumf %5, %6 : vector<14x128xf32>
    %c0_6 = arith.constant 0 : index
    %c0_7 = arith.constant 0 : index
    %8 = vector.load %arg4[%c0_6, %c0_7] : memref<14x1xf32, #tpu.memory_space<vmem>>, vector<14x1xf32>
    %9 = vector.broadcast %8 : vector<14x1xf32> to vector<14x128xf32>
    %10 = arith.mulf %7, %9 : vector<14x128xf32>
    %c0_8 = arith.constant 0 : index
    %c0_9 = arith.constant 0 : index
    %11 = vector.load %arg5[%c0_8, %c0_9] : memref<14x1xf32, #tpu.memory_space<vmem>>, vector<14x1xf32>
    %12 = vector.broadcast %11 : vector<14x1xf32> to vector<14x128xf32>
    %13 = arith.addf %10, %12 : vector<14x128xf32>
    %14 = arith.truncf %13 : vector<14x128xf32> to vector<14x128xbf16>
    %c0_10 = arith.constant 0 : index
    %c0_11 = arith.constant 0 : index
    %15 = vector.load %arg6[%c0_10, %c0_11] : memref<14x128xbf16, #tpu.memory_space<vmem>>, vector<14x128xbf16>
    tpu.vector_store %arg6[%c0_10, %c0_11], %14 {strides = array<i32>} : memref<14x128xbf16, #tpu.memory_space<vmem>>, vector<14x128xbf16>,
    return
  }
  func.func @transform_0(%arg0: i32) -> (i32, i32) {
    %c0_i32 = arith.constant 0 : i32
    %c0_i32_0 = arith.constant 0 : i32
    return %c0_i32, %arg0 : i32, i32
  }
  func.func @transform_1(%arg0: i32) -> (i32, i32) {
    %c0_i32 = arith.constant 0 : i32
    %c0_i32_0 = arith.constant 0 : i32
    %c0_i32_1 = arith.constant 0 : i32
    return %c0_i32, %c0_i32_0 : i32, i32
  }
  func.func @transform_2(%arg0: i32) -> (i32, i32) {
    %c0_i32 = arith.constant 0 : i32
    %c0_i32_0 = arith.constant 0 : i32
    %c0_i32_1 = arith.constant 0 : i32
    return %c0_i32, %c0_i32_0 : i32, i32
  }
  func.func @transform_3(%arg0: i32) -> (i32, i32) {
    %c0_i32 = arith.constant 0 : i32
    %c0_i32_0 = arith.constant 0 : i32
    %c0_i32_1 = arith.constant 0 : i32
    return %c0_i32, %c0_i32_0 : i32, i32
  }
  func.func @transform_4(%arg0: i32) -> (i32, i32) {
    %c0_i32 = arith.constant 0 : i32
    %c0_i32_0 = arith.constant 0 : i32
    %c0_i32_1 = arith.constant 0 : i32
    return %c0_i32, %c0_i32_0 : i32, i32
  }
  func.func @transform_5(%arg0: i32) -> (i32, i32) {
    %c0_i32 = arith.constant 0 : i32
    %c0_i32_0 = arith.constant 0 : i32
    return %c0_i32, %arg0 : i32, i32
  }
}

module attributes {stable_mosaic.version = 11 : i64} {
  func.func @_head_kernel(%arg0: i32, %arg1: memref<288x126xbf16, #tpu.memory_space<vmem>>, %arg2: memref<126x10xbf16, #tpu.memory_space<vmem>>, %arg3: memref<1x10xf32, #tpu.memory_space<vmem>>, %arg4: memref<8x288xf32, #tpu.memory_space<vmem>>, %arg5: memref<8x10xf32, #tpu.memory_space<vmem>>) attributes {dimension_semantics = [#tpu.dimension_semantics<parallel>], iteration_bounds = array<i64: 1>, scalar_prefetch = 0 : i64, scratch_operands = 0 : i64, tpu.core_type = #tpu.core_type<tc>, window_params = [{transform_indices = @transform_0, window_bounds = array<i64: 288, 126>}, {pipeline_mode = #tpu.pipeline_mode<synchronous>, transform_indices = @transform_1, window_bounds = array<i64: 126, 10>}, {pipeline_mode = #tpu.pipeline_mode<synchronous>, transform_indices = @transform_2, window_bounds = array<i64: 1, 10>}, {pipeline_mode = #tpu.pipeline_mode<synchronous>, transform_indices = @transform_3, window_bounds = array<i64: 8, 288>}, {transform_indices = @transform_4, window_bounds = array<i64: 8, 10>}]} {
    %c0 = arith.constant 0 : index
    %c0_0 = arith.constant 0 : index
    %0 = vector.load %arg1[%c0, %c0_0] : memref<288x126xbf16, #tpu.memory_space<vmem>>, vector<288x126xbf16>
    %c0_1 = arith.constant 0 : index
    %c0_2 = arith.constant 0 : index
    %1 = vector.load %arg2[%c0_1, %c0_2] : memref<126x10xbf16, #tpu.memory_space<vmem>>, vector<126x10xbf16>
    %cst = arith.constant dense<0.000000e+00> : vector<288x10xf32>
    %2 = tpu.matmul %0, %1, %cst {dimension_numbers = #tpu.dot_dimension_numbers<[1], [0], [0], [1], [0, 0, 1, 1], [], []>} : vector<288x126xbf16>, vector<126x10xbf16>, vector<288x10xf32> -> vector<288x10xf32>
    %c0_3 = arith.constant 0 : index
    %c0_4 = arith.constant 0 : index
    %3 = vector.load %arg3[%c0_3, %c0_4] : memref<1x10xf32, #tpu.memory_space<vmem>>, vector<1x10xf32>
    %4 = vector.broadcast %3 : vector<1x10xf32> to vector<288x10xf32>
    %5 = arith.addf %2, %4 : vector<288x10xf32>
    %cst_5 = arith.constant 0.000000e+00 : f32
    %6 = vector.broadcast %cst_5 : f32 to vector<288x10xf32>
    %7 = arith.maximumf %5, %6 : vector<288x10xf32>
    %c0_6 = arith.constant 0 : index
    %c0_7 = arith.constant 0 : index
    %8 = vector.load %arg4[%c0_6, %c0_7] : memref<8x288xf32, #tpu.memory_space<vmem>>, vector<8x288xf32>
    %cst_8 = arith.constant dense<0.000000e+00> : vector<8x10xf32>
    %9 = tpu.matmul %8, %7, %cst_8 {dimension_numbers = #tpu.dot_dimension_numbers<[1], [0], [0], [1], [0, 0, 1, 1], [], []>} : vector<8x288xf32>, vector<288x10xf32>, vector<8x10xf32> -> vector<8x10xf32>
    %cst_9 = arith.constant dense<0xFF800000> : vector<8xf32>
    %10 = vector.multi_reduction <maximumf>, %9, %cst_9 [1] : vector<8x10xf32> to vector<8xf32>
    %11 = vector.shape_cast %10 : vector<8xf32> to vector<8x1xf32>
    %12 = vector.broadcast %11 : vector<8x1xf32> to vector<8x10xf32>
    %13 = arith.subf %9, %12 : vector<8x10xf32>
    %14 = math.exp %13 : vector<8x10xf32>
    %cst_10 = arith.constant dense<0.000000e+00> : vector<8xf32>
    %15 = vector.multi_reduction <add>, %14, %cst_10 [1] : vector<8x10xf32> to vector<8xf32>
    %16 = vector.shape_cast %15 : vector<8xf32> to vector<8x1xf32>
    %17 = math.log %16 : vector<8x1xf32>
    %18 = vector.broadcast %17 : vector<8x1xf32> to vector<8x10xf32>
    %19 = arith.subf %13, %18 : vector<8x10xf32>
    %c0_11 = arith.constant 0 : index
    %c0_12 = arith.constant 0 : index
    %20 = vector.load %arg5[%c0_11, %c0_12] : memref<8x10xf32, #tpu.memory_space<vmem>>, vector<8x10xf32>
    tpu.vector_store %arg5[%c0_11, %c0_12], %19 {strides = array<i32>} : memref<8x10xf32, #tpu.memory_space<vmem>>, vector<8x10xf32>,
    return
  }
  func.func @transform_0(%arg0: i32) -> (i32, i32) {
    %c0_i32 = arith.constant 0 : i32
    %c0_i32_0 = arith.constant 0 : i32
    return %arg0, %c0_i32 : i32, i32
  }
  func.func @transform_1(%arg0: i32) -> (i32, i32) {
    %c0_i32 = arith.constant 0 : i32
    %c0_i32_0 = arith.constant 0 : i32
    %c0_i32_1 = arith.constant 0 : i32
    return %c0_i32, %c0_i32_0 : i32, i32
  }
  func.func @transform_2(%arg0: i32) -> (i32, i32) {
    %c0_i32 = arith.constant 0 : i32
    %c0_i32_0 = arith.constant 0 : i32
    %c0_i32_1 = arith.constant 0 : i32
    return %c0_i32, %c0_i32_0 : i32, i32
  }
  func.func @transform_3(%arg0: i32) -> (i32, i32) {
    %c0_i32 = arith.constant 0 : i32
    %c0_i32_0 = arith.constant 0 : i32
    %c0_i32_1 = arith.constant 0 : i32
    return %c0_i32, %c0_i32_0 : i32, i32
  }
  func.func @transform_4(%arg0: i32) -> (i32, i32) {
    %c0_i32 = arith.constant 0 : i32
    %c0_i32_0 = arith.constant 0 : i32
    return %arg0, %c0_i32 : i32, i32
  }
}

</mosaic_0001>

<llo_original>
// kernel: forward.6
$region0: #{forward.6}
  #allocation0 [shape = 'u32[]', space=smem, size = 0x4, offset = 0x4, fixed_abs, tag = 'smem constant byte address 0x4 - core index']
  #allocation1 [shape = 'u32[72,128]{1,0:T(1,128)}', space=vmem, size = 0x9000, scoped, tag = 'internal scratch']
  %s0 = inlined_call_operand.vmem [shape: bf16[9,1536], index: 0, kind: input, shape index: {}]
  %s1 = inlined_call_operand.vmem [shape: bf16[16,9], index: 1, kind: input, shape index: {}]
  %s2 = inlined_call_operand.vmem [shape: f32[16,1], index: 2, kind: input, shape index: {}]
  %s3 = inlined_call_operand.vmem [shape: f32[16,1], index: 3, kind: input, shape index: {}]
  %s4 = inlined_call_operand.vmem [shape: f32[16,1], index: 4, kind: input, shape index: {}]
  %s5 = inlined_call_operand.vmem [shape: bf16[16,1536], index: 5, kind: output, shape index: {}]
  %s6 = sld [smem:[#allocation0]]
  $region95: #{forward.6} parent=0
    _
  %s8 = ssub.s32 1, %s6
  %s9 = scalar_select 0, %s8, %s6
  $region1: #{forward.6} parent=0
    #allocation2 [shape = 'u8[32768]{0}', space=vmem, size = 0x8000, scoped, tag = 'input window, operand 0']
    #allocation3 [shape = 'u8[32768]{0}', space=vmem, size = 0x8000, scoped, tag = 'output window, operand 0']
    loop: start=0, step=1, limit=5
    $region2: #{forward.6} parent=1 // loop_pre_header
      _
    $region3: #{forward.6} parent=1 // loop_header
      %s11 = sphi 0, %s15
      %p12 = scmp.ge.s32.totalorder %s11, 5
      %s21 = sphi 0, %s23
      %s24 = sphi 0, %s21
      %s25 = sphi 0, %s24
      %s41 = sphi 0, %s25
      %s45 = sphi 0, %s45
      %s47 = sphi 0, %s45
      %s48 = sphi 0, %s47
      %s62 = sphi 0, %s48
      %s66 = sphi 0, %s66
      %s68 = sphi 0, %s66
      %s69 = sphi 0, %s68
      %s83 = sphi 0, %s69
      %s87 = sphi 0, %s87
      %s89 = sphi 0, %s87
      %s90 = sphi 0, %s89
      %s104 = sphi 0, %s90
      %s108 = sphi 0, %s108
      %s110 = sphi 0, %s108
      %s111 = sphi 0, %s110
      %s125 = sphi 0, %s111
      %s131 = sphi 0, %s133
      %s134 = sphi 0, %s131
      %s135 = sphi 0, %s134
      %s151 = sphi 0, %s135
    $region4: #{forward.6} parent=1 // loop_header_branch
      %14 = sbr.rel (%p12) target = $region8
    $region5: #{forward.6} parent=1 // loop_body
      %s16 = ssub.s32 %s11, 1
      %s17 = ssub.s32 %s11, 2
      %s18 = sadd.s32 %s11, 1
      %s19 = ssub.s32 %s11, %s18
      %p20 = scmp.eq.s32.totalorder %s19, 0
      %s22 = sadd.s32 %s21, 1
      %s23 = scalar_select %p20, %s21, %s22
      %p26 = pneg %p20
      %p27 = scmp.eq.s32.totalorder %s11, 2
      %p28 = por %p26, %p27
      %p29 = scmp.ne.s32.totalorder %s21, %s24
      %p30 = scmp.eq.s32.totalorder %s11, 0
      %p31 = por %p29, %p30
      %p32 = scmp.ne.s32.totalorder %s21, %s24
      %p33 = scmp.eq.s32.totalorder %s16, 2
      %p34 = por %p32, %p33
      %p35 = scmp.ne.s32.totalorder %s24, %s25
      %p36 = scmp.eq.s32.totalorder %s16, 0
      %p37 = por %p35, %p36
      %p38 = scmp.ne.s32.totalorder %s24, %s25
      %p39 = scmp.eq.s32.totalorder %s17, 2
      %p40 = por %p38, %p39
      %p42 = scmp.ne.s32.totalorder %s25, %s41
      %p43 = scmp.eq.s32.totalorder %s17, 0
      %p44 = por %p42, %p43
      %s46 = sadd.s32 %s45, 1
      %p49 = scmp.eq.s32.totalorder %s11, 2
      %p50 = scmp.ne.s32.totalorder %s45, %s47
      %p51 = scmp.eq.s32.totalorder %s11, 0
      %p52 = por %p50, %p51
      %p53 = scmp.ne.s32.totalorder %s45, %s47
      %p54 = scmp.eq.s32.totalorder %s16, 2
      %p55 = por %p53, %p54
      %p56 = scmp.ne.s32.totalorder %s47, %s48
      %p57 = scmp.eq.s32.totalorder %s16, 0
      %p58 = por %p56, %p57
      %p59 = scmp.ne.s32.totalorder %s47, %s48
      %p60 = scmp.eq.s32.totalorder %s17, 2
      %p61 = por %p59, %p60
      %p63 = scmp.ne.s32.totalorder %s48, %s62
      %p64 = scmp.eq.s32.totalorder %s17, 0
      %p65 = por %p63, %p64
      %s67 = sadd.s32 %s66, 1
      %p70 = scmp.eq.s32.totalorder %s11, 2
      %p71 = scmp.ne.s32.totalorder %s66, %s68
      %p72 = scmp.eq.s32.totalorder %s11, 0
      %p73 = por %p71, %p72
      %p74 = scmp.ne.s32.totalorder %s66, %s68
      %p75 = scmp.eq.s32.totalorder %s16, 2
      %p76 = por %p74, %p75
      %p77 = scmp.ne.s32.totalorder %s68, %s69
      %p78 = scmp.eq.s32.totalorder %s16, 0
      %p79 = por %p77, %p78
      %p80 = scmp.ne.s32.totalorder %s68, %s69
      %p81 = scmp.eq.s32.totalorder %s17, 2
      %p82 = por %p80, %p81
      %p84 = scmp.ne.s32.totalorder %s69, %s83
      %p85 = scmp.eq.s32.totalorder %s17, 0
      %p86 = por %p84, %p85
      %s88 = sadd.s32 %s87, 1
      %p91 = scmp.eq.s32.totalorder %s11, 2
      %p92 = scmp.ne.s32.totalorder %s87, %s89
      %p93 = scmp.eq.s32.totalorder %s11, 0
      %p94 = por %p92, %p93
      %p95 = scmp.ne.s32.totalorder %s87, %s89
      %p96 = scmp.eq.s32.totalorder %s16, 2
      %p97 = por %p95, %p96
      %p98 = scmp.ne.s32.totalorder %s89, %s90
      %p99 = scmp.eq.s32.totalorder %s16, 0
      %p100 = por %p98, %p99
      %p101 = scmp.ne.s32.totalorder %s89, %s90
      %p102 = scmp.eq.s32.totalorder %s17, 2
      %p103 = por %p101, %p102
      %p105 = scmp.ne.s32.totalorder %s90, %s104
      %p106 = scmp.eq.s32.totalorder %s17, 0
      %p107 = por %p105, %p106
      %s109 = sadd.s32 %s108, 1
      %p112 = scmp.eq.s32.totalorder %s11, 2
      %p113 = scmp.ne.s32.totalorder %s108, %s110
      %p114 = scmp.eq.s32.totalorder %s11, 0
      %p115 = por %p113, %p114
      %p116 = scmp.ne.s32.totalorder %s108, %s110
      %p117 = scmp.eq.s32.totalorder %s16, 2
      %p118 = por %p116, %p117
      %p119 = scmp.ne.s32.totalorder %s110, %s111
      %p120 = scmp.eq.s32.totalorder %s16, 0
      %p121 = por %p119, %p120
      %p122 = scmp.ne.s32.totalorder %s110, %s111
      %p123 = scmp.eq.s32.totalorder %s17, 2
      %p124 = por %p122, %p123
      %p126 = scmp.ne.s32.totalorder %s111, %s125
      %p127 = scmp.eq.s32.totalorder %s17, 0
      %p128 = por %p126, %p127
      %s129 = ssub.s32 %s11, %s18
      %p130 = scmp.eq.s32.totalorder %s129, 0
      %s132 = sadd.s32 %s131, 1
      %s133 = scalar_select %p130, %s131, %s132
      %p136 = pneg %p130
      %p137 = scmp.eq.s32.totalorder %s11, 2
      %p138 = por %p136, %p137
      %p139 = scmp.ne.s32.totalorder %s131, %s134
      %p140 = scmp.eq.s32.totalorder %s11, 0
      %p141 = por %p139, %p140
      %p142 = scmp.ne.s32.totalorder %s131, %s134
      %p143 = scmp.eq.s32.totalorder %s16, 2
      %p144 = por %p142, %p143
      %p145 = scmp.ne.s32.totalorder %s134, %s135
      %p146 = scmp.eq.s32.totalorder %s16, 0
      %p147 = por %p145, %p146
      %p148 = scmp.ne.s32.totalorder %s134, %s135
      %p149 = scmp.eq.s32.totalorder %s17, 2
      %p150 = por %p148, %p149
      %p152 = scmp.ne.s32.totalorder %s135, %s151
      %p153 = scmp.eq.s32.totalorder %s17, 0
      %p154 = por %p152, %p153
      %p155 = scmp.le.s32.totalorder 1, %s11
      %p156 = scmp.lt.s32.totalorder %s11, 4
      %p157 = pnand %p155, %p156
      %p158 = pneg %p157
      // Predicated region
      $region9: #{forward.6} parent=5 // pred_check
        _
      $region10: #{forward.6} parent=5 // pred_check_branch
        %160 = sbr.rel (%p157) target = $region12
      $region11: #{forward.6} parent=5 // pred_region
        %s161 = ssub.s32 %s11, 1
        // Predicated region
        $region13: #{forward.6} parent=11 // pred_check
          %p162 = pneg %p58
        $region14: #{forward.6} parent=11 // pred_check_branch
          %164 = sbr.rel (%p162) target = $region16
        $region15: #{forward.6} parent=11 // pred_region
          _
        $region16: #{forward.6} parent=11 // pred_fallthru
          _
        // Predicated region
        $region17: #{forward.6} parent=11 // pred_check
          %p165 = pneg %p79
        $region18: #{forward.6} parent=11 // pred_check_branch
          %167 = sbr.rel (%p165) target = $region20
        $region19: #{forward.6} parent=11 // pred_region
          _
        $region20: #{forward.6} parent=11 // pred_fallthru
          _
        // Predicated region
        $region21: #{forward.6} parent=11 // pred_check
          %p168 = pneg %p100
        $region22: #{forward.6} parent=11 // pred_check_branch
          %170 = sbr.rel (%p168) target = $region24
        $region23: #{forward.6} parent=11 // pred_region
          _
        $region24: #{forward.6} parent=11 // pred_fallthru
          _
        // Predicated region
        $region25: #{forward.6} parent=11 // pred_check
          %p171 = pneg %p121
        $region26: #{forward.6} parent=11 // pred_check_branch
          %173 = sbr.rel (%p171) target = $region28
        $region27: #{forward.6} parent=11 // pred_region
          _
        $region28: #{forward.6} parent=11 // pred_fallthru
          _
      $region12: #{forward.6} parent=5 // pred_fallthru
        _
      %p174 = scmp.lt.s32.totalorder %s11, 3
      // Predicated region
      $region29: #{forward.6} parent=5 // pred_check
        %p175 = pneg %p174
      $region30: #{forward.6} parent=5 // pred_check_branch
        %177 = sbr.rel (%p175) target = $region32
      $region31: #{forward.6} parent=5 // pred_region
        // Predicated region
        $region33: #{forward.6} parent=31 // pred_check
          %p178 = pneg %p31
        $region34: #{forward.6} parent=31 // pred_check_branch
          %180 = sbr.rel (%p178) target = $region36
        $region35: #{forward.6} parent=31 // pred_region
          %s181 = sand.u32 %s21, 1
          %s182 = sand.u32 %s21, 1
          %s183 = smul.addr %s182, 32
          %s184 = scalar_lea.vmem [#allocation2], %s183
          %s185 = smul.u32 4, %s11
          %s186 = smul.addr %s185, 4
          %s187 = scalar_lea.vmem %s0, %s186
          // Predicated region
          $region37: #{forward.6} parent=35 // pred_check
            _
          $region38: #{forward.6} parent=35 // pred_check_branch
            %189 = sbr.rel (0) target = $region40
          $region39: #{forward.6} parent=35 // pred_region
            // Predicated region
            $region41: #{forward.6} parent=39 // pred_check
              _
            $region42: #{forward.6} parent=39 // pred_check_branch
              %191 = sbr.rel (0) target = $region44
            $region43: #{forward.6} parent=39 // pred_region
              loop: start=0, step=1, limit=1
              $region45: #{forward.6} parent=43 // loop_pre_header
                _
              $region46: #{forward.6} parent=43 // loop_header
                %s193 = sphi 0, %s197
                %p194 = scmp.ge.s32.totalorder %s193, 1
                %s198 = sphi %s187, %s187
                %s199 = sphi %s184, %s184
              $region47: #{forward.6} parent=43 // loop_header_branch
                %196 = sbr.rel (%p194) target = $region51
              $region48: #{forward.6} parent=43 // loop_body
                %v200 = vld [vmem:[%s198] sm:$0xff]
                %201 = vst [vmem:[%s199] sm:$0xff] %v200
                %v202 = vld [vmem:[%s198 + $0x8] sm:$0xff]
                %203 = vst [vmem:[%s199 + $0x8] sm:$0xff] %v202
                %v204 = vld [vmem:[%s198 + $0x30] sm:$0xff]
                %205 = vst [vmem:[%s199 + $0x10] sm:$0xff] %v204
                %v206 = vld [vmem:[%s198 + $0x38] sm:$0xff]
                %207 = vst [vmem:[%s199 + $0x18] sm:$0xff] %v206
              $region49: #{forward.6} parent=43 // loop_footer
                %s197 = sadd.s32 1, %s193
              $region50: #{forward.6} parent=43 // loop_footer_branch
                %192 = sbr.rel target = $region46
              $region51: #{forward.6} parent=43 // loop_exit
                _
            $region44: #{forward.6} parent=39 // pred_fallthru
              _
            // Predicated region
            $region52: #{forward.6} parent=39 // pred_check
              _
            $region53: #{forward.6} parent=39 // pred_check_branch
              %209 = sbr.rel target = $region55
            $region54: #{forward.6} parent=39 // pred_region
              _
            $region55: #{forward.6} parent=39 // pred_fallthru
              _
          $region40: #{forward.6} parent=35 // pred_fallthru
            _
          %210 = vnop
        $region36: #{forward.6} parent=31 // pred_fallthru
          _
      $region32: #{forward.6} parent=5 // pred_fallthru
        _
      %p211 = scmp.le.s32.totalorder 1, %s11
      %p212 = scmp.lt.s32.totalorder %s11, 4
      %p213 = pnand %p211, %p212
      %p214 = pneg %p213
      // Predicated region
      $region56: #{forward.6} parent=5 // pred_check
        _
      $region57: #{forward.6} parent=5 // pred_check_branch
        %216 = sbr.rel (%p213) target = $region59
      $region58: #{forward.6} parent=5 // pred_region
        %s217 = ssub.s32 %s11, 1
        %s218 = sand.u32 %s24, 1
        %s219 = sand.u32 %s24, 1
        %s220 = smul.addr %s219, 32
        %s221 = scalar_lea.vmem [#allocation2], %s220
        // Predicated region
        $region60: #{forward.6} parent=58 // pred_check
          %p222 = pneg %p37
        $region61: #{forward.6} parent=58 // pred_check_branch
          %224 = sbr.rel (%p222) target = $region63
        $region62: #{forward.6} parent=58 // pred_region
          _
        $region63: #{forward.6} parent=58 // pred_fallthru
          _
        %s225 = sand.u32 %s24, 1
        %s226 = sand.u32 %s24, 1
        %s227 = smul.addr %s226, 32
        %s228 = scalar_lea.vmem [#allocation2], %s227
        %p229 = pneg %p37
        %p230 = pneg %p34
        %p231 = pneg %p58
        %p232 = pneg %p55
        %p233 = pneg %p79
        %p234 = pneg %p76
        %p235 = pneg %p100
        %p236 = pneg %p97
        %p237 = pneg %p121
        %p238 = pneg %p118
        %p239 = pneg %p147
        %p240 = pneg %p144
        %s241 = sand.u32 %s134, 1
        %s242 = sand.u32 %s134, 1
        %s243 = smul.addr %s242, 32
        %s244 = scalar_lea.vmem [#allocation3], %s243
        %s245 = smul.u32 4, %s16
        %s246 = smul.u32 4, %s16
        %v248 = vld [vmem:[%s1] sm:$0xf]
        %v249 = vld [vmem:[%s1 + $0x4] sm:$0xf]
        %v250 = vld [vmem:[%s221] sm:$0xff]
        %v251 = vld [vmem:[%s221 + $0x8] sm:$0xff]
        %v252 = vld [vmem:[%s221 + $0x10] sm:$0x11]
        %v253 = vld [vmem:[%s221 + $0x18] sm:$0x11]
        %v254 = vld [vmem:[%s2] sm:$0xff]
        %v255 = vld [vmem:[%s2 + $0x8] sm:$0xff]
        %257 = vset.pattern.permute.xlu0 0
        %258 = vperm.xlu0 %257, %v254
        %v259 = vpop.permute.xlu0 %258
        %262 = vset.pattern.permute.xlu0 0
        %263 = vperm.xlu0 %262, %v255
        %v264 = vpop.permute.xlu0 %263
        %v268 = vunpack.c.l.b16 %v248
        %v269 = vunpack.c.l.b16 %v249
        %v270 = vpack.c.b16 %v269, %v268
        %v275 = vunpack.c.l.b16 %v250
        %v276 = vunpack.c.h.b16 %v250
        %v277 = vunpack.c.l.b16 %v251
        %v278 = vunpack.c.h.b16 %v251
        %v279 = vunpack.c.l.b16 %v252
        %v280 = vunpack.c.h.b16 %v252
        %v281 = vunpack.c.l.b16 %v253
        %v282 = vunpack.c.h.b16 %v253
        %v283 = vpack.c.b16 %v279, %v275
        %v284 = vpack.c.b16 %v280, %v276
        %v285 = vpack.c.b16 %v281, %v277
        %v286 = vpack.c.b16 %v282, %v278
        %vm287 = vcmask 72704
        %v289 = vsel %vm287, %v270, 0
        %vm291 = vcmask 1043456
        %vm292 = vcmask 1044480
        %v293 = vsel %vm291, 4294967295, 65535
        %v294 = vsel %vm292, %v293, 0
        %v296 = vand.u32 %v283, %v294
        %v299 = vand.u32 %v284, %v294
        %v302 = vand.u32 %v285, %v294
        %v305 = vand.u32 %v286, %v294
        %307 = vmatpush.bf16.msra.mxu0 0
        %308 = vmatpush.bf16.msra.mxu0 0
        %309 = vmatpush.bf16.msra.mxu0 0
        %310 = vmatpush.bf16.msra.mxu0 0
        %311 = vmatpush.bf16.msra.mxu0 0
        %312 = vmatpush.bf16.msra.mxu0 0
        %313 = vmatpush.bf16.msra.mxu0 0
        %314 = vmatpush.bf16.msra.mxu0 %v296
        %315 = vmatmul.bf16.gmra.mxu0 %v289
        %v316 = vpop.f32.mrf.mxu0
        %v317 = vadd.f32 %v259, %v316
        %v318 = vpop.f32.mrf.mxu0
        %v319 = vadd.f32 %v264, %v318
        %320 = vdwg.mxu0
        %321 = vmatpush.bf16.msra.mxu0 0
        %322 = vmatpush.bf16.msra.mxu0 0
        %323 = vmatpush.bf16.msra.mxu0 0
        %324 = vmatpush.bf16.msra.mxu0 0
        %325 = vmatpush.bf16.msra.mxu0 0
        %326 = vmatpush.bf16.msra.mxu0 0
        %327 = vmatpush.bf16.msra.mxu0 0
        %328 = vmatpush.bf16.msra.mxu0 %v299
        %329 = vmatmul.bf16.gmra.mxu0 %v289
        %v330 = vpop.f32.mrf.mxu0
        %v331 = vadd.f32 %v259, %v330
        %v332 = vpop.f32.mrf.mxu0
        %v333 = vadd.f32 %v264, %v332
        %334 = vdwg.mxu0
        %335 = vmatpush.bf16.msra.mxu0 0
        %336 = vmatpush.bf16.msra.mxu0 0
        %337 = vmatpush.bf16.msra.mxu0 0
        %338 = vmatpush.bf16.msra.mxu0 0
        %339 = vmatpush.bf16.msra.mxu0 0
        %340 = vmatpush.bf16.msra.mxu0 0
        %341 = vmatpush.bf16.msra.mxu0 0
        %342 = vmatpush.bf16.msra.mxu0 %v302
        %343 = vmatmul.bf16.gmra.mxu0 %v289
        %v344 = vpop.f32.mrf.mxu0
        %v345 = vadd.f32 %v259, %v344
        %v346 = vpop.f32.mrf.mxu0
        %v347 = vadd.f32 %v264, %v346
        %348 = vdwg.mxu0
        %349 = vmatpush.bf16.msra.mxu0 0
        %350 = vmatpush.bf16.msra.mxu0 0
        %351 = vmatpush.bf16.msra.mxu0 0
        %352 = vmatpush.bf16.msra.mxu0 0
        %353 = vmatpush.bf16.msra.mxu0 0
        %354 = vmatpush.bf16.msra.mxu0 0
        %355 = vmatpush.bf16.msra.mxu0 0
        %356 = vmatpush.bf16.msra.mxu0 %v305
        %357 = vmatmul.bf16.gmra.mxu0 %v289
        %v358 = vpop.f32.mrf.mxu0
        %v359 = vadd.f32 %v259, %v358
        %v360 = vpop.f32.mrf.mxu0
        %v361 = vadd.f32 %v264, %v360
        %362 = vdwg.mxu0
        %v363 = vmax.f32 %v317, 0.0
        %v364 = vmax.f32 %v331, 0.0
        %v365 = vmax.f32 %v345, 0.0
        %v366 = vmax.f32 %v359, 0.0
        %v367 = vmax.f32 %v319, 0.0
        %v368 = vmax.f32 %v333, 0.0
        %v369 = vmax.f32 %v347, 0.0
        %v370 = vmax.f32 %v361, 0.0
        %v371 = vld [vmem:[%s3] sm:$0xff]
        %v372 = vld [vmem:[%s3 + $0x8] sm:$0xff]
        %374 = vset.pattern.permute.xlu0 0
        %375 = vperm.xlu0 %374, %v371
        %v376 = vpop.permute.xlu0 %375
        %379 = vset.pattern.permute.xlu0 0
        %380 = vperm.xlu0 %379, %v372
        %v381 = vpop.permute.xlu0 %380
        %v383 = vmul.f32 %v363, %v376
        %v384 = vmul.f32 %v364, %v376
        %v385 = vmul.f32 %v365, %v376
        %v386 = vmul.f32 %v366, %v376
        %v387 = vmul.f32 %v367, %v381
        %v388 = vmul.f32 %v368, %v381
        %v389 = vmul.f32 %v369, %v381
        %v390 = vmul.f32 %v370, %v381
        %v391 = vld [vmem:[%s4] sm:$0xff]
        %v392 = vld [vmem:[%s4 + $0x8] sm:$0xff]
        %394 = vset.pattern.permute.xlu0 0
        %395 = vperm.xlu0 %394, %v391
        %v396 = vpop.permute.xlu0 %395
        %399 = vset.pattern.permute.xlu0 0
        %400 = vperm.xlu0 %399, %v392
        %v401 = vpop.permute.xlu0 %400
        %v403 = vadd.f32 %v383, %v396
        %v404 = vadd.f32 %v384, %v396
        %v405 = vadd.f32 %v385, %v396
        %v406 = vadd.f32 %v386, %v396
        %v407 = vadd.f32 %v387, %v401
        %v408 = vadd.f32 %v388, %v401
        %v409 = vadd.f32 %v389, %v401
        %v410 = vadd.f32 %v390, %v401
        %v411 = vpack.c.bf16 %v404, %v403
        %v412 = vpack.c.bf16 %v406, %v405
        %v413 = vpack.c.bf16 %v408, %v407
        %v414 = vpack.c.bf16 %v410, %v409
        %415 = vst [vmem:[%s244] sm:$0xff] %v411
        %416 = vst [vmem:[%s244 + $0x8] sm:$0xff] %v412
        %417 = vst [vmem:[%s244 + $0x10] sm:$0xff] %v413
        %418 = vst [vmem:[%s244 + $0x18] sm:$0xff] %v414
        %s419 = sand.u32 %s134, 1
        %s420 = sand.u32 %s134, 1
        %s421 = smul.addr %s420, 32
        %s422 = scalar_lea.vmem [#allocation3], %s421
        // Predicated region
        $region64: #{forward.6} parent=58 // pred_check
          %p423 = pneg %p144
        $region65: #{forward.6} parent=58 // pred_check_branch
          %425 = sbr.rel (%p423) target = $region67
        $region66: #{forward.6} parent=58 // pred_region
          %s426 = smul.u32 4, %s16
          %s427 = smul.addr %s426, 4
          %s428 = scalar_lea.vmem %s5, %s427
          // Predicated region
          $region68: #{forward.6} parent=66 // pred_check
            _
          $region69: #{forward.6} parent=66 // pred_check_branch
            %430 = sbr.rel (0) target = $region71
          $region70: #{forward.6} parent=66 // pred_region
            // Predicated region
            $region72: #{forward.6} parent=70 // pred_check
              _
            $region73: #{forward.6} parent=70 // pred_check_branch
              %432 = sbr.rel (0) target = $region75
            $region74: #{forward.6} parent=70 // pred_region
              loop: start=0, step=1, limit=1
              $region76: #{forward.6} parent=74 // loop_pre_header
                _
              $region77: #{forward.6} parent=74 // loop_header
                %s434 = sphi 0, %s438
                %p435 = scmp.ge.s32.totalorder %s434, 1
                %s439 = sphi %s422, %s422
                %s440 = sphi %s428, %s428
              $region78: #{forward.6} parent=74 // loop_header_branch
                %437 = sbr.rel (%p435) target = $region82
              $region79: #{forward.6} parent=74 // loop_body
                %v441 = vld [vmem:[%s439] sm:$0xff]
                %442 = vst [vmem:[%s440] sm:$0xff] %v441
                %v443 = vld [vmem:[%s439 + $0x8] sm:$0xff]
                %444 = vst [vmem:[%s440 + $0x8] sm:$0xff] %v443
                %v445 = vld [vmem:[%s439 + $0x10] sm:$0xff]
                %446 = vst [vmem:[%s440 + $0x30] sm:$0xff] %v445
                %v447 = vld [vmem:[%s439 + $0x18] sm:$0xff]
                %448 = vst [vmem:[%s440 + $0x38] sm:$0xff] %v447
              $region80: #{forward.6} parent=74 // loop_footer
                %s438 = sadd.s32 1, %s434
              $region81: #{forward.6} parent=74 // loop_footer_branch
                %433 = sbr.rel target = $region77
              $region82: #{forward.6} parent=74 // loop_exit
                _
            $region75: #{forward.6} parent=70 // pred_fallthru
              _
            // Predicated region
            $region83: #{forward.6} parent=70 // pred_check
              _
            $region84: #{forward.6} parent=70 // pred_check_branch
              %450 = sbr.rel target = $region86
            $region85: #{forward.6} parent=70 // pred_region
              _
            $region86: #{forward.6} parent=70 // pred_fallthru
              _
          $region71: #{forward.6} parent=66 // pred_fallthru
            _
          %451 = vnop
        $region67: #{forward.6} parent=58 // pred_fallthru
          _
      $region59: #{forward.6} parent=5 // pred_fallthru
        _
      %p452 = scmp.le.s32.totalorder 2, %s11
      // Predicated region
      $region87: #{forward.6} parent=5 // pred_check
        %p453 = pneg %p452
      $region88: #{forward.6} parent=5 // pred_check_branch
        %455 = sbr.rel (%p453) target = $region90
      $region89: #{forward.6} parent=5 // pred_region
        %s456 = ssub.s32 %s11, 2
        // Predicated region
        $region91: #{forward.6} parent=89 // pred_check
          %p457 = pneg %p150
        $region92: #{forward.6} parent=89 // pred_check_branch
          %459 = sbr.rel (%p457) target = $region94
        $region93: #{forward.6} parent=89 // pred_region
          %s460 = sand.u32 %s135, 1
          %s461 = sand.u32 %s135, 1
          %s462 = smul.addr %s461, 32
          %s463 = scalar_lea.vmem [#allocation3], %s462
        $region94: #{forward.6} parent=89 // pred_fallthru
          _
      $region90: #{forward.6} parent=5 // pred_fallthru
        _
    $region6: #{forward.6} parent=1 // loop_footer
      %s15 = sadd.s32 1, %s11
    $region7: #{forward.6} parent=1 // loop_footer_branch
      %10 = sbr.rel target = $region3
    $region8: #{forward.6} parent=1 // loop_exit
      _

// kernel: forward.7
$region0: #{forward.7}
  #allocation0 [shape = 'u32[]', space=smem, size = 0x4, offset = 0x4, fixed_abs, tag = 'smem constant byte address 0x4 - core index']
  #allocation1 [shape = 'u32[72,128]{1,0:T(1,128)}', space=vmem, size = 0x9000, scoped, tag = 'internal scratch']
  %s0 = inlined_call_operand.vmem [shape: bf16[144,1536], index: 0, kind: input, shape index: {}]
  %s1 = inlined_call_operand.vmem [shape: bf16[12,144], index: 1, kind: input, shape index: {}]
  %s2 = inlined_call_operand.vmem [shape: f32[12,1], index: 2, kind: input, shape index: {}]
  %s3 = inlined_call_operand.vmem [shape: f32[12,1], index: 3, kind: input, shape index: {}]
  %s4 = inlined_call_operand.vmem [shape: f32[12,1], index: 4, kind: input, shape index: {}]
  %s5 = inlined_call_operand.vmem [shape: bf16[12,1536], index: 5, kind: output, shape index: {}]
  %s6 = sld [smem:[#allocation0]]
  $region95: #{forward.7} parent=0
    _
  %s8 = ssub.s32 1, %s6
  %s9 = scalar_select 0, %s8, %s6
  $region1: #{forward.7} parent=0
    #allocation2 [shape = 'u8[294912]{0}', space=vmem, size = 0x48000, scoped, tag = 'input window, operand 0']
    #allocation3 [shape = 'u8[32768]{0}', space=vmem, size = 0x8000, scoped, tag = 'output window, operand 0']
    loop: start=0, step=1, limit=5
    $region2: #{forward.7} parent=1 // loop_pre_header
      _
    $region3: #{forward.7} parent=1 // loop_header
      %s11 = sphi 0, %s15
      %p12 = scmp.ge.s32.totalorder %s11, 5
      %s21 = sphi 0, %s23
      %s24 = sphi 0, %s21
      %s25 = sphi 0, %s24
      %s41 = sphi 0, %s25
      %s45 = sphi 0, %s45
      %s47 = sphi 0, %s45
      %s48 = sphi 0, %s47
      %s62 = sphi 0, %s48
      %s66 = sphi 0, %s66
      %s68 = sphi 0, %s66
      %s69 = sphi 0, %s68
      %s83 = sphi 0, %s69
      %s87 = sphi 0, %s87
      %s89 = sphi 0, %s87
      %s90 = sphi 0, %s89
      %s104 = sphi 0, %s90
      %s108 = sphi 0, %s108
      %s110 = sphi 0, %s108
      %s111 = sphi 0, %s110
      %s125 = sphi 0, %s111
      %s131 = sphi 0, %s133
      %s134 = sphi 0, %s131
      %s135 = sphi 0, %s134
      %s151 = sphi 0, %s135
    $region4: #{forward.7} parent=1 // loop_header_branch
      %14 = sbr.rel (%p12) target = $region8
    $region5: #{forward.7} parent=1 // loop_body
      %s16 = ssub.s32 %s11, 1
      %s17 = ssub.s32 %s11, 2
      %s18 = sadd.s32 %s11, 1
      %s19 = ssub.s32 %s11, %s18
      %p20 = scmp.eq.s32.totalorder %s19, 0
      %s22 = sadd.s32 %s21, 1
      %s23 = scalar_select %p20, %s21, %s22
      %p26 = pneg %p20
      %p27 = scmp.eq.s32.totalorder %s11, 2
      %p28 = por %p26, %p27
      %p29 = scmp.ne.s32.totalorder %s21, %s24
      %p30 = scmp.eq.s32.totalorder %s11, 0
      %p31 = por %p29, %p30
      %p32 = scmp.ne.s32.totalorder %s21, %s24
      %p33 = scmp.eq.s32.totalorder %s16, 2
      %p34 = por %p32, %p33
      %p35 = scmp.ne.s32.totalorder %s24, %s25
      %p36 = scmp.eq.s32.totalorder %s16, 0
      %p37 = por %p35, %p36
      %p38 = scmp.ne.s32.totalorder %s24, %s25
      %p39 = scmp.eq.s32.totalorder %s17, 2
      %p40 = por %p38, %p39
      %p42 = scmp.ne.s32.totalorder %s25, %s41
      %p43 = scmp.eq.s32.totalorder %s17, 0
      %p44 = por %p42, %p43
      %s46 = sadd.s32 %s45, 1
      %p49 = scmp.eq.s32.totalorder %s11, 2
      %p50 = scmp.ne.s32.totalorder %s45, %s47
      %p51 = scmp.eq.s32.totalorder %s11, 0
      %p52 = por %p50, %p51
      %p53 = scmp.ne.s32.totalorder %s45, %s47
      %p54 = scmp.eq.s32.totalorder %s16, 2
      %p55 = por %p53, %p54
      %p56 = scmp.ne.s32.totalorder %s47, %s48
      %p57 = scmp.eq.s32.totalorder %s16, 0
      %p58 = por %p56, %p57
      %p59 = scmp.ne.s32.totalorder %s47, %s48
      %p60 = scmp.eq.s32.totalorder %s17, 2
      %p61 = por %p59, %p60
      %p63 = scmp.ne.s32.totalorder %s48, %s62
      %p64 = scmp.eq.s32.totalorder %s17, 0
      %p65 = por %p63, %p64
      %s67 = sadd.s32 %s66, 1
      %p70 = scmp.eq.s32.totalorder %s11, 2
      %p71 = scmp.ne.s32.totalorder %s66, %s68
      %p72 = scmp.eq.s32.totalorder %s11, 0
      %p73 = por %p71, %p72
      %p74 = scmp.ne.s32.totalorder %s66, %s68
      %p75 = scmp.eq.s32.totalorder %s16, 2
      %p76 = por %p74, %p75
      %p77 = scmp.ne.s32.totalorder %s68, %s69
      %p78 = scmp.eq.s32.totalorder %s16, 0
      %p79 = por %p77, %p78
      %p80 = scmp.ne.s32.totalorder %s68, %s69
      %p81 = scmp.eq.s32.totalorder %s17, 2
      %p82 = por %p80, %p81
      %p84 = scmp.ne.s32.totalorder %s69, %s83
      %p85 = scmp.eq.s32.totalorder %s17, 0
      %p86 = por %p84, %p85
      %s88 = sadd.s32 %s87, 1
      %p91 = scmp.eq.s32.totalorder %s11, 2
      %p92 = scmp.ne.s32.totalorder %s87, %s89
      %p93 = scmp.eq.s32.totalorder %s11, 0
      %p94 = por %p92, %p93
      %p95 = scmp.ne.s32.totalorder %s87, %s89
      %p96 = scmp.eq.s32.totalorder %s16, 2
      %p97 = por %p95, %p96
      %p98 = scmp.ne.s32.totalorder %s89, %s90
      %p99 = scmp.eq.s32.totalorder %s16, 0
      %p100 = por %p98, %p99
      %p101 = scmp.ne.s32.totalorder %s89, %s90
      %p102 = scmp.eq.s32.totalorder %s17, 2
      %p103 = por %p101, %p102
      %p105 = scmp.ne.s32.totalorder %s90, %s104
      %p106 = scmp.eq.s32.totalorder %s17, 0
      %p107 = por %p105, %p106
      %s109 = sadd.s32 %s108, 1
      %p112 = scmp.eq.s32.totalorder %s11, 2
      %p113 = scmp.ne.s32.totalorder %s108, %s110
      %p114 = scmp.eq.s32.totalorder %s11, 0
      %p115 = por %p113, %p114
      %p116 = scmp.ne.s32.totalorder %s108, %s110
      %p117 = scmp.eq.s32.totalorder %s16, 2
      %p118 = por %p116, %p117
      %p119 = scmp.ne.s32.totalorder %s110, %s111
      %p120 = scmp.eq.s32.totalorder %s16, 0
      %p121 = por %p119, %p120
      %p122 = scmp.ne.s32.totalorder %s110, %s111
      %p123 = scmp.eq.s32.totalorder %s17, 2
      %p124 = por %p122, %p123
      %p126 = scmp.ne.s32.totalorder %s111, %s125
      %p127 = scmp.eq.s32.totalorder %s17, 0
      %p128 = por %p126, %p127
      %s129 = ssub.s32 %s11, %s18
      %p130 = scmp.eq.s32.totalorder %s129, 0
      %s132 = sadd.s32 %s131, 1
      %s133 = scalar_select %p130, %s131, %s132
      %p136 = pneg %p130
      %p137 = scmp.eq.s32.totalorder %s11, 2
      %p138 = por %p136, %p137
      %p139 = scmp.ne.s32.totalorder %s131, %s134
      %p140 = scmp.eq.s32.totalorder %s11, 0
      %p141 = por %p139, %p140
      %p142 = scmp.ne.s32.totalorder %s131, %s134
      %p143 = scmp.eq.s32.totalorder %s16, 2
      %p144 = por %p142, %p143
      %p145 = scmp.ne.s32.totalorder %s134, %s135
      %p146 = scmp.eq.s32.totalorder %s16, 0
      %p147 = por %p145, %p146
      %p148 = scmp.ne.s32.totalorder %s134, %s135
      %p149 = scmp.eq.s32.totalorder %s17, 2
      %p150 = por %p148, %p149
      %p152 = scmp.ne.s32.totalorder %s135, %s151
      %p153 = scmp.eq.s32.totalorder %s17, 0
      %p154 = por %p152, %p153
      %p155 = scmp.le.s32.totalorder 1, %s11
      %p156 = scmp.lt.s32.totalorder %s11, 4
      %p157 = pnand %p155, %p156
      %p158 = pneg %p157
      // Predicated region
      $region9: #{forward.7} parent=5 // pred_check
        _
      $region10: #{forward.7} parent=5 // pred_check_branch
        %160 = sbr.rel (%p157) target = $region12
      $region11: #{forward.7} parent=5 // pred_region
        %s161 = ssub.s32 %s11, 1
        // Predicated region
        $region13: #{forward.7} parent=11 // pred_check
          %p162 = pneg %p58
        $region14: #{forward.7} parent=11 // pred_check_branch
          %164 = sbr.rel (%p162) target = $region16
        $region15: #{forward.7} parent=11 // pred_region
          _
        $region16: #{forward.7} parent=11 // pred_fallthru
          _
        // Predicated region
        $region17: #{forward.7} parent=11 // pred_check
          %p165 = pneg %p79
        $region18: #{forward.7} parent=11 // pred_check_branch
          %167 = sbr.rel (%p165) target = $region20
        $region19: #{forward.7} parent=11 // pred_region
          _
        $region20: #{forward.7} parent=11 // pred_fallthru
          _
        // Predicated region
        $region21: #{forward.7} parent=11 // pred_check
          %p168 = pneg %p100
        $region22: #{forward.7} parent=11 // pred_check_branch
          %170 = sbr.rel (%p168) target = $region24
        $region23: #{forward.7} parent=11 // pred_region
          _
        $region24: #{forward.7} parent=11 // pred_fallthru
          _
        // Predicated region
        $region25: #{forward.7} parent=11 // pred_check
          %p171 = pneg %p121
        $region26: #{forward.7} parent=11 // pred_check_branch
          %173 = sbr.rel (%p171) target = $region28
        $region27: #{forward.7} parent=11 // pred_region
          _
        $region28: #{forward.7} parent=11 // pred_fallthru
          _
      $region12: #{forward.7} parent=5 // pred_fallthru
        _
      %p174 = scmp.lt.s32.totalorder %s11, 3
      // Predicated region
      $region29: #{forward.7} parent=5 // pred_check
        %p175 = pneg %p174
      $region30: #{forward.7} parent=5 // pred_check_branch
        %177 = sbr.rel (%p175) target = $region32
      $region31: #{forward.7} parent=5 // pred_region
        // Predicated region
        $region33: #{forward.7} parent=31 // pred_check
          %p178 = pneg %p31
        $region34: #{forward.7} parent=31 // pred_check_branch
          %180 = sbr.rel (%p178) target = $region36
        $region35: #{forward.7} parent=31 // pred_region
          %s181 = sand.u32 %s21, 1
          %s182 = sand.u32 %s21, 1
          %s183 = smul.addr %s182, 288
          %s184 = scalar_lea.vmem [#allocation2], %s183
          %s185 = smul.u32 4, %s11
          %s186 = smul.addr %s185, 4
          %s187 = scalar_lea.vmem %s0, %s186
          // Predicated region
          $region37: #{forward.7} parent=35 // pred_check
            _
          $region38: #{forward.7} parent=35 // pred_check_branch
            %189 = sbr.rel (0) target = $region40
          $region39: #{forward.7} parent=35 // pred_region
            // Predicated region
            $region41: #{forward.7} parent=39 // pred_check
              _
            $region42: #{forward.7} parent=39 // pred_check_branch
              %191 = sbr.rel (0) target = $region44
            $region43: #{forward.7} parent=39 // pred_region
              loop: start=0, step=1, limit=1
              $region45: #{forward.7} parent=43 // loop_pre_header
                _
              $region46: #{forward.7} parent=43 // loop_header
                %s193 = sphi 0, %s197
                %p194 = scmp.ge.s32.totalorder %s193, 1
                %s198 = sphi %s187, %s187
                %s199 = sphi %s184, %s184
              $region47: #{forward.7} parent=43 // loop_header_branch
                %196 = sbr.rel (%p194) target = $region51
              $region48: #{forward.7} parent=43 // loop_body
                %v200 = vld [vmem:[%s198] sm:$0xff]
                %201 = vst [vmem:[%s199] sm:$0xff] %v200
                %v202 = vld [vmem:[%s198 + $0x8] sm:$0xff]
                %203 = vst [vmem:[%s199 + $0x8] sm:$0xff] %v202
                %v204 = vld [vmem:[%s198 + $0x30] sm:$0xff]
                %205 = vst [vmem:[%s199 + $0x10] sm:$0xff] %v204
                %v206 = vld [vmem:[%s198 + $0x38] sm:$0xff]
                %207 = vst [vmem:[%s199 + $0x18] sm:$0xff] %v206
                %v208 = vld [vmem:[%s198 + $0x60] sm:$0xff]
                %209 = vst [vmem:[%s199 + $0x20] sm:$0xff] %v208
                %v210 = vld [vmem:[%s198 + $0x68] sm:$0xff]
                %211 = vst [vmem:[%s199 + $0x28] sm:$0xff] %v210
                %v212 = vld [vmem:[%s198 + $0x90] sm:$0xff]
                %213 = vst [vmem:[%s199 + $0x30] sm:$0xff] %v212
                %v214 = vld [vmem:[%s198 + $0x98] sm:$0xff]
                %215 = vst [vmem:[%s199 + $0x38] sm:$0xff] %v214
                %v216 = vld [vmem:[%s198 + $0xc0] sm:$0xff]
                %217 = vst [vmem:[%s199 + $0x40] sm:$0xff] %v216
                %v218 = vld [vmem:[%s198 + $0xc8] sm:$0xff]
                %219 = vst [vmem:[%s199 + $0x48] sm:$0xff] %v218
                %v220 = vld [vmem:[%s198 + $0xf0] sm:$0xff]
                %221 = vst [vmem:[%s199 + $0x50] sm:$0xff] %v220
                %v222 = vld [vmem:[%s198 + $0xf8] sm:$0xff]
                %223 = vst [vmem:[%s199 + $0x58] sm:$0xff] %v222
                %v224 = vld [vmem:[%s198 + $0x120] sm:$0xff]
                %225 = vst [vmem:[%s199 + $0x60] sm:$0xff] %v224
                %v226 = vld [vmem:[%s198 + $0x128] sm:$0xff]
                %227 = vst [vmem:[%s199 + $0x68] sm:$0xff] %v226
                %v228 = vld [vmem:[%s198 + $0x150] sm:$0xff]
                %229 = vst [vmem:[%s199 + $0x70] sm:$0xff] %v228
                %v230 = vld [vmem:[%s198 + $0x158] sm:$0xff]
                %231 = vst [vmem:[%s199 + $0x78] sm:$0xff] %v230
                %v232 = vld [vmem:[%s198 + $0x180] sm:$0xff]
                %233 = vst [vmem:[%s199 + $0x80] sm:$0xff] %v232
                %v234 = vld [vmem:[%s198 + $0x188] sm:$0xff]
                %235 = vst [vmem:[%s199 + $0x88] sm:$0xff] %v234
                %v236 = vld [vmem:[%s198 + $0x1b0] sm:$0xff]
                %237 = vst [vmem:[%s199 + $0x90] sm:$0xff] %v236
                %v238 = vld [vmem:[%s198 + $0x1b8] sm:$0xff]
                %239 = vst [vmem:[%s199 + $0x98] sm:$0xff] %v238
                %v240 = vld [vmem:[%s198 + $0x1e0] sm:$0xff]
                %241 = vst [vmem:[%s199 + $0xa0] sm:$0xff] %v240
                %v242 = vld [vmem:[%s198 + $0x1e8] sm:$0xff]
                %243 = vst [vmem:[%s199 + $0xa8] sm:$0xff] %v242
                %v244 = vld [vmem:[%s198 + $0x210] sm:$0xff]
                %245 = vst [vmem:[%s199 + $0xb0] sm:$0xff] %v244
                %v246 = vld [vmem:[%s198 + $0x218] sm:$0xff]
                %247 = vst [vmem:[%s199 + $0xb8] sm:$0xff] %v246
                %v248 = vld [vmem:[%s198 + $0x240] sm:$0xff]
                %249 = vst [vmem:[%s199 + $0xc0] sm:$0xff] %v248
                %v250 = vld [vmem:[%s198 + $0x248] sm:$0xff]
                %251 = vst [vmem:[%s199 + $0xc8] sm:$0xff] %v250
                %v252 = vld [vmem:[%s198 + $0x270] sm:$0xff]
                %253 = vst [vmem:[%s199 + $0xd0] sm:$0xff] %v252
                %v254 = vld [vmem:[%s198 + $0x278] sm:$0xff]
                %255 = vst [vmem:[%s199 + $0xd8] sm:$0xff] %v254
                %v256 = vld [vmem:[%s198 + $0x2a0] sm:$0xff]
                %257 = vst [vmem:[%s199 + $0xe0] sm:$0xff] %v256
                %v258 = vld [vmem:[%s198 + $0x2a8] sm:$0xff]
                %259 = vst [vmem:[%s199 + $0xe8] sm:$0xff] %v258
                %v260 = vld [vmem:[%s198 + $0x2d0] sm:$0xff]
                %261 = vst [vmem:[%s199 + $0xf0] sm:$0xff] %v260
                %v262 = vld [vmem:[%s198 + $0x2d8] sm:$0xff]
                %263 = vst [vmem:[%s199 + $0xf8] sm:$0xff] %v262
                %v264 = vld [vmem:[%s198 + $0x300] sm:$0xff]
                %265 = vst [vmem:[%s199 + $0x100] sm:$0xff] %v264
                %v266 = vld [vmem:[%s198 + $0x308] sm:$0xff]
                %267 = vst [vmem:[%s199 + $0x108] sm:$0xff] %v266
                %v268 = vld [vmem:[%s198 + $0x330] sm:$0xff]
                %269 = vst [vmem:[%s199 + $0x110] sm:$0xff] %v268
                %v270 = vld [vmem:[%s198 + $0x338] sm:$0xff]
                %271 = vst [vmem:[%s199 + $0x118] sm:$0xff] %v270
              $region49: #{forward.7} parent=43 // loop_footer
                %s197 = sadd.s32 1, %s193
              $region50: #{forward.7} parent=43 // loop_footer_branch
                %192 = sbr.rel target = $region46
              $region51: #{forward.7} parent=43 // loop_exit
                _
            $region44: #{forward.7} parent=39 // pred_fallthru
              _
            // Predicated region
            $region52: #{forward.7} parent=39 // pred_check
              _
            $region53: #{forward.7} parent=39 // pred_check_branch
              %273 = sbr.rel target = $region55
            $region54: #{forward.7} parent=39 // pred_region
              _
            $region55: #{forward.7} parent=39 // pred_fallthru
              _
          $region40: #{forward.7} parent=35 // pred_fallthru
            _
          %274 = vnop
        $region36: #{forward.7} parent=31 // pred_fallthru
          _
      $region32: #{forward.7} parent=5 // pred_fallthru
        _
      %p275 = scmp.le.s32.totalorder 1, %s11
      %p276 = scmp.lt.s32.totalorder %s11, 4
      %p277 = pnand %p275, %p276
      %p278 = pneg %p277
      // Predicated region
      $region56: #{forward.7} parent=5 // pred_check
        _
      $region57: #{forward.7} parent=5 // pred_check_branch
        %280 = sbr.rel (%p277) target = $region59
      $region58: #{forward.7} parent=5 // pred_region
        %s281 = ssub.s32 %s11, 1
        %s282 = sand.u32 %s24, 1
        %s283 = sand.u32 %s24, 1
        %s284 = smul.addr %s283, 288
        %s285 = scalar_lea.vmem [#allocation2], %s284
        // Predicated region
        $region60: #{forward.7} parent=58 // pred_check
          %p286 = pneg %p37
        $region61: #{forward.7} parent=58 // pred_check_branch
          %288 = sbr.rel (%p286) target = $region63
        $region62: #{forward.7} parent=58 // pred_region
          _
        $region63: #{forward.7} parent=58 // pred_fallthru
          _
        %s289 = sand.u32 %s24, 1
        %s290 = sand.u32 %s24, 1
        %s291 = smul.addr %s290, 288
        %s292 = scalar_lea.vmem [#allocation2], %s291
        %p293 = pneg %p37
        %p294 = pneg %p34
        %p295 = pneg %p58
        %p296 = pneg %p55
        %p297 = pneg %p79
        %p298 = pneg %p76
        %p299 = pneg %p100
        %p300 = pneg %p97
        %p301 = pneg %p121
        %p302 = pneg %p118
        %p303 = pneg %p147
        %p304 = pneg %p144
        %s305 = sand.u32 %s134, 1
        %s306 = sand.u32 %s134, 1
        %s307 = smul.addr %s306, 32
        %s308 = scalar_lea.vmem [#allocation3], %s307
        %s309 = smul.u32 4, %s16
        %s310 = smul.u32 4, %s16
        %v312 = vld [vmem:[%s1] sm:$0xff]
        %v313 = vld [vmem:[%s1 + $0x8] sm:$0x33]
        %v314 = vld [vmem:[%s285] sm:$0xff]
        %v315 = vld [vmem:[%s285 + $0x8] sm:$0xff]
        %v316 = vld [vmem:[%s285 + $0x10] sm:$0xff]
        %v317 = vld [vmem:[%s285 + $0x18] sm:$0xff]
        %v318 = vld [vmem:[%s285 + $0x20] sm:$0xff]
        %v319 = vld [vmem:[%s285 + $0x28] sm:$0xff]
        %v320 = vld [vmem:[%s285 + $0x30] sm:$0xff]
        %v321 = vld [vmem:[%s285 + $0x38] sm:$0xff]
        %v322 = vld [vmem:[%s285 + $0x40] sm:$0xff]
        %v323 = vld [vmem:[%s285 + $0x48] sm:$0xff]
        %v324 = vld [vmem:[%s285 + $0x50] sm:$0xff]
        %v325 = vld [vmem:[%s285 + $0x58] sm:$0xff]
        %v326 = vld [vmem:[%s285 + $0x60] sm:$0xff]
        %v327 = vld [vmem:[%s285 + $0x68] sm:$0xff]
        %v328 = vld [vmem:[%s285 + $0x70] sm:$0xff]
        %v329 = vld [vmem:[%s285 + $0x78] sm:$0xff]
        %v330 = vld [vmem:[%s285 + $0x80] sm:$0xff]
        %v331 = vld [vmem:[%s285 + $0x88] sm:$0xff]
        %v332 = vld [vmem:[%s285 + $0x90] sm:$0xff]
        %v333 = vld [vmem:[%s285 + $0x98] sm:$0xff]
        %v334 = vld [vmem:[%s285 + $0xa0] sm:$0xff]
        %v335 = vld [vmem:[%s285 + $0xa8] sm:$0xff]
        %v336 = vld [vmem:[%s285 + $0xb0] sm:$0xff]
        %v337 = vld [vmem:[%s285 + $0xb8] sm:$0xff]
        %v338 = vld [vmem:[%s285 + $0xc0] sm:$0xff]
        %v339 = vld [vmem:[%s285 + $0xc8] sm:$0xff]
        %v340 = vld [vmem:[%s285 + $0xd0] sm:$0xff]
        %v341 = vld [vmem:[%s285 + $0xd8] sm:$0xff]
        %v342 = vld [vmem:[%s285 + $0xe0] sm:$0xff]
        %v343 = vld [vmem:[%s285 + $0xe8] sm:$0xff]
        %v344 = vld [vmem:[%s285 + $0xf0] sm:$0xff]
        %v345 = vld [vmem:[%s285 + $0xf8] sm:$0xff]
        %v346 = vld [vmem:[%s285 + $0x100] sm:$0xff]
        %v347 = vld [vmem:[%s285 + $0x108] sm:$0xff]
        %v348 = vld [vmem:[%s285 + $0x110] sm:$0xff]
        %v349 = vld [vmem:[%s285 + $0x118] sm:$0xff]
        %v350 = vld [vmem:[%s2] sm:$0xff]
        %v351 = vld [vmem:[%s2 + $0x8] sm:$0xf]
        %353 = vset.pattern.permute.xlu0 0
        %354 = vperm.xlu0 %353, %v350
        %v355 = vpop.permute.xlu0 %354
        %358 = vset.pattern.permute.xlu0 0
        %359 = vperm.xlu0 %358, %v351
        %v360 = vpop.permute.xlu0 %359
        %v364 = vunpack.c.l.b16 %v312
        %v365 = vunpack.c.h.b16 %v312
        %v366 = vunpack.c.l.b16 %v313
        %v367 = vunpack.c.h.b16 %v313
        %v368 = vpack.c.b16 %v366, %v364
        %v369 = vpack.c.b16 %v367, %v365
        %v407 = vunpack.c.l.b16 %v314
        %v408 = vunpack.c.h.b16 %v314
        %v409 = vunpack.c.l.b16 %v315
        %v410 = vunpack.c.h.b16 %v315
        %v411 = vunpack.c.l.b16 %v316
        %v412 = vunpack.c.h.b16 %v316
        %v413 = vunpack.c.l.b16 %v317
        %v414 = vunpack.c.h.b16 %v317
        %v415 = vunpack.c.l.b16 %v318
        %v416 = vunpack.c.h.b16 %v318
        %v417 = vunpack.c.l.b16 %v319
        %v418 = vunpack.c.h.b16 %v319
        %v419 = vunpack.c.l.b16 %v320
        %v420 = vunpack.c.h.b16 %v320
        %v421 = vunpack.c.l.b16 %v321
        %v422 = vunpack.c.h.b16 %v321
        %v423 = vunpack.c.l.b16 %v322
        %v424 = vunpack.c.h.b16 %v322
        %v425 = vunpack.c.l.b16 %v323
        %v426 = vunpack.c.h.b16 %v323
        %v427 = vunpack.c.l.b16 %v324
        %v428 = vunpack.c.h.b16 %v324
        %v429 = vunpack.c.l.b16 %v325
        %v430 = vunpack.c.h.b16 %v325
        %v431 = vunpack.c.l.b16 %v326
        %v432 = vunpack.c.h.b16 %v326
        %v433 = vunpack.c.l.b16 %v327
        %v434 = vunpack.c.h.b16 %v327
        %v435 = vunpack.c.l.b16 %v328
        %v436 = vunpack.c.h.b16 %v328
        %v437 = vunpack.c.l.b16 %v329
        %v438 = vunpack.c.h.b16 %v329
        %v439 = vunpack.c.l.b16 %v330
        %v440 = vunpack.c.h.b16 %v330
        %v441 = vunpack.c.l.b16 %v331
        %v442 = vunpack.c.h.b16 %v331
        %v443 = vunpack.c.l.b16 %v332
        %v444 = vunpack.c.h.b16 %v332
        %v445 = vunpack.c.l.b16 %v333
        %v446 = vunpack.c.h.b16 %v333
        %v447 = vunpack.c.l.b16 %v334
        %v448 = vunpack.c.h.b16 %v334
        %v449 = vunpack.c.l.b16 %v335
        %v450 = vunpack.c.h.b16 %v335
        %v451 = vunpack.c.l.b16 %v336
        %v452 = vunpack.c.h.b16 %v336
        %v453 = vunpack.c.l.b16 %v337
        %v454 = vunpack.c.h.b16 %v337
        %v455 = vunpack.c.l.b16 %v338
        %v456 = vunpack.c.h.b16 %v338
        %v457 = vunpack.c.l.b16 %v339
        %v458 = vunpack.c.h.b16 %v339
        %v459 = vunpack.c.l.b16 %v340
        %v460 = vunpack.c.h.b16 %v340
        %v461 = vunpack.c.l.b16 %v341
        %v462 = vunpack.c.h.b16 %v341
        %v463 = vunpack.c.l.b16 %v342
        %v464 = vunpack.c.h.b16 %v342
        %v465 = vunpack.c.l.b16 %v343
        %v466 = vunpack.c.h.b16 %v343
        %v467 = vunpack.c.l.b16 %v344
        %v468 = vunpack.c.h.b16 %v344
        %v469 = vunpack.c.l.b16 %v345
        %v470 = vunpack.c.h.b16 %v345
        %v471 = vunpack.c.l.b16 %v346
        %v472 = vunpack.c.h.b16 %v346
        %v473 = vunpack.c.l.b16 %v347
        %v474 = vunpack.c.h.b16 %v347
        %v475 = vunpack.c.l.b16 %v348
        %v476 = vunpack.c.h.b16 %v348
        %v477 = vunpack.c.l.b16 %v349
        %v478 = vunpack.c.h.b16 %v349
        %v479 = vpack.c.b16 %v411, %v407
        %v480 = vpack.c.b16 %v412, %v408
        %v481 = vpack.c.b16 %v413, %v409
        %v482 = vpack.c.b16 %v414, %v410
        %v483 = vpack.c.b16 %v419, %v415
        %v484 = vpack.c.b16 %v420, %v416
        %v485 = vpack.c.b16 %v421, %v417
        %v486 = vpack.c.b16 %v422, %v418
        %v487 = vpack.c.b16 %v427, %v423
        %v488 = vpack.c.b16 %v428, %v424
        %v489 = vpack.c.b16 %v429, %v425
        %v490 = vpack.c.b16 %v430, %v426
        %v491 = vpack.c.b16 %v435, %v431
        %v492 = vpack.c.b16 %v436, %v432
        %v493 = vpack.c.b16 %v437, %v433
        %v494 = vpack.c.b16 %v438, %v434
        %v495 = vpack.c.b16 %v443, %v439
        %v496 = vpack.c.b16 %v444, %v440
        %v497 = vpack.c.b16 %v445, %v441
        %v498 = vpack.c.b16 %v446, %v442
        %v499 = vpack.c.b16 %v451, %v447
        %v500 = vpack.c.b16 %v452, %v448
        %v501 = vpack.c.b16 %v453, %v449
        %v502 = vpack.c.b16 %v454, %v450
        %v503 = vpack.c.b16 %v459, %v455
        %v504 = vpack.c.b16 %v460, %v456
        %v505 = vpack.c.b16 %v461, %v457
        %v506 = vpack.c.b16 %v462, %v458
        %v507 = vpack.c.b16 %v467, %v463
        %v508 = vpack.c.b16 %v468, %v464
        %v509 = vpack.c.b16 %v469, %v465
        %v510 = vpack.c.b16 %v470, %v466
        %v511 = vpack.c.b16 %v475, %v471
        %v512 = vpack.c.b16 %v476, %v472
        %v513 = vpack.c.b16 %v477, %v473
        %v514 = vpack.c.b16 %v478, %v474
        %vm551 = vcmask 130048
        %v553 = vsel %vm551, %v369, 0
        %555 = vmatpush.bf16.msra.mxu0 %v507
        %556 = vmatpush.bf16.msra.mxu0 %v503
        %557 = vmatpush.bf16.msra.mxu0 %v499
        %558 = vmatpush.bf16.msra.mxu0 %v495
        %559 = vmatpush.bf16.msra.mxu0 %v491
        %560 = vmatpush.bf16.msra.mxu0 %v487
        %561 = vmatpush.bf16.msra.mxu0 %v483
        %562 = vmatpush.bf16.msra.mxu0 %v479
        %563 = vmatmul.bf16.gmra.mxu0 %v368
        %v564 = vpop.f32.mrf.mxu0
        %v565 = vadd.f32 %v355, %v564
        %v566 = vpop.f32.mrf.mxu0
        %v567 = vadd.f32 %v360, %v566
        %568 = vdwg.mxu0
        %569 = vmatpush.bf16.msra.mxu0 0
        %570 = vmatpush.bf16.msra.mxu0 0
        %571 = vmatpush.bf16.msra.mxu0 0
        %572 = vmatpush.bf16.msra.mxu0 0
        %573 = vmatpush.bf16.msra.mxu0 0
        %574 = vmatpush.bf16.msra.mxu0 0
        %575 = vmatpush.bf16.msra.mxu0 0
        %576 = vmatpush.bf16.msra.mxu0 %v511
        %577 = vmatmul.bf16.gmra.mxu0 %v553
        %v578 = vpop.f32.mrf.mxu0
        %v579 = vadd.f32 %v565, %v578
        %v580 = vpop.f32.mrf.mxu0
        %v581 = vadd.f32 %v567, %v580
        %582 = vdwg.mxu0
        %583 = vmatpush.bf16.msra.mxu0 %v508
        %584 = vmatpush.bf16.msra.mxu0 %v504
        %585 = vmatpush.bf16.msra.mxu0 %v500
        %586 = vmatpush.bf16.msra.mxu0 %v496
        %587 = vmatpush.bf16.msra.mxu0 %v492
        %588 = vmatpush.bf16.msra.mxu0 %v488
        %589 = vmatpush.bf16.msra.mxu0 %v484
        %590 = vmatpush.bf16.msra.mxu0 %v480
        %591 = vmatmul.bf16.gmra.mxu0 %v368
        %v592 = vpop.f32.mrf.mxu0
        %v593 = vadd.f32 %v355, %v592
        %v594 = vpop.f32.mrf.mxu0
        %v595 = vadd.f32 %v360, %v594
        %596 = vdwg.mxu0
        %597 = vmatpush.bf16.msra.mxu0 0
        %598 = vmatpush.bf16.msra.mxu0 0
        %599 = vmatpush.bf16.msra.mxu0 0
        %600 = vmatpush.bf16.msra.mxu0 0
        %601 = vmatpush.bf16.msra.mxu0 0
        %602 = vmatpush.bf16.msra.mxu0 0
        %603 = vmatpush.bf16.msra.mxu0 0
        %604 = vmatpush.bf16.msra.mxu0 %v512
        %605 = vmatmul.bf16.gmra.mxu0 %v553
        %v606 = vpop.f32.mrf.mxu0
        %v607 = vadd.f32 %v593, %v606
        %v608 = vpop.f32.mrf.mxu0
        %v609 = vadd.f32 %v595, %v608
        %610 = vdwg.mxu0
        %611 = vmatpush.bf16.msra.mxu0 %v509
        %612 = vmatpush.bf16.msra.mxu0 %v505
        %613 = vmatpush.bf16.msra.mxu0 %v501
        %614 = vmatpush.bf16.msra.mxu0 %v497
        %615 = vmatpush.bf16.msra.mxu0 %v493
        %616 = vmatpush.bf16.msra.mxu0 %v489
        %617 = vmatpush.bf16.msra.mxu0 %v485
        %618 = vmatpush.bf16.msra.mxu0 %v481
        %619 = vmatmul.bf16.gmra.mxu0 %v368
        %v620 = vpop.f32.mrf.mxu0
        %v621 = vadd.f32 %v355, %v620
        %v622 = vpop.f32.mrf.mxu0
        %v623 = vadd.f32 %v360, %v622
        %624 = vdwg.mxu0
        %625 = vmatpush.bf16.msra.mxu0 0
        %626 = vmatpush.bf16.msra.mxu0 0
        %627 = vmatpush.bf16.msra.mxu0 0
        %628 = vmatpush.bf16.msra.mxu0 0
        %629 = vmatpush.bf16.msra.mxu0 0
        %630 = vmatpush.bf16.msra.mxu0 0
        %631 = vmatpush.bf16.msra.mxu0 0
        %632 = vmatpush.bf16.msra.mxu0 %v513
        %633 = vmatmul.bf16.gmra.mxu0 %v553
        %v634 = vpop.f32.mrf.mxu0
        %v635 = vadd.f32 %v621, %v634
        %v636 = vpop.f32.mrf.mxu0
        %v637 = vadd.f32 %v623, %v636
        %638 = vdwg.mxu0
        %639 = vmatpush.bf16.msra.mxu0 %v510
        %640 = vmatpush.bf16.msra.mxu0 %v506
        %641 = vmatpush.bf16.msra.mxu0 %v502
        %642 = vmatpush.bf16.msra.mxu0 %v498
        %643 = vmatpush.bf16.msra.mxu0 %v494
        %644 = vmatpush.bf16.msra.mxu0 %v490
        %645 = vmatpush.bf16.msra.mxu0 %v486
        %646 = vmatpush.bf16.msra.mxu0 %v482
        %647 = vmatmul.bf16.gmra.mxu0 %v368
        %v648 = vpop.f32.mrf.mxu0
        %v649 = vadd.f32 %v355, %v648
        %v650 = vpop.f32.mrf.mxu0
        %v651 = vadd.f32 %v360, %v650
        %652 = vdwg.mxu0
        %653 = vmatpush.bf16.msra.mxu0 0
        %654 = vmatpush.bf16.msra.mxu0 0
        %655 = vmatpush.bf16.msra.mxu0 0
        %656 = vmatpush.bf16.msra.mxu0 0
        %657 = vmatpush.bf16.msra.mxu0 0
        %658 = vmatpush.bf16.msra.mxu0 0
        %659 = vmatpush.bf16.msra.mxu0 0
        %660 = vmatpush.bf16.msra.mxu0 %v514
        %661 = vmatmul.bf16.gmra.mxu0 %v553
        %v662 = vpop.f32.mrf.mxu0
        %v663 = vadd.f32 %v649, %v662
        %v664 = vpop.f32.mrf.mxu0
        %v665 = vadd.f32 %v651, %v664
        %666 = vdwg.mxu0
        %v667 = vmax.f32 %v579, 0.0
        %v668 = vmax.f32 %v607, 0.0
        %v669 = vmax.f32 %v635, 0.0
        %v670 = vmax.f32 %v663, 0.0
        %v671 = vmax.f32 %v581, 0.0
        %v672 = vmax.f32 %v609, 0.0
        %v673 = vmax.f32 %v637, 0.0
        %v674 = vmax.f32 %v665, 0.0
        %v675 = vld [vmem:[%s3] sm:$0xff]
        %v676 = vld [vmem:[%s3 + $0x8] sm:$0xf]
        %678 = vset.pattern.permute.xlu0 0
        %679 = vperm.xlu0 %678, %v675
        %v680 = vpop.permute.xlu0 %679
        %683 = vset.pattern.permute.xlu0 0
        %684 = vperm.xlu0 %683, %v676
        %v685 = vpop.permute.xlu0 %684
        %v687 = vmul.f32 %v667, %v680
        %v688 = vmul.f32 %v668, %v680
        %v689 = vmul.f32 %v669, %v680
        %v690 = vmul.f32 %v670, %v680
        %v691 = vmul.f32 %v671, %v685
        %v692 = vmul.f32 %v672, %v685
        %v693 = vmul.f32 %v673, %v685
        %v694 = vmul.f32 %v674, %v685
        %v695 = vld [vmem:[%s4] sm:$0xff]
        %v696 = vld [vmem:[%s4 + $0x8] sm:$0xf]
        %698 = vset.pattern.permute.xlu0 0
        %699 = vperm.xlu0 %698, %v695
        %v700 = vpop.permute.xlu0 %699
        %703 = vset.pattern.permute.xlu0 0
        %704 = vperm.xlu0 %703, %v696
        %v705 = vpop.permute.xlu0 %704
        %v707 = vadd.f32 %v687, %v700
        %v708 = vadd.f32 %v688, %v700
        %v709 = vadd.f32 %v689, %v700
        %v710 = vadd.f32 %v690, %v700
        %v711 = vadd.f32 %v691, %v705
        %v712 = vadd.f32 %v692, %v705
        %v713 = vadd.f32 %v693, %v705
        %v714 = vadd.f32 %v694, %v705
        %v715 = vpack.c.bf16 %v708, %v707
        %v716 = vpack.c.bf16 %v710, %v709
        %v717 = vpack.c.bf16 %v712, %v711
        %v718 = vpack.c.bf16 %v714, %v713
        %719 = vst [vmem:[%s308] sm:$0xff] %v715
        %720 = vst [vmem:[%s308 + $0x8] sm:$0xff] %v716
        %721 = vst [vmem:[%s308 + $0x10] sm:$0x33] %v717
        %722 = vst [vmem:[%s308 + $0x18] sm:$0x33] %v718
        %s723 = sand.u32 %s134, 1
        %s724 = sand.u32 %s134, 1
        %s725 = smul.addr %s724, 32
        %s726 = scalar_lea.vmem [#allocation3], %s725
        // Predicated region
        $region64: #{forward.7} parent=58 // pred_check
          %p727 = pneg %p144
        $region65: #{forward.7} parent=58 // pred_check_branch
          %729 = sbr.rel (%p727) target = $region67
        $region66: #{forward.7} parent=58 // pred_region
          %s730 = smul.u32 4, %s16
          %s731 = smul.addr %s730, 4
          %s732 = scalar_lea.vmem %s5, %s731
          // Predicated region
          $region68: #{forward.7} parent=66 // pred_check
            _
          $region69: #{forward.7} parent=66 // pred_check_branch
            %734 = sbr.rel (0) target = $region71
          $region70: #{forward.7} parent=66 // pred_region
            // Predicated region
            $region72: #{forward.7} parent=70 // pred_check
              _
            $region73: #{forward.7} parent=70 // pred_check_branch
              %736 = sbr.rel (0) target = $region75
            $region74: #{forward.7} parent=70 // pred_region
              loop: start=0, step=1, limit=1
              $region76: #{forward.7} parent=74 // loop_pre_header
                _
              $region77: #{forward.7} parent=74 // loop_header
                %s738 = sphi 0, %s742
                %p739 = scmp.ge.s32.totalorder %s738, 1
                %s743 = sphi %s726, %s726
                %s744 = sphi %s732, %s732
              $region78: #{forward.7} parent=74 // loop_header_branch
                %741 = sbr.rel (%p739) target = $region82
              $region79: #{forward.7} parent=74 // loop_body
                %v745 = vld [vmem:[%s743] sm:$0xff]
                %746 = vst [vmem:[%s744] sm:$0xff] %v745
                %v747 = vld [vmem:[%s743 + $0x8] sm:$0xff]
                %748 = vst [vmem:[%s744 + $0x8] sm:$0xff] %v747
                %v749 = vld [vmem:[%s743 + $0x10] sm:$0xff]
                %750 = vst [vmem:[%s744 + $0x30] sm:$0xff] %v749
                %v751 = vld [vmem:[%s743 + $0x18] sm:$0xff]
                %752 = vst [vmem:[%s744 + $0x38] sm:$0xff] %v751
              $region80: #{forward.7} parent=74 // loop_footer
                %s742 = sadd.s32 1, %s738
              $region81: #{forward.7} parent=74 // loop_footer_branch
                %737 = sbr.rel target = $region77
              $region82: #{forward.7} parent=74 // loop_exit
                _
            $region75: #{forward.7} parent=70 // pred_fallthru
              _
            // Predicated region
            $region83: #{forward.7} parent=70 // pred_check
              _
            $region84: #{forward.7} parent=70 // pred_check_branch
              %754 = sbr.rel target = $region86
            $region85: #{forward.7} parent=70 // pred_region
              _
            $region86: #{forward.7} parent=70 // pred_fallthru
              _
          $region71: #{forward.7} parent=66 // pred_fallthru
            _
          %755 = vnop
        $region67: #{forward.7} parent=58 // pred_fallthru
          _
      $region59: #{forward.7} parent=5 // pred_fallthru
        _
      %p756 = scmp.le.s32.totalorder 2, %s11
      // Predicated region
      $region87: #{forward.7} parent=5 // pred_check
        %p757 = pneg %p756
      $region88: #{forward.7} parent=5 // pred_check_branch
        %759 = sbr.rel (%p757) target = $region90
      $region89: #{forward.7} parent=5 // pred_region
        %s760 = ssub.s32 %s11, 2
        // Predicated region
        $region91: #{forward.7} parent=89 // pred_check
          %p761 = pneg %p150
        $region92: #{forward.7} parent=89 // pred_check_branch
          %763 = sbr.rel (%p761) target = $region94
        $region93: #{forward.7} parent=89 // pred_region
          %s764 = sand.u32 %s135, 1
          %s765 = sand.u32 %s135, 1
          %s766 = smul.addr %s765, 32
          %s767 = scalar_lea.vmem [#allocation3], %s766
        $region94: #{forward.7} parent=89 // pred_fallthru
          _
      $region90: #{forward.7} parent=5 // pred_fallthru
        _
    $region6: #{forward.7} parent=1 // loop_footer
      %s15 = sadd.s32 1, %s11
    $region7: #{forward.7} parent=1 // loop_footer_branch
      %10 = sbr.rel target = $region3
    $region8: #{forward.7} parent=1 // loop_exit
      _

// kernel: forward.8
$region0: #{forward.8}
  #allocation0 [shape = 'u32[]', space=smem, size = 0x4, offset = 0x4, fixed_abs, tag = 'smem constant byte address 0x4 - core index']
  #allocation1 [shape = 'u32[72,128]{1,0:T(1,128)}', space=vmem, size = 0x9000, scoped, tag = 'internal scratch']
  %s0 = inlined_call_operand.vmem [shape: bf16[12,384], index: 0, kind: input, shape index: {}]
  %s1 = inlined_call_operand.vmem [shape: bf16[12,384], index: 1, kind: input, shape index: {}]
  %s2 = inlined_call_operand.vmem [shape: bf16[12,384], index: 2, kind: input, shape index: {}]
  %s3 = inlined_call_operand.vmem [shape: bf16[12,384], index: 3, kind: input, shape index: {}]
  %s4 = inlined_call_operand.vmem [shape: bf16[24,12], index: 4, kind: input, shape index: {}]
  %s5 = inlined_call_operand.vmem [shape: f32[24,1], index: 5, kind: input, shape index: {}]
  %s6 = inlined_call_operand.vmem [shape: bf16[24,384], index: 6, kind: output, shape index: {}]
  %s7 = sld [smem:[#allocation0]]
  $region258: #{forward.8} parent=0
    _
  %s9 = ssub.s32 1, %s7
  %s10 = scalar_select 0, %s9, %s7
  $region1: #{forward.8} parent=0
    #allocation2 [shape = 'u8[8192]{0}', space=vmem, size = 0x2000, scoped, tag = 'input window, operand 0']
    #allocation3 [shape = 'u8[8192]{0}', space=vmem, size = 0x2000, scoped, tag = 'input window, operand 1']
    #allocation4 [shape = 'u8[8192]{0}', space=vmem, size = 0x2000, scoped, tag = 'input window, operand 2']
    #allocation5 [shape = 'u8[8192]{0}', space=vmem, size = 0x2000, scoped, tag = 'input window, operand 3']
    #allocation6 [shape = 'u8[12288]{0}', space=vmem, size = 0x3000, scoped, tag = 'output window, operand 0']
    loop: start=0, step=1, limit=5
    $region2: #{forward.8} parent=1 // loop_pre_header
      _
    $region3: #{forward.8} parent=1 // loop_header
      %s12 = sphi 0, %s16
      %p13 = scmp.ge.s32.totalorder %s12, 5
      %s22 = sphi 0, %s24
      %s25 = sphi 0, %s22
      %s26 = sphi 0, %s25
      %s42 = sphi 0, %s26
      %s48 = sphi 0, %s50
      %s51 = sphi 0, %s48
      %s52 = sphi 0, %s51
      %s68 = sphi 0, %s52
      %s74 = sphi 0, %s76
      %s77 = sphi 0, %s74
      %s78 = sphi 0, %s77
      %s94 = sphi 0, %s78
      %s100 = sphi 0, %s102
      %s103 = sphi 0, %s100
      %s104 = sphi 0, %s103
      %s120 = sphi 0, %s104
      %s124 = sphi 0, %s124
      %s126 = sphi 0, %s124
      %s127 = sphi 0, %s126
      %s141 = sphi 0, %s127
      %s145 = sphi 0, %s145
      %s147 = sphi 0, %s145
      %s148 = sphi 0, %s147
      %s162 = sphi 0, %s148
      %s168 = sphi 0, %s170
      %s171 = sphi 0, %s168
      %s172 = sphi 0, %s171
      %s188 = sphi 0, %s172
    $region4: #{forward.8} parent=1 // loop_header_branch
      %15 = sbr.rel (%p13) target = $region8
    $region5: #{forward.8} parent=1 // loop_body
      %s17 = ssub.s32 %s12, 1
      %s18 = ssub.s32 %s12, 2
      %s19 = sadd.s32 %s12, 1
      %s20 = ssub.s32 %s12, %s19
      %p21 = scmp.eq.s32.totalorder %s20, 0
      %s23 = sadd.s32 %s22, 1
      %s24 = scalar_select %p21, %s22, %s23
      %p27 = pneg %p21
      %p28 = scmp.eq.s32.totalorder %s12, 2
      %p29 = por %p27, %p28
      %p30 = scmp.ne.s32.totalorder %s22, %s25
      %p31 = scmp.eq.s32.totalorder %s12, 0
      %p32 = por %p30, %p31
      %p33 = scmp.ne.s32.totalorder %s22, %s25
      %p34 = scmp.eq.s32.totalorder %s17, 2
      %p35 = por %p33, %p34
      %p36 = scmp.ne.s32.totalorder %s25, %s26
      %p37 = scmp.eq.s32.totalorder %s17, 0
      %p38 = por %p36, %p37
      %p39 = scmp.ne.s32.totalorder %s25, %s26
      %p40 = scmp.eq.s32.totalorder %s18, 2
      %p41 = por %p39, %p40
      %p43 = scmp.ne.s32.totalorder %s26, %s42
      %p44 = scmp.eq.s32.totalorder %s18, 0
      %p45 = por %p43, %p44
      %s46 = ssub.s32 %s12, %s19
      %p47 = scmp.eq.s32.totalorder %s46, 0
      %s49 = sadd.s32 %s48, 1
      %s50 = scalar_select %p47, %s48, %s49
      %p53 = pneg %p47
      %p54 = scmp.eq.s32.totalorder %s12, 2
      %p55 = por %p53, %p54
      %p56 = scmp.ne.s32.totalorder %s48, %s51
      %p57 = scmp.eq.s32.totalorder %s12, 0
      %p58 = por %p56, %p57
      %p59 = scmp.ne.s32.totalorder %s48, %s51
      %p60 = scmp.eq.s32.totalorder %s17, 2
      %p61 = por %p59, %p60
      %p62 = scmp.ne.s32.totalorder %s51, %s52
      %p63 = scmp.eq.s32.totalorder %s17, 0
      %p64 = por %p62, %p63
      %p65 = scmp.ne.s32.totalorder %s51, %s52
      %p66 = scmp.eq.s32.totalorder %s18, 2
      %p67 = por %p65, %p66
      %p69 = scmp.ne.s32.totalorder %s52, %s68
      %p70 = scmp.eq.s32.totalorder %s18, 0
      %p71 = por %p69, %p70
      %s72 = ssub.s32 %s12, %s19
      %p73 = scmp.eq.s32.totalorder %s72, 0
      %s75 = sadd.s32 %s74, 1
      %s76 = scalar_select %p73, %s74, %s75
      %p79 = pneg %p73
      %p80 = scmp.eq.s32.totalorder %s12, 2
      %p81 = por %p79, %p80
      %p82 = scmp.ne.s32.totalorder %s74, %s77
      %p83 = scmp.eq.s32.totalorder %s12, 0
      %p84 = por %p82, %p83
      %p85 = scmp.ne.s32.totalorder %s74, %s77
      %p86 = scmp.eq.s32.totalorder %s17, 2
      %p87 = por %p85, %p86
      %p88 = scmp.ne.s32.totalorder %s77, %s78
      %p89 = scmp.eq.s32.totalorder %s17, 0
      %p90 = por %p88, %p89
      %p91 = scmp.ne.s32.totalorder %s77, %s78
      %p92 = scmp.eq.s32.totalorder %s18, 2
      %p93 = por %p91, %p92
      %p95 = scmp.ne.s32.totalorder %s78, %s94
      %p96 = scmp.eq.s32.totalorder %s18, 0
      %p97 = por %p95, %p96
      %s98 = ssub.s32 %s12, %s19
      %p99 = scmp.eq.s32.totalorder %s98, 0
      %s101 = sadd.s32 %s100, 1
      %s102 = scalar_select %p99, %s100, %s101
      %p105 = pneg %p99
      %p106 = scmp.eq.s32.totalorder %s12, 2
      %p107 = por %p105, %p106
      %p108 = scmp.ne.s32.totalorder %s100, %s103
      %p109 = scmp.eq.s32.totalorder %s12, 0
      %p110 = por %p108, %p109
      %p111 = scmp.ne.s32.totalorder %s100, %s103
      %p112 = scmp.eq.s32.totalorder %s17, 2
      %p113 = por %p111, %p112
      %p114 = scmp.ne.s32.totalorder %s103, %s104
      %p115 = scmp.eq.s32.totalorder %s17, 0
      %p116 = por %p114, %p115
      %p117 = scmp.ne.s32.totalorder %s103, %s104
      %p118 = scmp.eq.s32.totalorder %s18, 2
      %p119 = por %p117, %p118
      %p121 = scmp.ne.s32.totalorder %s104, %s120
      %p122 = scmp.eq.s32.totalorder %s18, 0
      %p123 = por %p121, %p122
      %s125 = sadd.s32 %s124, 1
      %p128 = scmp.eq.s32.totalorder %s12, 2
      %p129 = scmp.ne.s32.totalorder %s124, %s126
      %p130 = scmp.eq.s32.totalorder %s12, 0
      %p131 = por %p129, %p130
      %p132 = scmp.ne.s32.totalorder %s124, %s126
      %p133 = scmp.eq.s32.totalorder %s17, 2
      %p134 = por %p132, %p133
      %p135 = scmp.ne.s32.totalorder %s126, %s127
      %p136 = scmp.eq.s32.totalorder %s17, 0
      %p137 = por %p135, %p136
      %p138 = scmp.ne.s32.totalorder %s126, %s127
      %p139 = scmp.eq.s32.totalorder %s18, 2
      %p140 = por %p138, %p139
      %p142 = scmp.ne.s32.totalorder %s127, %s141
      %p143 = scmp.eq.s32.totalorder %s18, 0
      %p144 = por %p142, %p143
      %s146 = sadd.s32 %s145, 1
      %p149 = scmp.eq.s32.totalorder %s12, 2
      %p150 = scmp.ne.s32.totalorder %s145, %s147
      %p151 = scmp.eq.s32.totalorder %s12, 0
      %p152 = por %p150, %p151
      %p153 = scmp.ne.s32.totalorder %s145, %s147
      %p154 = scmp.eq.s32.totalorder %s17, 2
      %p155 = por %p153, %p154
      %p156 = scmp.ne.s32.totalorder %s147, %s148
      %p157 = scmp.eq.s32.totalorder %s17, 0
      %p158 = por %p156, %p157
      %p159 = scmp.ne.s32.totalorder %s147, %s148
      %p160 = scmp.eq.s32.totalorder %s18, 2
      %p161 = por %p159, %p160
      %p163 = scmp.ne.s32.totalorder %s148, %s162
      %p164 = scmp.eq.s32.totalorder %s18, 0
      %p165 = por %p163, %p164
      %s166 = ssub.s32 %s12, %s19
      %p167 = scmp.eq.s32.totalorder %s166, 0
      %s169 = sadd.s32 %s168, 1
      %s170 = scalar_select %p167, %s168, %s169
      %p173 = pneg %p167
      %p174 = scmp.eq.s32.totalorder %s12, 2
      %p175 = por %p173, %p174
      %p176 = scmp.ne.s32.totalorder %s168, %s171
      %p177 = scmp.eq.s32.totalorder %s12, 0
      %p178 = por %p176, %p177
      %p179 = scmp.ne.s32.totalorder %s168, %s171
      %p180 = scmp.eq.s32.totalorder %s17, 2
      %p181 = por %p179, %p180
      %p182 = scmp.ne.s32.totalorder %s171, %s172
      %p183 = scmp.eq.s32.totalorder %s17, 0
      %p184 = por %p182, %p183
      %p185 = scmp.ne.s32.totalorder %s171, %s172
      %p186 = scmp.eq.s32.totalorder %s18, 2
      %p187 = por %p185, %p186
      %p189 = scmp.ne.s32.totalorder %s172, %s188
      %p190 = scmp.eq.s32.totalorder %s18, 0
      %p191 = por %p189, %p190
      %p192 = scmp.le.s32.totalorder 1, %s12
      %p193 = scmp.lt.s32.totalorder %s12, 4
      %p194 = pnand %p192, %p193
      %p195 = pneg %p194
      // Predicated region
      $region9: #{forward.8} parent=5 // pred_check
        _
      $region10: #{forward.8} parent=5 // pred_check_branch
        %197 = sbr.rel (%p194) target = $region12
      $region11: #{forward.8} parent=5 // pred_region
        %s198 = ssub.s32 %s12, 1
        // Predicated region
        $region13: #{forward.8} parent=11 // pred_check
          %p199 = pneg %p137
        $region14: #{forward.8} parent=11 // pred_check_branch
          %201 = sbr.rel (%p199) target = $region16
        $region15: #{forward.8} parent=11 // pred_region
          _
        $region16: #{forward.8} parent=11 // pred_fallthru
          _
        // Predicated region
        $region17: #{forward.8} parent=11 // pred_check
          %p202 = pneg %p158
        $region18: #{forward.8} parent=11 // pred_check_branch
          %204 = sbr.rel (%p202) target = $region20
        $region19: #{forward.8} parent=11 // pred_region
          _
        $region20: #{forward.8} parent=11 // pred_fallthru
          _
      $region12: #{forward.8} parent=5 // pred_fallthru
        _
      %p205 = scmp.lt.s32.totalorder %s12, 3
      // Predicated region
      $region21: #{forward.8} parent=5 // pred_check
        %p206 = pneg %p205
      $region22: #{forward.8} parent=5 // pred_check_branch
        %208 = sbr.rel (%p206) target = $region24
      $region23: #{forward.8} parent=5 // pred_region
        // Predicated region
        $region25: #{forward.8} parent=23 // pred_check
          %p209 = pneg %p32
        $region26: #{forward.8} parent=23 // pred_check_branch
          %211 = sbr.rel (%p209) target = $region28
        $region27: #{forward.8} parent=23 // pred_region
          %s212 = sand.u32 %s22, 1
          %s213 = sand.u32 %s22, 1
          %s214 = smul.addr %s213, 8
          %s215 = scalar_lea.vmem [#allocation2], %s214
          %s216 = smul.addr %s12, 4
          %s217 = scalar_lea.vmem %s0, %s216
          // Predicated region
          $region29: #{forward.8} parent=27 // pred_check
            _
          $region30: #{forward.8} parent=27 // pred_check_branch
            %219 = sbr.rel (0) target = $region32
          $region31: #{forward.8} parent=27 // pred_region
            // Predicated region
            $region33: #{forward.8} parent=31 // pred_check
              _
            $region34: #{forward.8} parent=31 // pred_check_branch
              %221 = sbr.rel target = $region36
            $region35: #{forward.8} parent=31 // pred_region
              // Predicated region
              $region48: #{forward.8} parent=35 // pred_check
                _
              $region49: #{forward.8} parent=35 // pred_check_branch
                %239 = sbr.rel (0) target = $region51
              $region50: #{forward.8} parent=35 // pred_region
                loop: start=0, step=1, limit=1
                $region52: #{forward.8} parent=50 // loop_pre_header
                  _
                $region53: #{forward.8} parent=50 // loop_header
                  %s241 = sphi 0, %s245
                  %p242 = scmp.ge.s32.totalorder %s241, 1
                  %s246 = sphi %s217, %s217
                  %s247 = sphi %s215, %s215
                $region54: #{forward.8} parent=50 // loop_header_branch
                  %244 = sbr.rel (%p242) target = $region58
                $region55: #{forward.8} parent=50 // loop_body
                  _
                $region56: #{forward.8} parent=50 // loop_footer
                  %s245 = sadd.s32 1, %s241
                $region57: #{forward.8} parent=50 // loop_footer_branch
                  %240 = sbr.rel target = $region53
                $region58: #{forward.8} parent=50 // loop_exit
                  _
                %s249 = ssub.s32 16, 1
                loop: start=0, step=1, limit=1
                $region59: #{forward.8} parent=50 // loop_pre_header
                  _
                $region60: #{forward.8} parent=50 // loop_header
                  %s251 = sphi 0, %s255
                  %p252 = scmp.ge.s32.totalorder %s251, 1
                  %s256 = sphi %s217, %s217
                  %s257 = sphi %s215, %s215
                $region61: #{forward.8} parent=50 // loop_header_branch
                  %254 = sbr.rel (%p252) target = $region65
                $region62: #{forward.8} parent=50 // loop_body
                  %v258 = vld [vmem:[%s256] sm:%s249]
                  %259 = vst [vmem:[%s257] sm:%s249] %v258
                  %v260 = vld [vmem:[%s256 + $0xc] sm:%s249]
                  %261 = vst [vmem:[%s257 + $0x4] sm:%s249] %v260
                $region63: #{forward.8} parent=50 // loop_footer
                  %s255 = sadd.s32 1, %s251
                $region64: #{forward.8} parent=50 // loop_footer_branch
                  %250 = sbr.rel target = $region60
                $region65: #{forward.8} parent=50 // loop_exit
                  _
              $region51: #{forward.8} parent=35 // pred_fallthru
                _
            $region36: #{forward.8} parent=31 // pred_fallthru
              _
            // Predicated region
            $region37: #{forward.8} parent=31 // pred_check
              _
            $region38: #{forward.8} parent=31 // pred_check_branch
              %223 = sbr.rel (0) target = $region40
            $region39: #{forward.8} parent=31 // pred_region
              %s225 = ssub.s32 16, 1
              loop: start=0, step=1, limit=1
              $region41: #{forward.8} parent=39 // loop_pre_header
                _
              $region42: #{forward.8} parent=39 // loop_header
                %s227 = sphi 0, %s231
                %p228 = scmp.ge.s32.totalorder %s227, 1
                %s232 = sphi %s217, %s217
                %s233 = sphi %s215, %s215
              $region43: #{forward.8} parent=39 // loop_header_branch
                %230 = sbr.rel (%p228) target = $region47
              $region44: #{forward.8} parent=39 // loop_body
                %v234 = vld [vmem:[%s232] sm:%s225]
                %235 = vst [vmem:[%s233] sm:%s225] %v234
                %v236 = vld [vmem:[%s232 + $0xc] sm:%s225]
                %237 = vst [vmem:[%s233 + $0x4] sm:%s225] %v236
              $region45: #{forward.8} parent=39 // loop_footer
                %s231 = sadd.s32 1, %s227
              $region46: #{forward.8} parent=39 // loop_footer_branch
                %226 = sbr.rel target = $region42
              $region47: #{forward.8} parent=39 // loop_exit
                _
            $region40: #{forward.8} parent=31 // pred_fallthru
              _
          $region32: #{forward.8} parent=27 // pred_fallthru
            _
          %262 = vnop
        $region28: #{forward.8} parent=23 // pred_fallthru
          _
        // Predicated region
        $region66: #{forward.8} parent=23 // pred_check
          %p263 = pneg %p58
        $region67: #{forward.8} parent=23 // pred_check_branch
          %265 = sbr.rel (%p263) target = $region69
        $region68: #{forward.8} parent=23 // pred_region
          %s266 = sand.u32 %s48, 1
          %s267 = sand.u32 %s48, 1
          %s268 = smul.addr %s267, 8
          %s269 = scalar_lea.vmem [#allocation3], %s268
          %s270 = smul.addr %s12, 4
          %s271 = scalar_lea.vmem %s1, %s270
          // Predicated region
          $region70: #{forward.8} parent=68 // pred_check
            _
          $region71: #{forward.8} parent=68 // pred_check_branch
            %273 = sbr.rel (0) target = $region73
          $region72: #{forward.8} parent=68 // pred_region
            // Predicated region
            $region74: #{forward.8} parent=72 // pred_check
              _
            $region75: #{forward.8} parent=72 // pred_check_branch
              %275 = sbr.rel target = $region77
            $region76: #{forward.8} parent=72 // pred_region
              // Predicated region
              $region89: #{forward.8} parent=76 // pred_check
                _
              $region90: #{forward.8} parent=76 // pred_check_branch
                %293 = sbr.rel (0) target = $region92
              $region91: #{forward.8} parent=76 // pred_region
                loop: start=0, step=1, limit=1
                $region93: #{forward.8} parent=91 // loop_pre_header
                  _
                $region94: #{forward.8} parent=91 // loop_header
                  %s295 = sphi 0, %s299
                  %p296 = scmp.ge.s32.totalorder %s295, 1
                  %s300 = sphi %s271, %s271
                  %s301 = sphi %s269, %s269
                $region95: #{forward.8} parent=91 // loop_header_branch
                  %298 = sbr.rel (%p296) target = $region99
                $region96: #{forward.8} parent=91 // loop_body
                  _
                $region97: #{forward.8} parent=91 // loop_footer
                  %s299 = sadd.s32 1, %s295
                $region98: #{forward.8} parent=91 // loop_footer_branch
                  %294 = sbr.rel target = $region94
                $region99: #{forward.8} parent=91 // loop_exit
                  _
                %s303 = ssub.s32 16, 1
                loop: start=0, step=1, limit=1
                $region100: #{forward.8} parent=91 // loop_pre_header
                  _
                $region101: #{forward.8} parent=91 // loop_header
                  %s305 = sphi 0, %s309
                  %p306 = scmp.ge.s32.totalorder %s305, 1
                  %s310 = sphi %s271, %s271
                  %s311 = sphi %s269, %s269
                $region102: #{forward.8} parent=91 // loop_header_branch
                  %308 = sbr.rel (%p306) target = $region106
                $region103: #{forward.8} parent=91 // loop_body
                  %v312 = vld [vmem:[%s310] sm:%s303]
                  %313 = vst [vmem:[%s311] sm:%s303] %v312
                  %v314 = vld [vmem:[%s310 + $0xc] sm:%s303]
                  %315 = vst [vmem:[%s311 + $0x4] sm:%s303] %v314
                $region104: #{forward.8} parent=91 // loop_footer
                  %s309 = sadd.s32 1, %s305
                $region105: #{forward.8} parent=91 // loop_footer_branch
                  %304 = sbr.rel target = $region101
                $region106: #{forward.8} parent=91 // loop_exit
                  _
              $region92: #{forward.8} parent=76 // pred_fallthru
                _
            $region77: #{forward.8} parent=72 // pred_fallthru
              _
            // Predicated region
            $region78: #{forward.8} parent=72 // pred_check
              _
            $region79: #{forward.8} parent=72 // pred_check_branch
              %277 = sbr.rel (0) target = $region81
            $region80: #{forward.8} parent=72 // pred_region
              %s279 = ssub.s32 16, 1
              loop: start=0, step=1, limit=1
              $region82: #{forward.8} parent=80 // loop_pre_header
                _
              $region83: #{forward.8} parent=80 // loop_header
                %s281 = sphi 0, %s285
                %p282 = scmp.ge.s32.totalorder %s281, 1
                %s286 = sphi %s271, %s271
                %s287 = sphi %s269, %s269
              $region84: #{forward.8} parent=80 // loop_header_branch
                %284 = sbr.rel (%p282) target = $region88
              $region85: #{forward.8} parent=80 // loop_body
                %v288 = vld [vmem:[%s286] sm:%s279]
                %289 = vst [vmem:[%s287] sm:%s279] %v288
                %v290 = vld [vmem:[%s286 + $0xc] sm:%s279]
                %291 = vst [vmem:[%s287 + $0x4] sm:%s279] %v290
              $region86: #{forward.8} parent=80 // loop_footer
                %s285 = sadd.s32 1, %s281
              $region87: #{forward.8} parent=80 // loop_footer_branch
                %280 = sbr.rel target = $region83
              $region88: #{forward.8} parent=80 // loop_exit
                _
            $region81: #{forward.8} parent=72 // pred_fallthru
              _
          $region73: #{forward.8} parent=68 // pred_fallthru
            _
          %316 = vnop
        $region69: #{forward.8} parent=23 // pred_fallthru
          _
        // Predicated region
        $region107: #{forward.8} parent=23 // pred_check
          %p317 = pneg %p84
        $region108: #{forward.8} parent=23 // pred_check_branch
          %319 = sbr.rel (%p317) target = $region110
        $region109: #{forward.8} parent=23 // pred_region
          %s320 = sand.u32 %s74, 1
          %s321 = sand.u32 %s74, 1
          %s322 = smul.addr %s321, 8
          %s323 = scalar_lea.vmem [#allocation4], %s322
          %s324 = smul.addr %s12, 4
          %s325 = scalar_lea.vmem %s2, %s324
          // Predicated region
          $region111: #{forward.8} parent=109 // pred_check
            _
          $region112: #{forward.8} parent=109 // pred_check_branch
            %327 = sbr.rel (0) target = $region114
          $region113: #{forward.8} parent=109 // pred_region
            // Predicated region
            $region115: #{forward.8} parent=113 // pred_check
              _
            $region116: #{forward.8} parent=113 // pred_check_branch
              %329 = sbr.rel target = $region118
            $region117: #{forward.8} parent=113 // pred_region
              // Predicated region
              $region130: #{forward.8} parent=117 // pred_check
                _
              $region131: #{forward.8} parent=117 // pred_check_branch
                %347 = sbr.rel (0) target = $region133
              $region132: #{forward.8} parent=117 // pred_region
                loop: start=0, step=1, limit=1
                $region134: #{forward.8} parent=132 // loop_pre_header
                  _
                $region135: #{forward.8} parent=132 // loop_header
                  %s349 = sphi 0, %s353
                  %p350 = scmp.ge.s32.totalorder %s349, 1
                  %s354 = sphi %s325, %s325
                  %s355 = sphi %s323, %s323
                $region136: #{forward.8} parent=132 // loop_header_branch
                  %352 = sbr.rel (%p350) target = $region140
                $region137: #{forward.8} parent=132 // loop_body
                  _
                $region138: #{forward.8} parent=132 // loop_footer
                  %s353 = sadd.s32 1, %s349
                $region139: #{forward.8} parent=132 // loop_footer_branch
                  %348 = sbr.rel target = $region135
                $region140: #{forward.8} parent=132 // loop_exit
                  _
                %s357 = ssub.s32 16, 1
                loop: start=0, step=1, limit=1
                $region141: #{forward.8} parent=132 // loop_pre_header
                  _
                $region142: #{forward.8} parent=132 // loop_header
                  %s359 = sphi 0, %s363
                  %p360 = scmp.ge.s32.totalorder %s359, 1
                  %s364 = sphi %s325, %s325
                  %s365 = sphi %s323, %s323
                $region143: #{forward.8} parent=132 // loop_header_branch
                  %362 = sbr.rel (%p360) target = $region147
                $region144: #{forward.8} parent=132 // loop_body
                  %v366 = vld [vmem:[%s364] sm:%s357]
                  %367 = vst [vmem:[%s365] sm:%s357] %v366
                  %v368 = vld [vmem:[%s364 + $0xc] sm:%s357]
                  %369 = vst [vmem:[%s365 + $0x4] sm:%s357] %v368
                $region145: #{forward.8} parent=132 // loop_footer
                  %s363 = sadd.s32 1, %s359
                $region146: #{forward.8} parent=132 // loop_footer_branch
                  %358 = sbr.rel target = $region142
                $region147: #{forward.8} parent=132 // loop_exit
                  _
              $region133: #{forward.8} parent=117 // pred_fallthru
                _
            $region118: #{forward.8} parent=113 // pred_fallthru
              _
            // Predicated region
            $region119: #{forward.8} parent=113 // pred_check
              _
            $region120: #{forward.8} parent=113 // pred_check_branch
              %331 = sbr.rel (0) target = $region122
            $region121: #{forward.8} parent=113 // pred_region
              %s333 = ssub.s32 16, 1
              loop: start=0, step=1, limit=1
              $region123: #{forward.8} parent=121 // loop_pre_header
                _
              $region124: #{forward.8} parent=121 // loop_header
                %s335 = sphi 0, %s339
                %p336 = scmp.ge.s32.totalorder %s335, 1
                %s340 = sphi %s325, %s325
                %s341 = sphi %s323, %s323
              $region125: #{forward.8} parent=121 // loop_header_branch
                %338 = sbr.rel (%p336) target = $region129
              $region126: #{forward.8} parent=121 // loop_body
                %v342 = vld [vmem:[%s340] sm:%s333]
                %343 = vst [vmem:[%s341] sm:%s333] %v342
                %v344 = vld [vmem:[%s340 + $0xc] sm:%s333]
                %345 = vst [vmem:[%s341 + $0x4] sm:%s333] %v344
              $region127: #{forward.8} parent=121 // loop_footer
                %s339 = sadd.s32 1, %s335
              $region128: #{forward.8} parent=121 // loop_footer_branch
                %334 = sbr.rel target = $region124
              $region129: #{forward.8} parent=121 // loop_exit
                _
            $region122: #{forward.8} parent=113 // pred_fallthru
              _
          $region114: #{forward.8} parent=109 // pred_fallthru
            _
          %370 = vnop
        $region110: #{forward.8} parent=23 // pred_fallthru
          _
        // Predicated region
        $region148: #{forward.8} parent=23 // pred_check
          %p371 = pneg %p110
        $region149: #{forward.8} parent=23 // pred_check_branch
          %373 = sbr.rel (%p371) target = $region151
        $region150: #{forward.8} parent=23 // pred_region
          %s374 = sand.u32 %s100, 1
          %s375 = sand.u32 %s100, 1
          %s376 = smul.addr %s375, 8
          %s377 = scalar_lea.vmem [#allocation5], %s376
          %s378 = smul.addr %s12, 4
          %s379 = scalar_lea.vmem %s3, %s378
          // Predicated region
          $region152: #{forward.8} parent=150 // pred_check
            _
          $region153: #{forward.8} parent=150 // pred_check_branch
            %381 = sbr.rel (0) target = $region155
          $region154: #{forward.8} parent=150 // pred_region
            // Predicated region
            $region156: #{forward.8} parent=154 // pred_check
              _
            $region157: #{forward.8} parent=154 // pred_check_branch
              %383 = sbr.rel target = $region159
            $region158: #{forward.8} parent=154 // pred_region
              // Predicated region
              $region171: #{forward.8} parent=158 // pred_check
                _
              $region172: #{forward.8} parent=158 // pred_check_branch
                %401 = sbr.rel (0) target = $region174
              $region173: #{forward.8} parent=158 // pred_region
                loop: start=0, step=1, limit=1
                $region175: #{forward.8} parent=173 // loop_pre_header
                  _
                $region176: #{forward.8} parent=173 // loop_header
                  %s403 = sphi 0, %s407
                  %p404 = scmp.ge.s32.totalorder %s403, 1
                  %s408 = sphi %s379, %s379
                  %s409 = sphi %s377, %s377
                $region177: #{forward.8} parent=173 // loop_header_branch
                  %406 = sbr.rel (%p404) target = $region181
                $region178: #{forward.8} parent=173 // loop_body
                  _
                $region179: #{forward.8} parent=173 // loop_footer
                  %s407 = sadd.s32 1, %s403
                $region180: #{forward.8} parent=173 // loop_footer_branch
                  %402 = sbr.rel target = $region176
                $region181: #{forward.8} parent=173 // loop_exit
                  _
                %s411 = ssub.s32 16, 1
                loop: start=0, step=1, limit=1
                $region182: #{forward.8} parent=173 // loop_pre_header
                  _
                $region183: #{forward.8} parent=173 // loop_header
                  %s413 = sphi 0, %s417
                  %p414 = scmp.ge.s32.totalorder %s413, 1
                  %s418 = sphi %s379, %s379
                  %s419 = sphi %s377, %s377
                $region184: #{forward.8} parent=173 // loop_header_branch
                  %416 = sbr.rel (%p414) target = $region188
                $region185: #{forward.8} parent=173 // loop_body
                  %v420 = vld [vmem:[%s418] sm:%s411]
                  %421 = vst [vmem:[%s419] sm:%s411] %v420
                  %v422 = vld [vmem:[%s418 + $0xc] sm:%s411]
                  %423 = vst [vmem:[%s419 + $0x4] sm:%s411] %v422
                $region186: #{forward.8} parent=173 // loop_footer
                  %s417 = sadd.s32 1, %s413
                $region187: #{forward.8} parent=173 // loop_footer_branch
                  %412 = sbr.rel target = $region183
                $region188: #{forward.8} parent=173 // loop_exit
                  _
              $region174: #{forward.8} parent=158 // pred_fallthru
                _
            $region159: #{forward.8} parent=154 // pred_fallthru
              _
            // Predicated region
            $region160: #{forward.8} parent=154 // pred_check
              _
            $region161: #{forward.8} parent=154 // pred_check_branch
              %385 = sbr.rel (0) target = $region163
            $region162: #{forward.8} parent=154 // pred_region
              %s387 = ssub.s32 16, 1
              loop: start=0, step=1, limit=1
              $region164: #{forward.8} parent=162 // loop_pre_header
                _
              $region165: #{forward.8} parent=162 // loop_header
                %s389 = sphi 0, %s393
                %p390 = scmp.ge.s32.totalorder %s389, 1
                %s394 = sphi %s379, %s379
                %s395 = sphi %s377, %s377
              $region166: #{forward.8} parent=162 // loop_header_branch
                %392 = sbr.rel (%p390) target = $region170
              $region167: #{forward.8} parent=162 // loop_body
                %v396 = vld [vmem:[%s394] sm:%s387]
                %397 = vst [vmem:[%s395] sm:%s387] %v396
                %v398 = vld [vmem:[%s394 + $0xc] sm:%s387]
                %399 = vst [vmem:[%s395 + $0x4] sm:%s387] %v398
              $region168: #{forward.8} parent=162 // loop_footer
                %s393 = sadd.s32 1, %s389
              $region169: #{forward.8} parent=162 // loop_footer_branch
                %388 = sbr.rel target = $region165
              $region170: #{forward.8} parent=162 // loop_exit
                _
            $region163: #{forward.8} parent=154 // pred_fallthru
              _
          $region155: #{forward.8} parent=150 // pred_fallthru
            _
          %424 = vnop
        $region151: #{forward.8} parent=23 // pred_fallthru
          _
      $region24: #{forward.8} parent=5 // pred_fallthru
        _
      %p425 = scmp.le.s32.totalorder 1, %s12
      %p426 = scmp.lt.s32.totalorder %s12, 4
      %p427 = pnand %p425, %p426
      %p428 = pneg %p427
      // Predicated region
      $region189: #{forward.8} parent=5 // pred_check
        _
      $region190: #{forward.8} parent=5 // pred_check_branch
        %430 = sbr.rel (%p427) target = $region192
      $region191: #{forward.8} parent=5 // pred_region
        %s431 = ssub.s32 %s12, 1
        %s432 = sand.u32 %s25, 1
        %s433 = sand.u32 %s25, 1
        %s434 = smul.addr %s433, 8
        %s435 = scalar_lea.vmem [#allocation2], %s434
        // Predicated region
        $region193: #{forward.8} parent=191 // pred_check
          %p436 = pneg %p38
        $region194: #{forward.8} parent=191 // pred_check_branch
          %438 = sbr.rel (%p436) target = $region196
        $region195: #{forward.8} parent=191 // pred_region
          _
        $region196: #{forward.8} parent=191 // pred_fallthru
          _
        %s439 = sand.u32 %s51, 1
        %s440 = sand.u32 %s51, 1
        %s441 = smul.addr %s440, 8
        %s442 = scalar_lea.vmem [#allocation3], %s441
        // Predicated region
        $region197: #{forward.8} parent=191 // pred_check
          %p443 = pneg %p64
        $region198: #{forward.8} parent=191 // pred_check_branch
          %445 = sbr.rel (%p443) target = $region200
        $region199: #{forward.8} parent=191 // pred_region
          _
        $region200: #{forward.8} parent=191 // pred_fallthru
          _
        %s446 = sand.u32 %s77, 1
        %s447 = sand.u32 %s77, 1
        %s448 = smul.addr %s447, 8
        %s449 = scalar_lea.vmem [#allocation4], %s448
        // Predicated region
        $region201: #{forward.8} parent=191 // pred_check
          %p450 = pneg %p90
        $region202: #{forward.8} parent=191 // pred_check_branch
          %452 = sbr.rel (%p450) target = $region204
        $region203: #{forward.8} parent=191 // pred_region
          _
        $region204: #{forward.8} parent=191 // pred_fallthru
          _
        %s453 = sand.u32 %s103, 1
        %s454 = sand.u32 %s103, 1
        %s455 = smul.addr %s454, 8
        %s456 = scalar_lea.vmem [#allocation5], %s455
        // Predicated region
        $region205: #{forward.8} parent=191 // pred_check
          %p457 = pneg %p116
        $region206: #{forward.8} parent=191 // pred_check_branch
          %459 = sbr.rel (%p457) target = $region208
        $region207: #{forward.8} parent=191 // pred_region
          _
        $region208: #{forward.8} parent=191 // pred_fallthru
          _
        %s460 = sand.u32 %s25, 1
        %s461 = sand.u32 %s25, 1
        %s462 = smul.addr %s461, 8
        %s463 = scalar_lea.vmem [#allocation2], %s462
        %p464 = pneg %p38
        %p465 = pneg %p35
        %s466 = sand.u32 %s51, 1
        %s467 = sand.u32 %s51, 1
        %s468 = smul.addr %s467, 8
        %s469 = scalar_lea.vmem [#allocation3], %s468
        %p470 = pneg %p64
        %p471 = pneg %p61
        %s472 = sand.u32 %s77, 1
        %s473 = sand.u32 %s77, 1
        %s474 = smul.addr %s473, 8
        %s475 = scalar_lea.vmem [#allocation4], %s474
        %p476 = pneg %p90
        %p477 = pneg %p87
        %s478 = sand.u32 %s103, 1
        %s479 = sand.u32 %s103, 1
        %s480 = smul.addr %s479, 8
        %s481 = scalar_lea.vmem [#allocation5], %s480
        %p482 = pneg %p116
        %p483 = pneg %p113
        %p484 = pneg %p137
        %p485 = pneg %p134
        %p486 = pneg %p158
        %p487 = pneg %p155
        %p488 = pneg %p184
        %p489 = pneg %p181
        %s490 = sand.u32 %s171, 1
        %s491 = sand.u32 %s171, 1
        %s492 = smul.addr %s491, 12
        %s493 = scalar_lea.vmem [#allocation6], %s492
        %v495 = vld [vmem:[%s4] sm:$0xf]
        %v496 = vld [vmem:[%s4 + $0x4] sm:$0xf]
        %v497 = vld [vmem:[%s4 + $0x8] sm:$0xf]
        %v498 = vld [vmem:[%s435] sm:$0xf]
        %v499 = vld [vmem:[%s435 + $0x4] sm:$0x3]
        %v503 = vunpack.c.l.b16 %v495
        %v504 = vunpack.c.l.b16 %v496
        %v505 = vunpack.c.l.b16 %v497
        %v506 = vpack.c.b16 %v504, %v503
        %v507 = vpack.c.b16 %v505, %v505
        %v510 = vunpack.c.l.b16 %v498
        %v511 = vunpack.c.l.b16 %v499
        %v512 = vpack.c.b16 %v511, %v510
        %vm513 = vcmask 97280
        %v515 = vsel %vm513, %v506, 0
        %v518 = vsel %vm513, %v507, 0
        %vm520 = vcmask 1045504
        %v522 = vsel %vm520, %v512, 0
        %524 = vmatpush.bf16.msra.mxu0 0
        %525 = vmatpush.bf16.msra.mxu0 0
        %526 = vmatpush.bf16.msra.mxu0 0
        %527 = vmatpush.bf16.msra.mxu0 0
        %528 = vmatpush.bf16.msra.mxu0 0
        %529 = vmatpush.bf16.msra.mxu0 0
        %530 = vmatpush.bf16.msra.mxu0 0
        %531 = vmatpush.bf16.msra.mxu0 %v522
        %532 = vmatmul.bf16.gmra.mxu0 %v515
        %v533 = vpop.f32.mrf.mxu0
        %v534 = vadd.f32 0.0, %v533
        %v535 = vpop.f32.mrf.mxu0
        %v536 = vadd.f32 0.0, %v535
        %537 = vmatmul.bf16.gmra.mxu0 %v518
        %v538 = vpop.f32.mrf.mxu0
        %v539 = vadd.f32 0.0, %v538
        %v540 = vpop.f32.mrf.mxu0
        %541 = vdwg.mxu0
        %v542 = vld [vmem:[%s442] sm:$0xf]
        %v543 = vld [vmem:[%s442 + $0x4] sm:$0x3]
        %v546 = vunpack.c.l.b16 %v542
        %v547 = vunpack.c.l.b16 %v543
        %v548 = vpack.c.b16 %v547, %v546
        %v550 = vsel %vm520, %v548, 0
        %552 = vmatpush.bf16.msra.mxu0 0
        %553 = vmatpush.bf16.msra.mxu0 0
        %554 = vmatpush.bf16.msra.mxu0 0
        %555 = vmatpush.bf16.msra.mxu0 0
        %556 = vmatpush.bf16.msra.mxu0 0
        %557 = vmatpush.bf16.msra.mxu0 0
        %558 = vmatpush.bf16.msra.mxu0 0
        %559 = vmatpush.bf16.msra.mxu0 %v550
        %560 = vmatmul.bf16.gmra.mxu0 %v515
        %v561 = vpop.f32.mrf.mxu0
        %v562 = vadd.f32 0.0, %v561
        %v563 = vpop.f32.mrf.mxu0
        %v564 = vadd.f32 0.0, %v563
        %565 = vmatmul.bf16.gmra.mxu0 %v518
        %v566 = vpop.f32.mrf.mxu0
        %v567 = vadd.f32 0.0, %v566
        %v568 = vpop.f32.mrf.mxu0
        %569 = vdwg.mxu0
        %v570 = vmax.f32 %v534, %v562
        %v571 = vmax.f32 %v536, %v564
        %v572 = vmax.f32 %v539, %v567
        %v573 = vld [vmem:[%s449] sm:$0xf]
        %v574 = vld [vmem:[%s449 + $0x4] sm:$0x3]
        %v577 = vunpack.c.l.b16 %v573
        %v578 = vunpack.c.l.b16 %v574
        %v579 = vpack.c.b16 %v578, %v577
        %v581 = vsel %vm520, %v579, 0
        %583 = vmatpush.bf16.msra.mxu0 0
        %584 = vmatpush.bf16.msra.mxu0 0
        %585 = vmatpush.bf16.msra.mxu0 0
        %586 = vmatpush.bf16.msra.mxu0 0
        %587 = vmatpush.bf16.msra.mxu0 0
        %588 = vmatpush.bf16.msra.mxu0 0
        %589 = vmatpush.bf16.msra.mxu0 0
        %590 = vmatpush.bf16.msra.mxu0 %v581
        %591 = vmatmul.bf16.gmra.mxu0 %v515
        %v592 = vpop.f32.mrf.mxu0
        %v593 = vadd.f32 0.0, %v592
        %v594 = vpop.f32.mrf.mxu0
        %v595 = vadd.f32 0.0, %v594
        %596 = vmatmul.bf16.gmra.mxu0 %v518
        %v597 = vpop.f32.mrf.mxu0
        %v598 = vadd.f32 0.0, %v597
        %v599 = vpop.f32.mrf.mxu0
        %600 = vdwg.mxu0
        %v601 = vmax.f32 %v570, %v593
        %v602 = vmax.f32 %v571, %v595
        %v603 = vmax.f32 %v572, %v598
        %v604 = vld [vmem:[%s456] sm:$0xf]
        %v605 = vld [vmem:[%s456 + $0x4] sm:$0x3]
        %v608 = vunpack.c.l.b16 %v604
        %v609 = vunpack.c.l.b16 %v605
        %v610 = vpack.c.b16 %v609, %v608
        %v612 = vsel %vm520, %v610, 0
        %614 = vmatpush.bf16.msra.mxu0 0
        %615 = vmatpush.bf16.msra.mxu0 0
        %616 = vmatpush.bf16.msra.mxu0 0
        %617 = vmatpush.bf16.msra.mxu0 0
        %618 = vmatpush.bf16.msra.mxu0 0
        %619 = vmatpush.bf16.msra.mxu0 0
        %620 = vmatpush.bf16.msra.mxu0 0
        %621 = vmatpush.bf16.msra.mxu0 %v612
        %622 = vmatmul.bf16.gmra.mxu0 %v515
        %v623 = vpop.f32.mrf.mxu0
        %v624 = vadd.f32 0.0, %v623
        %v625 = vpop.f32.mrf.mxu0
        %v626 = vadd.f32 0.0, %v625
        %627 = vmatmul.bf16.gmra.mxu0 %v518
        %v628 = vpop.f32.mrf.mxu0
        %v629 = vadd.f32 0.0, %v628
        %v630 = vpop.f32.mrf.mxu0
        %631 = vdwg.mxu0
        %v632 = vmax.f32 %v601, %v624
        %v633 = vmax.f32 %v602, %v626
        %v634 = vmax.f32 %v603, %v629
        %v635 = vld [vmem:[%s5] sm:$0xff]
        %v636 = vld [vmem:[%s5 + $0x8] sm:$0xff]
        %v637 = vld [vmem:[%s5 + $0x10] sm:$0xff]
        %639 = vset.pattern.permute.xlu0 0
        %640 = vperm.xlu0 %639, %v635
        %v641 = vpop.permute.xlu0 %640
        %644 = vset.pattern.permute.xlu0 0
        %645 = vperm.xlu0 %644, %v636
        %v646 = vpop.permute.xlu0 %645
        %649 = vset.pattern.permute.xlu0 0
        %650 = vperm.xlu0 %649, %v637
        %v651 = vpop.permute.xlu0 %650
        %v653 = vadd.f32 %v632, %v641
        %v654 = vadd.f32 %v633, %v646
        %v655 = vadd.f32 %v634, %v651
        %v656 = vpack.c.bf16 %v653, %v653
        %v657 = vpack.c.bf16 %v654, %v654
        %v658 = vpack.c.bf16 %v655, %v655
        %659 = vst [vmem:[%s493] sm:$0xf] %v656
        %660 = vst [vmem:[%s493 + $0x4] sm:$0xf] %v657
        %661 = vst [vmem:[%s493 + $0x8] sm:$0xf] %v658
        %s662 = sand.u32 %s171, 1
        %s663 = sand.u32 %s171, 1
        %s664 = smul.addr %s663, 12
        %s665 = scalar_lea.vmem [#allocation6], %s664
        // Predicated region
        $region209: #{forward.8} parent=191 // pred_check
          %p666 = pneg %p181
        $region210: #{forward.8} parent=191 // pred_check_branch
          %668 = sbr.rel (%p666) target = $region212
        $region211: #{forward.8} parent=191 // pred_region
          %s669 = smul.addr %s17, 4
          %s670 = scalar_lea.vmem %s6, %s669
          // Predicated region
          $region213: #{forward.8} parent=211 // pred_check
            _
          $region214: #{forward.8} parent=211 // pred_check_branch
            %672 = sbr.rel (0) target = $region216
          $region215: #{forward.8} parent=211 // pred_region
            // Predicated region
            $region217: #{forward.8} parent=215 // pred_check
              _
            $region218: #{forward.8} parent=215 // pred_check_branch
              %674 = sbr.rel target = $region220
            $region219: #{forward.8} parent=215 // pred_region
              // Predicated region
              $region232: #{forward.8} parent=219 // pred_check
                _
              $region233: #{forward.8} parent=219 // pred_check_branch
                %694 = sbr.rel (0) target = $region235
              $region234: #{forward.8} parent=219 // pred_region
                loop: start=0, step=1, limit=1
                $region236: #{forward.8} parent=234 // loop_pre_header
                  _
                $region237: #{forward.8} parent=234 // loop_header
                  %s696 = sphi 0, %s700
                  %p697 = scmp.ge.s32.totalorder %s696, 1
                  %s701 = sphi %s665, %s665
                  %s702 = sphi %s670, %s670
                $region238: #{forward.8} parent=234 // loop_header_branch
                  %699 = sbr.rel (%p697) target = $region242
                $region239: #{forward.8} parent=234 // loop_body
                  _
                $region240: #{forward.8} parent=234 // loop_footer
                  %s700 = sadd.s32 1, %s696
                $region241: #{forward.8} parent=234 // loop_footer_branch
                  %695 = sbr.rel target = $region237
                $region242: #{forward.8} parent=234 // loop_exit
                  _
                %s704 = ssub.s32 16, 1
                loop: start=0, step=1, limit=1
                $region243: #{forward.8} parent=234 // loop_pre_header
                  _
                $region244: #{forward.8} parent=234 // loop_header
                  %s706 = sphi 0, %s710
                  %p707 = scmp.ge.s32.totalorder %s706, 1
                  %s711 = sphi %s665, %s665
                  %s712 = sphi %s670, %s670
                $region245: #{forward.8} parent=234 // loop_header_branch
                  %709 = sbr.rel (%p707) target = $region249
                $region246: #{forward.8} parent=234 // loop_body
                  %v713 = vld [vmem:[%s711] sm:%s704]
                  %714 = vst [vmem:[%s712] sm:%s704] %v713
                  %v715 = vld [vmem:[%s711 + $0x4] sm:%s704]
                  %716 = vst [vmem:[%s712 + $0xc] sm:%s704] %v715
                  %v717 = vld [vmem:[%s711 + $0x8] sm:%s704]
                  %718 = vst [vmem:[%s712 + $0x18] sm:%s704] %v717
                $region247: #{forward.8} parent=234 // loop_footer
                  %s710 = sadd.s32 1, %s706
                $region248: #{forward.8} parent=234 // loop_footer_branch
                  %705 = sbr.rel target = $region244
                $region249: #{forward.8} parent=234 // loop_exit
                  _
              $region235: #{forward.8} parent=219 // pred_fallthru
                _
            $region220: #{forward.8} parent=215 // pred_fallthru
              _
            // Predicated region
            $region221: #{forward.8} parent=215 // pred_check
              _
            $region222: #{forward.8} parent=215 // pred_check_branch
              %676 = sbr.rel (0) target = $region224
            $region223: #{forward.8} parent=215 // pred_region
              %s678 = ssub.s32 16, 1
              loop: start=0, step=1, limit=1
              $region225: #{forward.8} parent=223 // loop_pre_header
                _
              $region226: #{forward.8} parent=223 // loop_header
                %s680 = sphi 0, %s684
                %p681 = scmp.ge.s32.totalorder %s680, 1
                %s685 = sphi %s665, %s665
                %s686 = sphi %s670, %s670
              $region227: #{forward.8} parent=223 // loop_header_branch
                %683 = sbr.rel (%p681) target = $region231
              $region228: #{forward.8} parent=223 // loop_body
                %v687 = vld [vmem:[%s685] sm:%s678]
                %688 = vst [vmem:[%s686] sm:%s678] %v687
                %v689 = vld [vmem:[%s685 + $0x4] sm:%s678]
                %690 = vst [vmem:[%s686 + $0xc] sm:%s678] %v689
                %v691 = vld [vmem:[%s685 + $0x8] sm:%s678]
                %692 = vst [vmem:[%s686 + $0x18] sm:%s678] %v691
              $region229: #{forward.8} parent=223 // loop_footer
                %s684 = sadd.s32 1, %s680
              $region230: #{forward.8} parent=223 // loop_footer_branch
                %679 = sbr.rel target = $region226
              $region231: #{forward.8} parent=223 // loop_exit
                _
            $region224: #{forward.8} parent=215 // pred_fallthru
              _
          $region216: #{forward.8} parent=211 // pred_fallthru
            _
          %719 = vnop
        $region212: #{forward.8} parent=191 // pred_fallthru
          _
      $region192: #{forward.8} parent=5 // pred_fallthru
        _
      %p720 = scmp.le.s32.totalorder 2, %s12
      // Predicated region
      $region250: #{forward.8} parent=5 // pred_check
        %p721 = pneg %p720
      $region251: #{forward.8} parent=5 // pred_check_branch
        %723 = sbr.rel (%p721) target = $region253
      $region252: #{forward.8} parent=5 // pred_region
        %s724 = ssub.s32 %s12, 2
        // Predicated region
        $region254: #{forward.8} parent=252 // pred_check
          %p725 = pneg %p187
        $region255: #{forward.8} parent=252 // pred_check_branch
          %727 = sbr.rel (%p725) target = $region257
        $region256: #{forward.8} parent=252 // pred_region
          %s728 = sand.u32 %s172, 1
          %s729 = sand.u32 %s172, 1
          %s730 = smul.addr %s729, 12
          %s731 = scalar_lea.vmem [#allocation6], %s730
        $region257: #{forward.8} parent=252 // pred_fallthru
          _
      $region253: #{forward.8} parent=5 // pred_fallthru
        _
    $region6: #{forward.8} parent=1 // loop_footer
      %s16 = sadd.s32 1, %s12
    $region7: #{forward.8} parent=1 // loop_footer_branch
      %11 = sbr.rel target = $region3
    $region8: #{forward.8} parent=1 // loop_exit
      _

// kernel: forward.9
$region0: #{forward.9}
  #allocation0 [shape = 'u32[]', space=smem, size = 0x4, offset = 0x4, fixed_abs, tag = 'smem constant byte address 0x4 - core index']
  #allocation1 [shape = 'u32[72,128]{1,0:T(1,128)}', space=vmem, size = 0x9000, scoped, tag = 'internal scratch']
  %s0 = inlined_call_operand.vmem [shape: bf16[216,256], index: 0, kind: input, shape index: {}]
  %s1 = inlined_call_operand.vmem [shape: bf16[12,216], index: 1, kind: input, shape index: {}]
  %s2 = inlined_call_operand.vmem [shape: f32[12,1], index: 2, kind: input, shape index: {}]
  %s3 = inlined_call_operand.vmem [shape: f32[12,1], index: 3, kind: input, shape index: {}]
  %s4 = inlined_call_operand.vmem [shape: f32[12,1], index: 4, kind: input, shape index: {}]
  %s5 = inlined_call_operand.vmem [shape: bf16[12,256], index: 5, kind: output, shape index: {}]
  %s6 = sld [smem:[#allocation0]]
  $region131: #{forward.9} parent=0
    _
  %s8 = ssub.s32 1, %s6
  %s9 = scalar_select 0, %s8, %s6
  $region1: #{forward.9} parent=0
    #allocation2 [shape = 'u8[110592]{0}', space=vmem, size = 0x1b000, scoped, tag = 'input window, operand 0']
    #allocation3 [shape = 'u8[8192]{0}', space=vmem, size = 0x2000, scoped, tag = 'output window, operand 0']
    loop: start=0, step=1, limit=4
    $region2: #{forward.9} parent=1 // loop_pre_header
      _
    $region3: #{forward.9} parent=1 // loop_header
      %s11 = sphi 0, %s15
      %p12 = scmp.ge.s32.totalorder %s11, 4
      %s21 = sphi 0, %s23
      %s24 = sphi 0, %s21
      %s25 = sphi 0, %s24
      %s41 = sphi 0, %s25
      %s45 = sphi 0, %s45
      %s47 = sphi 0, %s45
      %s48 = sphi 0, %s47
      %s62 = sphi 0, %s48
      %s66 = sphi 0, %s66
      %s68 = sphi 0, %s66
      %s69 = sphi 0, %s68
      %s83 = sphi 0, %s69
      %s87 = sphi 0, %s87
      %s89 = sphi 0, %s87
      %s90 = sphi 0, %s89
      %s104 = sphi 0, %s90
      %s108 = sphi 0, %s108
      %s110 = sphi 0, %s108
      %s111 = sphi 0, %s110
      %s125 = sphi 0, %s111
      %s131 = sphi 0, %s133
      %s134 = sphi 0, %s131
      %s135 = sphi 0, %s134
      %s151 = sphi 0, %s135
    $region4: #{forward.9} parent=1 // loop_header_branch
      %14 = sbr.rel (%p12) target = $region8
    $region5: #{forward.9} parent=1 // loop_body
      %s16 = ssub.s32 %s11, 1
      %s17 = ssub.s32 %s11, 2
      %s18 = sadd.s32 %s11, 1
      %s19 = ssub.s32 %s11, %s18
      %p20 = scmp.eq.s32.totalorder %s19, 0
      %s22 = sadd.s32 %s21, 1
      %s23 = scalar_select %p20, %s21, %s22
      %p26 = pneg %p20
      %p27 = scmp.eq.s32.totalorder %s11, 1
      %p28 = por %p26, %p27
      %p29 = scmp.ne.s32.totalorder %s21, %s24
      %p30 = scmp.eq.s32.totalorder %s11, 0
      %p31 = por %p29, %p30
      %p32 = scmp.ne.s32.totalorder %s21, %s24
      %p33 = scmp.eq.s32.totalorder %s16, 1
      %p34 = por %p32, %p33
      %p35 = scmp.ne.s32.totalorder %s24, %s25
      %p36 = scmp.eq.s32.totalorder %s16, 0
      %p37 = por %p35, %p36
      %p38 = scmp.ne.s32.totalorder %s24, %s25
      %p39 = scmp.eq.s32.totalorder %s17, 1
      %p40 = por %p38, %p39
      %p42 = scmp.ne.s32.totalorder %s25, %s41
      %p43 = scmp.eq.s32.totalorder %s17, 0
      %p44 = por %p42, %p43
      %s46 = sadd.s32 %s45, 1
      %p49 = scmp.eq.s32.totalorder %s11, 1
      %p50 = scmp.ne.s32.totalorder %s45, %s47
      %p51 = scmp.eq.s32.totalorder %s11, 0
      %p52 = por %p50, %p51
      %p53 = scmp.ne.s32.totalorder %s45, %s47
      %p54 = scmp.eq.s32.totalorder %s16, 1
      %p55 = por %p53, %p54
      %p56 = scmp.ne.s32.totalorder %s47, %s48
      %p57 = scmp.eq.s32.totalorder %s16, 0
      %p58 = por %p56, %p57
      %p59 = scmp.ne.s32.totalorder %s47, %s48
      %p60 = scmp.eq.s32.totalorder %s17, 1
      %p61 = por %p59, %p60
      %p63 = scmp.ne.s32.totalorder %s48, %s62
      %p64 = scmp.eq.s32.totalorder %s17, 0
      %p65 = por %p63, %p64
      %s67 = sadd.s32 %s66, 1
      %p70 = scmp.eq.s32.totalorder %s11, 1
      %p71 = scmp.ne.s32.totalorder %s66, %s68
      %p72 = scmp.eq.s32.totalorder %s11, 0
      %p73 = por %p71, %p72
      %p74 = scmp.ne.s32.totalorder %s66, %s68
      %p75 = scmp.eq.s32.totalorder %s16, 1
      %p76 = por %p74, %p75
      %p77 = scmp.ne.s32.totalorder %s68, %s69
      %p78 = scmp.eq.s32.totalorder %s16, 0
      %p79 = por %p77, %p78
      %p80 = scmp.ne.s32.totalorder %s68, %s69
      %p81 = scmp.eq.s32.totalorder %s17, 1
      %p82 = por %p80, %p81
      %p84 = scmp.ne.s32.totalorder %s69, %s83
      %p85 = scmp.eq.s32.totalorder %s17, 0
      %p86 = por %p84, %p85
      %s88 = sadd.s32 %s87, 1
      %p91 = scmp.eq.s32.totalorder %s11, 1
      %p92 = scmp.ne.s32.totalorder %s87, %s89
      %p93 = scmp.eq.s32.totalorder %s11, 0
      %p94 = por %p92, %p93
      %p95 = scmp.ne.s32.totalorder %s87, %s89
      %p96 = scmp.eq.s32.totalorder %s16, 1
      %p97 = por %p95, %p96
      %p98 = scmp.ne.s32.totalorder %s89, %s90
      %p99 = scmp.eq.s32.totalorder %s16, 0
      %p100 = por %p98, %p99
      %p101 = scmp.ne.s32.totalorder %s89, %s90
      %p102 = scmp.eq.s32.totalorder %s17, 1
      %p103 = por %p101, %p102
      %p105 = scmp.ne.s32.totalorder %s90, %s104
      %p106 = scmp.eq.s32.totalorder %s17, 0
      %p107 = por %p105, %p106
      %s109 = sadd.s32 %s108, 1
      %p112 = scmp.eq.s32.totalorder %s11, 1
      %p113 = scmp.ne.s32.totalorder %s108, %s110
      %p114 = scmp.eq.s32.totalorder %s11, 0
      %p115 = por %p113, %p114
      %p116 = scmp.ne.s32.totalorder %s108, %s110
      %p117 = scmp.eq.s32.totalorder %s16, 1
      %p118 = por %p116, %p117
      %p119 = scmp.ne.s32.totalorder %s110, %s111
      %p120 = scmp.eq.s32.totalorder %s16, 0
      %p121 = por %p119, %p120
      %p122 = scmp.ne.s32.totalorder %s110, %s111
      %p123 = scmp.eq.s32.totalorder %s17, 1
      %p124 = por %p122, %p123
      %p126 = scmp.ne.s32.totalorder %s111, %s125
      %p127 = scmp.eq.s32.totalorder %s17, 0
      %p128 = por %p126, %p127
      %s129 = ssub.s32 %s11, %s18
      %p130 = scmp.eq.s32.totalorder %s129, 0
      %s132 = sadd.s32 %s131, 1
      %s133 = scalar_select %p130, %s131, %s132
      %p136 = pneg %p130
      %p137 = scmp.eq.s32.totalorder %s11, 1
      %p138 = por %p136, %p137
      %p139 = scmp.ne.s32.totalorder %s131, %s134
      %p140 = scmp.eq.s32.totalorder %s11, 0
      %p141 = por %p139, %p140
      %p142 = scmp.ne.s32.totalorder %s131, %s134
      %p143 = scmp.eq.s32.totalorder %s16, 1
      %p144 = por %p142, %p143
      %p145 = scmp.ne.s32.totalorder %s134, %s135
      %p146 = scmp.eq.s32.totalorder %s16, 0
      %p147 = por %p145, %p146
      %p148 = scmp.ne.s32.totalorder %s134, %s135
      %p149 = scmp.eq.s32.totalorder %s17, 1
      %p150 = por %p148, %p149
      %p152 = scmp.ne.s32.totalorder %s135, %s151
      %p153 = scmp.eq.s32.totalorder %s17, 0
      %p154 = por %p152, %p153
      %p155 = scmp.le.s32.totalorder 1, %s11
      %p156 = scmp.lt.s32.totalorder %s11, 3
      %p157 = pnand %p155, %p156
      %p158 = pneg %p157
      // Predicated region
      $region9: #{forward.9} parent=5 // pred_check
        _
      $region10: #{forward.9} parent=5 // pred_check_branch
        %160 = sbr.rel (%p157) target = $region12
      $region11: #{forward.9} parent=5 // pred_region
        %s161 = ssub.s32 %s11, 1
        // Predicated region
        $region13: #{forward.9} parent=11 // pred_check
          %p162 = pneg %p58
        $region14: #{forward.9} parent=11 // pred_check_branch
          %164 = sbr.rel (%p162) target = $region16
        $region15: #{forward.9} parent=11 // pred_region
          _
        $region16: #{forward.9} parent=11 // pred_fallthru
          _
        // Predicated region
        $region17: #{forward.9} parent=11 // pred_check
          %p165 = pneg %p79
        $region18: #{forward.9} parent=11 // pred_check_branch
          %167 = sbr.rel (%p165) target = $region20
        $region19: #{forward.9} parent=11 // pred_region
          _
        $region20: #{forward.9} parent=11 // pred_fallthru
          _
        // Predicated region
        $region21: #{forward.9} parent=11 // pred_check
          %p168 = pneg %p100
        $region22: #{forward.9} parent=11 // pred_check_branch
          %170 = sbr.rel (%p168) target = $region24
        $region23: #{forward.9} parent=11 // pred_region
          _
        $region24: #{forward.9} parent=11 // pred_fallthru
          _
        // Predicated region
        $region25: #{forward.9} parent=11 // pred_check
          %p171 = pneg %p121
        $region26: #{forward.9} parent=11 // pred_check_branch
          %173 = sbr.rel (%p171) target = $region28
        $region27: #{forward.9} parent=11 // pred_region
          _
        $region28: #{forward.9} parent=11 // pred_fallthru
          _
      $region12: #{forward.9} parent=5 // pred_fallthru
        _
      %p174 = scmp.lt.s32.totalorder %s11, 2
      // Predicated region
      $region29: #{forward.9} parent=5 // pred_check
        %p175 = pneg %p174
      $region30: #{forward.9} parent=5 // pred_check_branch
        %177 = sbr.rel (%p175) target = $region32
      $region31: #{forward.9} parent=5 // pred_region
        // Predicated region
        $region33: #{forward.9} parent=31 // pred_check
          %p178 = pneg %p31
        $region34: #{forward.9} parent=31 // pred_check_branch
          %180 = sbr.rel (%p178) target = $region36
        $region35: #{forward.9} parent=31 // pred_region
          %s181 = sand.u32 %s21, 1
          %s182 = sand.u32 %s21, 1
          %s183 = smul.addr %s182, 108
          %s184 = scalar_lea.vmem [#allocation2], %s183
          %s185 = smul.addr %s11, 4
          %s186 = scalar_lea.vmem %s0, %s185
          // Predicated region
          $region37: #{forward.9} parent=35 // pred_check
            _
          $region38: #{forward.9} parent=35 // pred_check_branch
            %188 = sbr.rel (0) target = $region40
          $region39: #{forward.9} parent=35 // pred_region
            // Predicated region
            $region41: #{forward.9} parent=39 // pred_check
              _
            $region42: #{forward.9} parent=39 // pred_check_branch
              %190 = sbr.rel target = $region44
            $region43: #{forward.9} parent=39 // pred_region
              // Predicated region
              $region56: #{forward.9} parent=43 // pred_check
                _
              $region57: #{forward.9} parent=43 // pred_check_branch
                %258 = sbr.rel (0) target = $region59
              $region58: #{forward.9} parent=43 // pred_region
                loop: start=0, step=1, limit=1
                $region60: #{forward.9} parent=58 // loop_pre_header
                  _
                $region61: #{forward.9} parent=58 // loop_header
                  %s260 = sphi 0, %s264
                  %p261 = scmp.ge.s32.totalorder %s260, 1
                  %s265 = sphi %s186, %s186
                  %s266 = sphi %s184, %s184
                $region62: #{forward.9} parent=58 // loop_header_branch
                  %263 = sbr.rel (%p261) target = $region66
                $region63: #{forward.9} parent=58 // loop_body
                  _
                $region64: #{forward.9} parent=58 // loop_footer
                  %s264 = sadd.s32 1, %s260
                $region65: #{forward.9} parent=58 // loop_footer_branch
                  %259 = sbr.rel target = $region61
                $region66: #{forward.9} parent=58 // loop_exit
                  _
                %s268 = ssub.s32 16, 1
                loop: start=0, step=1, limit=1
                $region67: #{forward.9} parent=58 // loop_pre_header
                  _
                $region68: #{forward.9} parent=58 // loop_header
                  %s270 = sphi 0, %s274
                  %p271 = scmp.ge.s32.totalorder %s270, 1
                  %s275 = sphi %s186, %s186
                  %s276 = sphi %s184, %s184
                $region69: #{forward.9} parent=58 // loop_header_branch
                  %273 = sbr.rel (%p271) target = $region73
                $region70: #{forward.9} parent=58 // loop_body
                  %v277 = vld [vmem:[%s275] sm:%s268]
                  %278 = vst [vmem:[%s276] sm:%s268] %v277
                  %v279 = vld [vmem:[%s275 + $0x8] sm:%s268]
                  %280 = vst [vmem:[%s276 + $0x4] sm:%s268] %v279
                  %v281 = vld [vmem:[%s275 + $0x10] sm:%s268]
                  %282 = vst [vmem:[%s276 + $0x8] sm:%s268] %v281
                  %v283 = vld [vmem:[%s275 + $0x18] sm:%s268]
                  %284 = vst [vmem:[%s276 + $0xc] sm:%s268] %v283
                  %v285 = vld [vmem:[%s275 + $0x20] sm:%s268]
                  %286 = vst [vmem:[%s276 + $0x10] sm:%s268] %v285
                  %v287 = vld [vmem:[%s275 + $0x28] sm:%s268]
                  %288 = vst [vmem:[%s276 + $0x14] sm:%s268] %v287
                  %v289 = vld [vmem:[%s275 + $0x30] sm:%s268]
                  %290 = vst [vmem:[%s276 + $0x18] sm:%s268] %v289
                  %v291 = vld [vmem:[%s275 + $0x38] sm:%s268]
                  %292 = vst [vmem:[%s276 + $0x1c] sm:%s268] %v291
                  %v293 = vld [vmem:[%s275 + $0x40] sm:%s268]
                  %294 = vst [vmem:[%s276 + $0x20] sm:%s268] %v293
                  %v295 = vld [vmem:[%s275 + $0x48] sm:%s268]
                  %296 = vst [vmem:[%s276 + $0x24] sm:%s268] %v295
                  %v297 = vld [vmem:[%s275 + $0x50] sm:%s268]
                  %298 = vst [vmem:[%s276 + $0x28] sm:%s268] %v297
                  %v299 = vld [vmem:[%s275 + $0x58] sm:%s268]
                  %300 = vst [vmem:[%s276 + $0x2c] sm:%s268] %v299
                  %v301 = vld [vmem:[%s275 + $0x60] sm:%s268]
                  %302 = vst [vmem:[%s276 + $0x30] sm:%s268] %v301
                  %v303 = vld [vmem:[%s275 + $0x68] sm:%s268]
                  %304 = vst [vmem:[%s276 + $0x34] sm:%s268] %v303
                  %v305 = vld [vmem:[%s275 + $0x70] sm:%s268]
                  %306 = vst [vmem:[%s276 + $0x38] sm:%s268] %v305
                  %v307 = vld [vmem:[%s275 + $0x78] sm:%s268]
                  %308 = vst [vmem:[%s276 + $0x3c] sm:%s268] %v307
                  %v309 = vld [vmem:[%s275 + $0x80] sm:%s268]
                  %310 = vst [vmem:[%s276 + $0x40] sm:%s268] %v309
                  %v311 = vld [vmem:[%s275 + $0x88] sm:%s268]
                  %312 = vst [vmem:[%s276 + $0x44] sm:%s268] %v311
                  %v313 = vld [vmem:[%s275 + $0x90] sm:%s268]
                  %314 = vst [vmem:[%s276 + $0x48] sm:%s268] %v313
                  %v315 = vld [vmem:[%s275 + $0x98] sm:%s268]
                  %316 = vst [vmem:[%s276 + $0x4c] sm:%s268] %v315
                  %v317 = vld [vmem:[%s275 + $0xa0] sm:%s268]
                  %318 = vst [vmem:[%s276 + $0x50] sm:%s268] %v317
                  %v319 = vld [vmem:[%s275 + $0xa8] sm:%s268]
                  %320 = vst [vmem:[%s276 + $0x54] sm:%s268] %v319
                  %v321 = vld [vmem:[%s275 + $0xb0] sm:%s268]
                  %322 = vst [vmem:[%s276 + $0x58] sm:%s268] %v321
                  %v323 = vld [vmem:[%s275 + $0xb8] sm:%s268]
                  %324 = vst [vmem:[%s276 + $0x5c] sm:%s268] %v323
                  %v325 = vld [vmem:[%s275 + $0xc0] sm:%s268]
                  %326 = vst [vmem:[%s276 + $0x60] sm:%s268] %v325
                  %v327 = vld [vmem:[%s275 + $0xc8] sm:%s268]
                  %328 = vst [vmem:[%s276 + $0x64] sm:%s268] %v327
                  %v329 = vld [vmem:[%s275 + $0xd0] sm:%s268]
                  %330 = vst [vmem:[%s276 + $0x68] sm:%s268] %v329
                $region71: #{forward.9} parent=58 // loop_footer
                  %s274 = sadd.s32 1, %s270
                $region72: #{forward.9} parent=58 // loop_footer_branch
                  %269 = sbr.rel target = $region68
                $region73: #{forward.9} parent=58 // loop_exit
                  _
              $region59: #{forward.9} parent=43 // pred_fallthru
                _
            $region44: #{forward.9} parent=39 // pred_fallthru
              _
            // Predicated region
            $region45: #{forward.9} parent=39 // pred_check
              _
            $region46: #{forward.9} parent=39 // pred_check_branch
              %192 = sbr.rel (0) target = $region48
            $region47: #{forward.9} parent=39 // pred_region
              %s194 = ssub.s32 16, 1
              loop: start=0, step=1, limit=1
              $region49: #{forward.9} parent=47 // loop_pre_header
                _
              $region50: #{forward.9} parent=47 // loop_header
                %s196 = sphi 0, %s200
                %p197 = scmp.ge.s32.totalorder %s196, 1
                %s201 = sphi %s186, %s186
                %s202 = sphi %s184, %s184
              $region51: #{forward.9} parent=47 // loop_header_branch
                %199 = sbr.rel (%p197) target = $region55
              $region52: #{forward.9} parent=47 // loop_body
                %v203 = vld [vmem:[%s201] sm:%s194]
                %204 = vst [vmem:[%s202] sm:%s194] %v203
                %v205 = vld [vmem:[%s201 + $0x8] sm:%s194]
                %206 = vst [vmem:[%s202 + $0x4] sm:%s194] %v205
                %v207 = vld [vmem:[%s201 + $0x10] sm:%s194]
                %208 = vst [vmem:[%s202 + $0x8] sm:%s194] %v207
                %v209 = vld [vmem:[%s201 + $0x18] sm:%s194]
                %210 = vst [vmem:[%s202 + $0xc] sm:%s194] %v209
                %v211 = vld [vmem:[%s201 + $0x20] sm:%s194]
                %212 = vst [vmem:[%s202 + $0x10] sm:%s194] %v211
                %v213 = vld [vmem:[%s201 + $0x28] sm:%s194]
                %214 = vst [vmem:[%s202 + $0x14] sm:%s194] %v213
                %v215 = vld [vmem:[%s201 + $0x30] sm:%s194]
                %216 = vst [vmem:[%s202 + $0x18] sm:%s194] %v215
                %v217 = vld [vmem:[%s201 + $0x38] sm:%s194]
                %218 = vst [vmem:[%s202 + $0x1c] sm:%s194] %v217
                %v219 = vld [vmem:[%s201 + $0x40] sm:%s194]
                %220 = vst [vmem:[%s202 + $0x20] sm:%s194] %v219
                %v221 = vld [vmem:[%s201 + $0x48] sm:%s194]
                %222 = vst [vmem:[%s202 + $0x24] sm:%s194] %v221
                %v223 = vld [vmem:[%s201 + $0x50] sm:%s194]
                %224 = vst [vmem:[%s202 + $0x28] sm:%s194] %v223
                %v225 = vld [vmem:[%s201 + $0x58] sm:%s194]
                %226 = vst [vmem:[%s202 + $0x2c] sm:%s194] %v225
                %v227 = vld [vmem:[%s201 + $0x60] sm:%s194]
                %228 = vst [vmem:[%s202 + $0x30] sm:%s194] %v227
                %v229 = vld [vmem:[%s201 + $0x68] sm:%s194]
                %230 = vst [vmem:[%s202 + $0x34] sm:%s194] %v229
                %v231 = vld [vmem:[%s201 + $0x70] sm:%s194]
                %232 = vst [vmem:[%s202 + $0x38] sm:%s194] %v231
                %v233 = vld [vmem:[%s201 + $0x78] sm:%s194]
                %234 = vst [vmem:[%s202 + $0x3c] sm:%s194] %v233
                %v235 = vld [vmem:[%s201 + $0x80] sm:%s194]
                %236 = vst [vmem:[%s202 + $0x40] sm:%s194] %v235
                %v237 = vld [vmem:[%s201 + $0x88] sm:%s194]
                %238 = vst [vmem:[%s202 + $0x44] sm:%s194] %v237
                %v239 = vld [vmem:[%s201 + $0x90] sm:%s194]
                %240 = vst [vmem:[%s202 + $0x48] sm:%s194] %v239
                %v241 = vld [vmem:[%s201 + $0x98] sm:%s194]
                %242 = vst [vmem:[%s202 + $0x4c] sm:%s194] %v241
                %v243 = vld [vmem:[%s201 + $0xa0] sm:%s194]
                %244 = vst [vmem:[%s202 + $0x50] sm:%s194] %v243
                %v245 = vld [vmem:[%s201 + $0xa8] sm:%s194]
                %246 = vst [vmem:[%s202 + $0x54] sm:%s194] %v245
                %v247 = vld [vmem:[%s201 + $0xb0] sm:%s194]
                %248 = vst [vmem:[%s202 + $0x58] sm:%s194] %v247
                %v249 = vld [vmem:[%s201 + $0xb8] sm:%s194]
                %250 = vst [vmem:[%s202 + $0x5c] sm:%s194] %v249
                %v251 = vld [vmem:[%s201 + $0xc0] sm:%s194]
                %252 = vst [vmem:[%s202 + $0x60] sm:%s194] %v251
                %v253 = vld [vmem:[%s201 + $0xc8] sm:%s194]
                %254 = vst [vmem:[%s202 + $0x64] sm:%s194] %v253
                %v255 = vld [vmem:[%s201 + $0xd0] sm:%s194]
                %256 = vst [vmem:[%s202 + $0x68] sm:%s194] %v255
              $region53: #{forward.9} parent=47 // loop_footer
                %s200 = sadd.s32 1, %s196
              $region54: #{forward.9} parent=47 // loop_footer_branch
                %195 = sbr.rel target = $region50
              $region55: #{forward.9} parent=47 // loop_exit
                _
            $region48: #{forward.9} parent=39 // pred_fallthru
              _
          $region40: #{forward.9} parent=35 // pred_fallthru
            _
          %331 = vnop
        $region36: #{forward.9} parent=31 // pred_fallthru
          _
      $region32: #{forward.9} parent=5 // pred_fallthru
        _
      %p332 = scmp.le.s32.totalorder 1, %s11
      %p333 = scmp.lt.s32.totalorder %s11, 3
      %p334 = pnand %p332, %p333
      %p335 = pneg %p334
      // Predicated region
      $region74: #{forward.9} parent=5 // pred_check
        _
      $region75: #{forward.9} parent=5 // pred_check_branch
        %337 = sbr.rel (%p334) target = $region77
      $region76: #{forward.9} parent=5 // pred_region
        %s338 = ssub.s32 %s11, 1
        %s339 = sand.u32 %s24, 1
        %s340 = sand.u32 %s24, 1
        %s341 = smul.addr %s340, 108
        %s342 = scalar_lea.vmem [#allocation2], %s341
        // Predicated region
        $region78: #{forward.9} parent=76 // pred_check
          %p343 = pneg %p37
        $region79: #{forward.9} parent=76 // pred_check_branch
          %345 = sbr.rel (%p343) target = $region81
        $region80: #{forward.9} parent=76 // pred_region
          _
        $region81: #{forward.9} parent=76 // pred_fallthru
          _
        %s346 = sand.u32 %s24, 1
        %s347 = sand.u32 %s24, 1
        %s348 = smul.addr %s347, 108
        %s349 = scalar_lea.vmem [#allocation2], %s348
        %p350 = pneg %p37
        %p351 = pneg %p34
        %p352 = pneg %p58
        %p353 = pneg %p55
        %p354 = pneg %p79
        %p355 = pneg %p76
        %p356 = pneg %p100
        %p357 = pneg %p97
        %p358 = pneg %p121
        %p359 = pneg %p118
        %p360 = pneg %p147
        %p361 = pneg %p144
        %s362 = sand.u32 %s134, 1
        %s363 = sand.u32 %s134, 1
        %s364 = smul.addr %s363, 8
        %s365 = scalar_lea.vmem [#allocation3], %s364
        %v367 = vld [vmem:[%s1] sm:$0xff]
        %v368 = vld [vmem:[%s1 + $0x8] sm:$0x33]
        %v369 = vld [vmem:[%s342] sm:$0xf]
        %v370 = vld [vmem:[%s342 + $0x4] sm:$0xf]
        %v371 = vld [vmem:[%s342 + $0x8] sm:$0xf]
        %v372 = vld [vmem:[%s342 + $0xc] sm:$0xf]
        %v373 = vld [vmem:[%s342 + $0x10] sm:$0xf]
        %v374 = vld [vmem:[%s342 + $0x14] sm:$0xf]
        %v375 = vld [vmem:[%s342 + $0x18] sm:$0xf]
        %v376 = vld [vmem:[%s342 + $0x1c] sm:$0xf]
        %v377 = vld [vmem:[%s342 + $0x20] sm:$0xf]
        %v378 = vld [vmem:[%s342 + $0x24] sm:$0xf]
        %v379 = vld [vmem:[%s342 + $0x28] sm:$0xf]
        %v380 = vld [vmem:[%s342 + $0x2c] sm:$0xf]
        %v381 = vld [vmem:[%s342 + $0x30] sm:$0xf]
        %v382 = vld [vmem:[%s342 + $0x34] sm:$0xf]
        %v383 = vld [vmem:[%s342 + $0x38] sm:$0xf]
        %v384 = vld [vmem:[%s342 + $0x3c] sm:$0xf]
        %v385 = vld [vmem:[%s342 + $0x40] sm:$0xf]
        %v386 = vld [vmem:[%s342 + $0x44] sm:$0xf]
        %v387 = vld [vmem:[%s342 + $0x48] sm:$0xf]
        %v388 = vld [vmem:[%s342 + $0x4c] sm:$0xf]
        %v389 = vld [vmem:[%s342 + $0x50] sm:$0xf]
        %v390 = vld [vmem:[%s342 + $0x54] sm:$0xf]
        %v391 = vld [vmem:[%s342 + $0x58] sm:$0xf]
        %v392 = vld [vmem:[%s342 + $0x5c] sm:$0xf]
        %v393 = vld [vmem:[%s342 + $0x60] sm:$0xf]
        %v394 = vld [vmem:[%s342 + $0x64] sm:$0xf]
        %v395 = vld [vmem:[%s342 + $0x68] sm:$0xf]
        %v396 = vld [vmem:[%s2] sm:$0xff]
        %v397 = vld [vmem:[%s2 + $0x8] sm:$0xf]
        %399 = vset.pattern.permute.xlu0 0
        %400 = vperm.xlu0 %399, %v396
        %v401 = vpop.permute.xlu0 %400
        %404 = vset.pattern.permute.xlu0 0
        %405 = vperm.xlu0 %404, %v397
        %v406 = vpop.permute.xlu0 %405
        %v410 = vunpack.c.l.b16 %v367
        %v411 = vunpack.c.h.b16 %v367
        %v412 = vunpack.c.l.b16 %v368
        %v413 = vunpack.c.h.b16 %v368
        %v414 = vpack.c.b16 %v412, %v410
        %v415 = vpack.c.b16 %v413, %v411
        %v444 = vunpack.c.l.b16 %v369
        %v445 = vunpack.c.l.b16 %v370
        %v446 = vunpack.c.l.b16 %v371
        %v447 = vunpack.c.l.b16 %v372
        %v448 = vunpack.c.l.b16 %v373
        %v449 = vunpack.c.l.b16 %v374
        %v450 = vunpack.c.l.b16 %v375
        %v451 = vunpack.c.l.b16 %v376
        %v452 = vunpack.c.l.b16 %v377
        %v453 = vunpack.c.l.b16 %v378
        %v454 = vunpack.c.l.b16 %v379
        %v455 = vunpack.c.l.b16 %v380
        %v456 = vunpack.c.l.b16 %v381
        %v457 = vunpack.c.l.b16 %v382
        %v458 = vunpack.c.l.b16 %v383
        %v459 = vunpack.c.l.b16 %v384
        %v460 = vunpack.c.l.b16 %v385
        %v461 = vunpack.c.l.b16 %v386
        %v462 = vunpack.c.l.b16 %v387
        %v463 = vunpack.c.l.b16 %v388
        %v464 = vunpack.c.l.b16 %v389
        %v465 = vunpack.c.l.b16 %v390
        %v466 = vunpack.c.l.b16 %v391
        %v467 = vunpack.c.l.b16 %v392
        %v468 = vunpack.c.l.b16 %v393
        %v469 = vunpack.c.l.b16 %v394
        %v470 = vunpack.c.l.b16 %v395
        %v471 = vpack.c.b16 %v445, %v444
        %v472 = vpack.c.b16 %v447, %v446
        %v473 = vpack.c.b16 %v449, %v448
        %v474 = vpack.c.b16 %v451, %v450
        %v475 = vpack.c.b16 %v453, %v452
        %v476 = vpack.c.b16 %v455, %v454
        %v477 = vpack.c.b16 %v457, %v456
        %v478 = vpack.c.b16 %v459, %v458
        %v479 = vpack.c.b16 %v461, %v460
        %v480 = vpack.c.b16 %v463, %v462
        %v481 = vpack.c.b16 %v465, %v464
        %v482 = vpack.c.b16 %v467, %v466
        %v483 = vpack.c.b16 %v469, %v468
        %v484 = vpack.c.b16 %v470, %v470
        %vm498 = vcmask 719872
        %v500 = vsel %vm498, %v415, 0
        %vm502 = vcmask 1043456
        %v504 = vsel %vm502, %v484, 0
        %506 = vmatpush.bf16.msra.mxu0 %v478
        %507 = vmatpush.bf16.msra.mxu0 %v477
        %508 = vmatpush.bf16.msra.mxu0 %v476
        %509 = vmatpush.bf16.msra.mxu0 %v475
        %510 = vmatpush.bf16.msra.mxu0 %v474
        %511 = vmatpush.bf16.msra.mxu0 %v473
        %512 = vmatpush.bf16.msra.mxu0 %v472
        %513 = vmatpush.bf16.msra.mxu0 %v471
        %514 = vmatmul.bf16.gmra.mxu0 %v414
        %v515 = vpop.f32.mrf.mxu0
        %v516 = vadd.f32 %v401, %v515
        %v517 = vpop.f32.mrf.mxu0
        %v518 = vadd.f32 %v406, %v517
        %519 = vdwg.mxu0
        %520 = vmatpush.bf16.msra.mxu0 0
        %521 = vmatpush.bf16.msra.mxu0 0
        %522 = vmatpush.bf16.msra.mxu0 %v504
        %523 = vmatpush.bf16.msra.mxu0 %v483
        %524 = vmatpush.bf16.msra.mxu0 %v482
        %525 = vmatpush.bf16.msra.mxu0 %v481
        %526 = vmatpush.bf16.msra.mxu0 %v480
        %527 = vmatpush.bf16.msra.mxu0 %v479
        %528 = vmatmul.bf16.gmra.mxu0 %v500
        %v529 = vpop.f32.mrf.mxu0
        %v530 = vadd.f32 %v516, %v529
        %v531 = vpop.f32.mrf.mxu0
        %v532 = vadd.f32 %v518, %v531
        %533 = vdwg.mxu0
        %v534 = vmax.f32 %v530, 0.0
        %v535 = vmax.f32 %v532, 0.0
        %v536 = vld [vmem:[%s3] sm:$0xff]
        %v537 = vld [vmem:[%s3 + $0x8] sm:$0xf]
        %539 = vset.pattern.permute.xlu0 0
        %540 = vperm.xlu0 %539, %v536
        %v541 = vpop.permute.xlu0 %540
        %544 = vset.pattern.permute.xlu0 0
        %545 = vperm.xlu0 %544, %v537
        %v546 = vpop.permute.xlu0 %545
        %v548 = vmul.f32 %v534, %v541
        %v549 = vmul.f32 %v535, %v546
        %v550 = vld [vmem:[%s4] sm:$0xff]
        %v551 = vld [vmem:[%s4 + $0x8] sm:$0xf]
        %553 = vset.pattern.permute.xlu0 0
        %554 = vperm.xlu0 %553, %v550
        %v555 = vpop.permute.xlu0 %554
        %558 = vset.pattern.permute.xlu0 0
        %559 = vperm.xlu0 %558, %v551
        %v560 = vpop.permute.xlu0 %559
        %v562 = vadd.f32 %v548, %v555
        %v563 = vadd.f32 %v549, %v560
        %v564 = vpack.c.bf16 %v562, %v562
        %v565 = vpack.c.bf16 %v563, %v563
        %566 = vst [vmem:[%s365] sm:$0xf] %v564
        %567 = vst [vmem:[%s365 + $0x4] sm:$0x3] %v565
        %s568 = sand.u32 %s134, 1
        %s569 = sand.u32 %s134, 1
        %s570 = smul.addr %s569, 8
        %s571 = scalar_lea.vmem [#allocation3], %s570
        // Predicated region
        $region82: #{forward.9} parent=76 // pred_check
          %p572 = pneg %p144
        $region83: #{forward.9} parent=76 // pred_check_branch
          %574 = sbr.rel (%p572) target = $region85
        $region84: #{forward.9} parent=76 // pred_region
          %s575 = smul.addr %s16, 4
          %s576 = scalar_lea.vmem %s5, %s575
          // Predicated region
          $region86: #{forward.9} parent=84 // pred_check
            _
          $region87: #{forward.9} parent=84 // pred_check_branch
            %578 = sbr.rel (0) target = $region89
          $region88: #{forward.9} parent=84 // pred_region
            // Predicated region
            $region90: #{forward.9} parent=88 // pred_check
              _
            $region91: #{forward.9} parent=88 // pred_check_branch
              %580 = sbr.rel target = $region93
            $region92: #{forward.9} parent=88 // pred_region
              // Predicated region
              $region105: #{forward.9} parent=92 // pred_check
                _
              $region106: #{forward.9} parent=92 // pred_check_branch
                %598 = sbr.rel (0) target = $region108
              $region107: #{forward.9} parent=92 // pred_region
                loop: start=0, step=1, limit=1
                $region109: #{forward.9} parent=107 // loop_pre_header
                  _
                $region110: #{forward.9} parent=107 // loop_header
                  %s600 = sphi 0, %s604
                  %p601 = scmp.ge.s32.totalorder %s600, 1
                  %s605 = sphi %s571, %s571
                  %s606 = sphi %s576, %s576
                $region111: #{forward.9} parent=107 // loop_header_branch
                  %603 = sbr.rel (%p601) target = $region115
                $region112: #{forward.9} parent=107 // loop_body
                  _
                $region113: #{forward.9} parent=107 // loop_footer
                  %s604 = sadd.s32 1, %s600
                $region114: #{forward.9} parent=107 // loop_footer_branch
                  %599 = sbr.rel target = $region110
                $region115: #{forward.9} parent=107 // loop_exit
                  _
                %s608 = ssub.s32 16, 1
                loop: start=0, step=1, limit=1
                $region116: #{forward.9} parent=107 // loop_pre_header
                  _
                $region117: #{forward.9} parent=107 // loop_header
                  %s610 = sphi 0, %s614
                  %p611 = scmp.ge.s32.totalorder %s610, 1
                  %s615 = sphi %s571, %s571
                  %s616 = sphi %s576, %s576
                $region118: #{forward.9} parent=107 // loop_header_branch
                  %613 = sbr.rel (%p611) target = $region122
                $region119: #{forward.9} parent=107 // loop_body
                  %v617 = vld [vmem:[%s615] sm:%s608]
                  %618 = vst [vmem:[%s616] sm:%s608] %v617
                  %v619 = vld [vmem:[%s615 + $0x4] sm:%s608]
                  %620 = vst [vmem:[%s616 + $0x8] sm:%s608] %v619
                $region120: #{forward.9} parent=107 // loop_footer
                  %s614 = sadd.s32 1, %s610
                $region121: #{forward.9} parent=107 // loop_footer_branch
                  %609 = sbr.rel target = $region117
                $region122: #{forward.9} parent=107 // loop_exit
                  _
              $region108: #{forward.9} parent=92 // pred_fallthru
                _
            $region93: #{forward.9} parent=88 // pred_fallthru
              _
            // Predicated region
            $region94: #{forward.9} parent=88 // pred_check
              _
            $region95: #{forward.9} parent=88 // pred_check_branch
              %582 = sbr.rel (0) target = $region97
            $region96: #{forward.9} parent=88 // pred_region
              %s584 = ssub.s32 16, 1
              loop: start=0, step=1, limit=1
              $region98: #{forward.9} parent=96 // loop_pre_header
                _
              $region99: #{forward.9} parent=96 // loop_header
                %s586 = sphi 0, %s590
                %p587 = scmp.ge.s32.totalorder %s586, 1
                %s591 = sphi %s571, %s571
                %s592 = sphi %s576, %s576
              $region100: #{forward.9} parent=96 // loop_header_branch
                %589 = sbr.rel (%p587) target = $region104
              $region101: #{forward.9} parent=96 // loop_body
                %v593 = vld [vmem:[%s591] sm:%s584]
                %594 = vst [vmem:[%s592] sm:%s584] %v593
                %v595 = vld [vmem:[%s591 + $0x4] sm:%s584]
                %596 = vst [vmem:[%s592 + $0x8] sm:%s584] %v595
              $region102: #{forward.9} parent=96 // loop_footer
                %s590 = sadd.s32 1, %s586
              $region103: #{forward.9} parent=96 // loop_footer_branch
                %585 = sbr.rel target = $region99
              $region104: #{forward.9} parent=96 // loop_exit
                _
            $region97: #{forward.9} parent=88 // pred_fallthru
              _
          $region89: #{forward.9} parent=84 // pred_fallthru
            _
          %621 = vnop
        $region85: #{forward.9} parent=76 // pred_fallthru
          _
      $region77: #{forward.9} parent=5 // pred_fallthru
        _
      %p622 = scmp.le.s32.totalorder 2, %s11
      // Predicated region
      $region123: #{forward.9} parent=5 // pred_check
        %p623 = pneg %p622
      $region124: #{forward.9} parent=5 // pred_check_branch
        %625 = sbr.rel (%p623) target = $region126
      $region125: #{forward.9} parent=5 // pred_region
        %s626 = ssub.s32 %s11, 2
        // Predicated region
        $region127: #{forward.9} parent=125 // pred_check
          %p627 = pneg %p150
        $region128: #{forward.9} parent=125 // pred_check_branch
          %629 = sbr.rel (%p627) target = $region130
        $region129: #{forward.9} parent=125 // pred_region
          %s630 = sand.u32 %s135, 1
          %s631 = sand.u32 %s135, 1
          %s632 = smul.addr %s631, 8
          %s633 = scalar_lea.vmem [#allocation3], %s632
        $region130: #{forward.9} parent=125 // pred_fallthru
          _
      $region126: #{forward.9} parent=5 // pred_fallthru
        _
    $region6: #{forward.9} parent=1 // loop_footer
      %s15 = sadd.s32 1, %s11
    $region7: #{forward.9} parent=1 // loop_footer_branch
      %10 = sbr.rel target = $region3
    $region8: #{forward.9} parent=1 // loop_exit
      _

// kernel: forward.10
$region0: #{forward.10}
  #allocation0 [shape = 'u32[]', space=smem, size = 0x4, offset = 0x4, fixed_abs, tag = 'smem constant byte address 0x4 - core index']
  #allocation1 [shape = 'u32[72,128]{1,0:T(1,128)}', space=vmem, size = 0x9000, scoped, tag = 'internal scratch']
  %s0 = inlined_call_operand.vmem [shape: bf16[108,128], index: 0, kind: input, shape index: {}]
  %s1 = inlined_call_operand.vmem [shape: bf16[14,108], index: 1, kind: input, shape index: {}]
  %s2 = inlined_call_operand.vmem [shape: f32[14,1], index: 2, kind: input, shape index: {}]
  %s3 = inlined_call_operand.vmem [shape: f32[14,1], index: 3, kind: input, shape index: {}]
  %s4 = inlined_call_operand.vmem [shape: f32[14,1], index: 4, kind: input, shape index: {}]
  %s5 = inlined_call_operand.vmem [shape: bf16[14,128], index: 5, kind: output, shape index: {}]
  %s6 = sld [smem:[#allocation0]]
  $region30: #{forward.10} parent=0
    _
  %s8 = ssub.s32 1, %s6
  %s9 = scalar_select 0, %s8, %s6
  // Predicated region
  $region2: #{forward.10} parent=0 // pred_check
    _
  $region3: #{forward.10} parent=0 // pred_check_branch
    %11 = sbr.rel (0) target = $region5
  $region4: #{forward.10} parent=0 // pred_region
    _
  $region5: #{forward.10} parent=0 // pred_fallthru
    _
  // Predicated region
  $region6: #{forward.10} parent=0 // pred_check
    _
  $region7: #{forward.10} parent=0 // pred_check_branch
    %13 = sbr.rel (0) target = $region9
  $region8: #{forward.10} parent=0 // pred_region
    _
  $region9: #{forward.10} parent=0 // pred_fallthru
    _
  // Predicated region
  $region10: #{forward.10} parent=0 // pred_check
    _
  $region11: #{forward.10} parent=0 // pred_check_branch
    %15 = sbr.rel (0) target = $region13
  $region12: #{forward.10} parent=0 // pred_region
    _
  $region13: #{forward.10} parent=0 // pred_fallthru
    _
  // Predicated region
  $region14: #{forward.10} parent=0 // pred_check
    _
  $region15: #{forward.10} parent=0 // pred_check_branch
    %17 = sbr.rel (0) target = $region17
  $region16: #{forward.10} parent=0 // pred_region
    _
  $region17: #{forward.10} parent=0 // pred_fallthru
    _
  // Predicated region
  $region18: #{forward.10} parent=0 // pred_check
    _
  $region19: #{forward.10} parent=0 // pred_check_branch
    %19 = sbr.rel (0) target = $region21
  $region20: #{forward.10} parent=0 // pred_region
    _
  $region21: #{forward.10} parent=0 // pred_fallthru
    _
  %v21 = vld [vmem:[%s1] sm:$0xf]
  %v22 = vld [vmem:[%s1 + $0x4] sm:$0x7]
  %v23 = vld [vmem:[%s0] sm:$0xf]
  %v24 = vld [vmem:[%s0 + $0x4] sm:$0xf]
  %v25 = vld [vmem:[%s0 + $0x8] sm:$0xf]
  %v26 = vld [vmem:[%s0 + $0xc] sm:$0xf]
  %v27 = vld [vmem:[%s0 + $0x10] sm:$0xf]
  %v28 = vld [vmem:[%s0 + $0x14] sm:$0xf]
  %v29 = vld [vmem:[%s0 + $0x18] sm:$0xf]
  %v30 = vld [vmem:[%s0 + $0x1c] sm:$0xf]
  %v31 = vld [vmem:[%s0 + $0x20] sm:$0xf]
  %v32 = vld [vmem:[%s0 + $0x24] sm:$0xf]
  %v33 = vld [vmem:[%s0 + $0x28] sm:$0xf]
  %v34 = vld [vmem:[%s0 + $0x2c] sm:$0xf]
  %v35 = vld [vmem:[%s0 + $0x30] sm:$0xf]
  %v36 = vld [vmem:[%s0 + $0x34] sm:$0x3]
  %v37 = vld [vmem:[%s2] sm:$0xff]
  %v38 = vld [vmem:[%s2 + $0x8] sm:$0x3f]
  %40 = vset.pattern.permute.xlu0 0
  %41 = vperm.xlu0 %40, %v37
  %v42 = vpop.permute.xlu0 %41
  %45 = vset.pattern.permute.xlu0 0
  %46 = vperm.xlu0 %45, %v38
  %v47 = vpop.permute.xlu0 %46
  %v51 = vunpack.c.l.b16 %v21
  %v52 = vunpack.c.l.b16 %v22
  %v53 = vpack.c.b16 %v52, %v51
  %v68 = vunpack.c.l.b16 %v23
  %v69 = vunpack.c.l.b16 %v24
  %v70 = vunpack.c.l.b16 %v25
  %v71 = vunpack.c.l.b16 %v26
  %v72 = vunpack.c.l.b16 %v27
  %v73 = vunpack.c.l.b16 %v28
  %v74 = vunpack.c.l.b16 %v29
  %v75 = vunpack.c.l.b16 %v30
  %v76 = vunpack.c.l.b16 %v31
  %v77 = vunpack.c.l.b16 %v32
  %v78 = vunpack.c.l.b16 %v33
  %v79 = vunpack.c.l.b16 %v34
  %v80 = vunpack.c.l.b16 %v35
  %v81 = vunpack.c.l.b16 %v36
  %v82 = vpack.c.b16 %v69, %v68
  %v83 = vpack.c.b16 %v71, %v70
  %v84 = vpack.c.b16 %v73, %v72
  %v85 = vpack.c.b16 %v75, %v74
  %v86 = vpack.c.b16 %v77, %v76
  %v87 = vpack.c.b16 %v79, %v78
  %v88 = vpack.c.b16 %v81, %v80
  %vm95 = vcmask 883712
  %v97 = vsel %vm95, %v53, 0
  %vm99 = vcmask 1045504
  %v101 = vsel %vm99, %v88, 0
  %103 = vmatpush.bf16.msra.mxu0 0
  %104 = vmatpush.bf16.msra.mxu0 %v101
  %105 = vmatpush.bf16.msra.mxu0 %v87
  %106 = vmatpush.bf16.msra.mxu0 %v86
  %107 = vmatpush.bf16.msra.mxu0 %v85
  %108 = vmatpush.bf16.msra.mxu0 %v84
  %109 = vmatpush.bf16.msra.mxu0 %v83
  %110 = vmatpush.bf16.msra.mxu0 %v82
  %111 = vmatmul.bf16.gmra.mxu0 %v97
  %v112 = vpop.f32.mrf.mxu0
  %v113 = vadd.f32 %v42, %v112
  %v114 = vpop.f32.mrf.mxu0
  %v115 = vadd.f32 %v47, %v114
  %116 = vdwg.mxu0
  %v117 = vmax.f32 %v113, 0.0
  %v118 = vmax.f32 %v115, 0.0
  %v119 = vld [vmem:[%s3] sm:$0xff]
  %v120 = vld [vmem:[%s3 + $0x8] sm:$0x3f]
  %122 = vset.pattern.permute.xlu0 0
  %123 = vperm.xlu0 %122, %v119
  %v124 = vpop.permute.xlu0 %123
  %127 = vset.pattern.permute.xlu0 0
  %128 = vperm.xlu0 %127, %v120
  %v129 = vpop.permute.xlu0 %128
  %v131 = vmul.f32 %v117, %v124
  %v132 = vmul.f32 %v118, %v129
  %v133 = vld [vmem:[%s4] sm:$0xff]
  %v134 = vld [vmem:[%s4 + $0x8] sm:$0x3f]
  %136 = vset.pattern.permute.xlu0 0
  %137 = vperm.xlu0 %136, %v133
  %v138 = vpop.permute.xlu0 %137
  %141 = vset.pattern.permute.xlu0 0
  %142 = vperm.xlu0 %141, %v134
  %v143 = vpop.permute.xlu0 %142
  %v145 = vadd.f32 %v131, %v138
  %v146 = vadd.f32 %v132, %v143
  %v147 = vpack.c.bf16 %v145, %v145
  %v148 = vpack.c.bf16 %v146, %v146
  %149 = vst [vmem:[%s5] sm:$0xf] %v147
  %150 = vst [vmem:[%s5 + $0x4] sm:$0x7] %v148
  // Predicated region
  $region22: #{forward.10} parent=0 // pred_check
    _
  $region23: #{forward.10} parent=0 // pred_check_branch
    %152 = sbr.rel (0) target = $region25
  $region24: #{forward.10} parent=0 // pred_region
    _
  $region25: #{forward.10} parent=0 // pred_fallthru
    _
  // Predicated region
  $region26: #{forward.10} parent=0 // pred_check
    _
  $region27: #{forward.10} parent=0 // pred_check_branch
    %154 = sbr.rel (0) target = $region29
  $region28: #{forward.10} parent=0 // pred_region
    _
  $region29: #{forward.10} parent=0 // pred_fallthru
    _

// kernel: forward.11
$region0: #{forward.11}
  #allocation0 [shape = 'u32[]', space=smem, size = 0x4, offset = 0x4, fixed_abs, tag = 'smem constant byte address 0x4 - core index']
  #allocation1 [shape = 'u32[72,128]{1,0:T(1,128)}', space=vmem, size = 0x9000, scoped, tag = 'internal scratch']
  %s0 = inlined_call_operand.vmem [shape: bf16[288,126], index: 0, kind: input, shape index: {}]
  %s1 = inlined_call_operand.vmem [shape: bf16[126,10], index: 1, kind: input, shape index: {}]
  %s2 = inlined_call_operand.vmem [shape: f32[1,10], index: 2, kind: input, shape index: {}]
  %s3 = inlined_call_operand.vmem [shape: f32[8,288], index: 3, kind: input, shape index: {}]
  %s4 = inlined_call_operand.vmem [shape: f32[8,10], index: 4, kind: output, shape index: {}]
  %s5 = sld [smem:[#allocation0]]
  $region26: #{forward.11} parent=0
    _
  %s7 = ssub.s32 1, %s5
  %s8 = scalar_select 0, %s7, %s5
  // Predicated region
  $region2: #{forward.11} parent=0 // pred_check
    _
  $region3: #{forward.11} parent=0 // pred_check_branch
    %10 = sbr.rel (0) target = $region5
  $region4: #{forward.11} parent=0 // pred_region
    _
  $region5: #{forward.11} parent=0 // pred_fallthru
    _
  // Predicated region
  $region6: #{forward.11} parent=0 // pred_check
    _
  $region7: #{forward.11} parent=0 // pred_check_branch
    %12 = sbr.rel (0) target = $region9
  $region8: #{forward.11} parent=0 // pred_region
    _
  $region9: #{forward.11} parent=0 // pred_fallthru
    _
  // Predicated region
  $region10: #{forward.11} parent=0 // pred_check
    _
  $region11: #{forward.11} parent=0 // pred_check_branch
    %14 = sbr.rel (0) target = $region13
  $region12: #{forward.11} parent=0 // pred_region
    _
  $region13: #{forward.11} parent=0 // pred_fallthru
    _
  // Predicated region
  $region14: #{forward.11} parent=0 // pred_check
    _
  $region15: #{forward.11} parent=0 // pred_check_branch
    %16 = sbr.rel (0) target = $region17
  $region16: #{forward.11} parent=0 // pred_region
    _
  $region17: #{forward.11} parent=0 // pred_fallthru
    _
  %v17 = vld [vmem:[%s0] sm:$0xf]
  %v18 = vld [vmem:[%s0 + $0x4] sm:$0xf]
  %v19 = vld [vmem:[%s0 + $0x8] sm:$0xf]
  %v20 = vld [vmem:[%s0 + $0xc] sm:$0xf]
  %v21 = vld [vmem:[%s0 + $0x10] sm:$0xf]
  %v22 = vld [vmem:[%s0 + $0x14] sm:$0xf]
  %v23 = vld [vmem:[%s0 + $0x18] sm:$0xf]
  %v24 = vld [vmem:[%s0 + $0x1c] sm:$0xf]
  %v25 = vld [vmem:[%s0 + $0x20] sm:$0xf]
  %v26 = vld [vmem:[%s0 + $0x24] sm:$0xf]
  %v27 = vld [vmem:[%s0 + $0x28] sm:$0xf]
  %v28 = vld [vmem:[%s0 + $0x2c] sm:$0xf]
  %v29 = vld [vmem:[%s0 + $0x30] sm:$0xf]
  %v30 = vld [vmem:[%s0 + $0x34] sm:$0xf]
  %v31 = vld [vmem:[%s0 + $0x38] sm:$0xf]
  %v32 = vld [vmem:[%s0 + $0x3c] sm:$0xf]
  %v33 = vld [vmem:[%s0 + $0x40] sm:$0xf]
  %v34 = vld [vmem:[%s0 + $0x44] sm:$0xf]
  %v35 = vld [vmem:[%s0 + $0x48] sm:$0xf]
  %v36 = vld [vmem:[%s0 + $0x4c] sm:$0xf]
  %v37 = vld [vmem:[%s0 + $0x50] sm:$0xf]
  %v38 = vld [vmem:[%s0 + $0x54] sm:$0xf]
  %v39 = vld [vmem:[%s0 + $0x58] sm:$0xf]
  %v40 = vld [vmem:[%s0 + $0x5c] sm:$0xf]
  %v41 = vld [vmem:[%s0 + $0x60] sm:$0xf]
  %v42 = vld [vmem:[%s0 + $0x64] sm:$0xf]
  %v43 = vld [vmem:[%s0 + $0x68] sm:$0xf]
  %v44 = vld [vmem:[%s0 + $0x6c] sm:$0xf]
  %v45 = vld [vmem:[%s0 + $0x70] sm:$0xf]
  %v46 = vld [vmem:[%s0 + $0x74] sm:$0xf]
  %v47 = vld [vmem:[%s0 + $0x78] sm:$0xf]
  %v48 = vld [vmem:[%s0 + $0x7c] sm:$0xf]
  %v49 = vld [vmem:[%s0 + $0x80] sm:$0xf]
  %v50 = vld [vmem:[%s0 + $0x84] sm:$0xf]
  %v51 = vld [vmem:[%s0 + $0x88] sm:$0xf]
  %v52 = vld [vmem:[%s0 + $0x8c] sm:$0xf]
  %v53 = vld [vmem:[%s1] sm:$0xf]
  %v54 = vld [vmem:[%s1 + $0x4] sm:$0xf]
  %v55 = vld [vmem:[%s1 + $0x8] sm:$0xf]
  %v56 = vld [vmem:[%s1 + $0xc] sm:$0xf]
  %v57 = vld [vmem:[%s1 + $0x10] sm:$0xf]
  %v58 = vld [vmem:[%s1 + $0x14] sm:$0xf]
  %v59 = vld [vmem:[%s1 + $0x18] sm:$0xf]
  %v60 = vld [vmem:[%s1 + $0x1c] sm:$0xf]
  %v61 = vld [vmem:[%s1 + $0x20] sm:$0xf]
  %v62 = vld [vmem:[%s1 + $0x24] sm:$0xf]
  %v63 = vld [vmem:[%s1 + $0x28] sm:$0xf]
  %v64 = vld [vmem:[%s1 + $0x2c] sm:$0xf]
  %v65 = vld [vmem:[%s1 + $0x30] sm:$0xf]
  %v66 = vld [vmem:[%s1 + $0x34] sm:$0xf]
  %v67 = vld [vmem:[%s1 + $0x38] sm:$0xf]
  %v68 = vld [vmem:[%s1 + $0x3c] sm:$0x7]
  %v69 = vld [vmem:[%s2] sm:$0x1]
  %v71 = vperm.slane %v69, 0
  %v109 = vunpack.c.l.b16 %v17
  %v110 = vunpack.c.l.b16 %v18
  %v111 = vunpack.c.l.b16 %v19
  %v112 = vunpack.c.l.b16 %v20
  %v113 = vunpack.c.l.b16 %v21
  %v114 = vunpack.c.l.b16 %v22
  %v115 = vunpack.c.l.b16 %v23
  %v116 = vunpack.c.l.b16 %v24
  %v117 = vunpack.c.l.b16 %v25
  %v118 = vunpack.c.l.b16 %v26
  %v119 = vunpack.c.l.b16 %v27
  %v120 = vunpack.c.l.b16 %v28
  %v121 = vunpack.c.l.b16 %v29
  %v122 = vunpack.c.l.b16 %v30
  %v123 = vunpack.c.l.b16 %v31
  %v124 = vunpack.c.l.b16 %v32
  %v125 = vunpack.c.l.b16 %v33
  %v126 = vunpack.c.l.b16 %v34
  %v127 = vunpack.c.l.b16 %v35
  %v128 = vunpack.c.l.b16 %v36
  %v129 = vunpack.c.l.b16 %v37
  %v130 = vunpack.c.l.b16 %v38
  %v131 = vunpack.c.l.b16 %v39
  %v132 = vunpack.c.l.b16 %v40
  %v133 = vunpack.c.l.b16 %v41
  %v134 = vunpack.c.l.b16 %v42
  %v135 = vunpack.c.l.b16 %v43
  %v136 = vunpack.c.l.b16 %v44
  %v137 = vunpack.c.l.b16 %v45
  %v138 = vunpack.c.l.b16 %v46
  %v139 = vunpack.c.l.b16 %v47
  %v140 = vunpack.c.l.b16 %v48
  %v141 = vunpack.c.l.b16 %v49
  %v142 = vunpack.c.l.b16 %v50
  %v143 = vunpack.c.l.b16 %v51
  %v144 = vunpack.c.l.b16 %v52
  %v145 = vpack.c.b16 %v110, %v109
  %v146 = vpack.c.b16 %v112, %v111
  %v147 = vpack.c.b16 %v114, %v113
  %v148 = vpack.c.b16 %v116, %v115
  %v149 = vpack.c.b16 %v118, %v117
  %v150 = vpack.c.b16 %v120, %v119
  %v151 = vpack.c.b16 %v122, %v121
  %v152 = vpack.c.b16 %v124, %v123
  %v153 = vpack.c.b16 %v126, %v125
  %v154 = vpack.c.b16 %v128, %v127
  %v155 = vpack.c.b16 %v130, %v129
  %v156 = vpack.c.b16 %v132, %v131
  %v157 = vpack.c.b16 %v134, %v133
  %v158 = vpack.c.b16 %v136, %v135
  %v159 = vpack.c.b16 %v138, %v137
  %v160 = vpack.c.b16 %v140, %v139
  %v161 = vpack.c.b16 %v142, %v141
  %v162 = vpack.c.b16 %v144, %v143
  %v179 = vunpack.c.l.b16 %v53
  %v180 = vunpack.c.l.b16 %v54
  %v181 = vunpack.c.l.b16 %v55
  %v182 = vunpack.c.l.b16 %v56
  %v183 = vunpack.c.l.b16 %v57
  %v184 = vunpack.c.l.b16 %v58
  %v185 = vunpack.c.l.b16 %v59
  %v186 = vunpack.c.l.b16 %v60
  %v187 = vunpack.c.l.b16 %v61
  %v188 = vunpack.c.l.b16 %v62
  %v189 = vunpack.c.l.b16 %v63
  %v190 = vunpack.c.l.b16 %v64
  %v191 = vunpack.c.l.b16 %v65
  %v192 = vunpack.c.l.b16 %v66
  %v193 = vunpack.c.l.b16 %v67
  %v194 = vunpack.c.l.b16 %v68
  %v195 = vpack.c.b16 %v180, %v179
  %v196 = vpack.c.b16 %v182, %v181
  %v197 = vpack.c.b16 %v184, %v183
  %v198 = vpack.c.b16 %v186, %v185
  %v199 = vpack.c.b16 %v188, %v187
  %v200 = vpack.c.b16 %v190, %v189
  %v201 = vpack.c.b16 %v192, %v191
  %v202 = vpack.c.b16 %v194, %v193
  %vm210 = vcmask 1031168
  %v212 = vsel %vm210, %v145, 0
  %v215 = vsel %vm210, %v146, 0
  %v218 = vsel %vm210, %v147, 0
  %v221 = vsel %vm210, %v148, 0
  %v224 = vsel %vm210, %v149, 0
  %v227 = vsel %vm210, %v150, 0
  %v230 = vsel %vm210, %v151, 0
  %v233 = vsel %vm210, %v152, 0
  %v236 = vsel %vm210, %v153, 0
  %v239 = vsel %vm210, %v154, 0
  %v242 = vsel %vm210, %v155, 0
  %v245 = vsel %vm210, %v156, 0
  %v248 = vsel %vm210, %v157, 0
  %v251 = vsel %vm210, %v158, 0
  %v254 = vsel %vm210, %v159, 0
  %v257 = vsel %vm210, %v160, 0
  %v260 = vsel %vm210, %v161, 0
  %v263 = vsel %vm210, %v162, 0
  %vm265 = vcmask 1046528
  %v267 = vsel %vm265, %v202, 0
  %269 = vmatpush.bf16.msra.mxu0 %v267
  %270 = vmatpush.bf16.msra.mxu0 %v201
  %271 = vmatpush.bf16.msra.mxu0 %v200
  %272 = vmatpush.bf16.msra.mxu0 %v199
  %273 = vmatpush.bf16.msra.mxu0 %v198
  %274 = vmatpush.bf16.msra.mxu0 %v197
  %275 = vmatpush.bf16.msra.mxu0 %v196
  %276 = vmatpush.bf16.msra.mxu0 %v195
  %277 = vmatmul.bf16.gmra.mxu0 %v212
  %v278 = vpop.f32.mrf.mxu0
  %v279 = vadd.f32 %v71, %v278
  %v280 = vpop.f32.mrf.mxu0
  %v281 = vadd.f32 %v71, %v280
  %282 = vmatmul.bf16.gmra.mxu0 %v215
  %v283 = vpop.f32.mrf.mxu0
  %v284 = vadd.f32 %v71, %v283
  %v285 = vpop.f32.mrf.mxu0
  %v286 = vadd.f32 %v71, %v285
  %287 = vmatmul.bf16.gmra.mxu0 %v218
  %v288 = vpop.f32.mrf.mxu0
  %v289 = vadd.f32 %v71, %v288
  %v290 = vpop.f32.mrf.mxu0
  %v291 = vadd.f32 %v71, %v290
  %292 = vmatmul.bf16.gmra.mxu0 %v221
  %v293 = vpop.f32.mrf.mxu0
  %v294 = vadd.f32 %v71, %v293
  %v295 = vpop.f32.mrf.mxu0
  %v296 = vadd.f32 %v71, %v295
  %297 = vmatmul.bf16.gmra.mxu0 %v224
  %v298 = vpop.f32.mrf.mxu0
  %v299 = vadd.f32 %v71, %v298
  %v300 = vpop.f32.mrf.mxu0
  %v301 = vadd.f32 %v71, %v300
  %302 = vmatmul.bf16.gmra.mxu0 %v227
  %v303 = vpop.f32.mrf.mxu0
  %v304 = vadd.f32 %v71, %v303
  %v305 = vpop.f32.mrf.mxu0
  %v306 = vadd.f32 %v71, %v305
  %307 = vmatmul.bf16.gmra.mxu0 %v230
  %v308 = vpop.f32.mrf.mxu0
  %v309 = vadd.f32 %v71, %v308
  %v310 = vpop.f32.mrf.mxu0
  %v311 = vadd.f32 %v71, %v310
  %312 = vmatmul.bf16.gmra.mxu0 %v233
  %v313 = vpop.f32.mrf.mxu0
  %v314 = vadd.f32 %v71, %v313
  %v315 = vpop.f32.mrf.mxu0
  %v316 = vadd.f32 %v71, %v315
  %317 = vmatmul.bf16.gmra.mxu0 %v236
  %v318 = vpop.f32.mrf.mxu0
  %v319 = vadd.f32 %v71, %v318
  %v320 = vpop.f32.mrf.mxu0
  %v321 = vadd.f32 %v71, %v320
  %322 = vmatmul.bf16.gmra.mxu0 %v239
  %v323 = vpop.f32.mrf.mxu0
  %v324 = vadd.f32 %v71, %v323
  %v325 = vpop.f32.mrf.mxu0
  %v326 = vadd.f32 %v71, %v325
  %327 = vmatmul.bf16.gmra.mxu0 %v242
  %v328 = vpop.f32.mrf.mxu0
  %v329 = vadd.f32 %v71, %v328
  %v330 = vpop.f32.mrf.mxu0
  %v331 = vadd.f32 %v71, %v330
  %332 = vmatmul.bf16.gmra.mxu0 %v245
  %v333 = vpop.f32.mrf.mxu0
  %v334 = vadd.f32 %v71, %v333
  %v335 = vpop.f32.mrf.mxu0
  %v336 = vadd.f32 %v71, %v335
  %337 = vmatmul.bf16.gmra.mxu0 %v248
  %v338 = vpop.f32.mrf.mxu0
  %v339 = vadd.f32 %v71, %v338
  %v340 = vpop.f32.mrf.mxu0
  %v341 = vadd.f32 %v71, %v340
  %342 = vmatmul.bf16.gmra.mxu0 %v251
  %v343 = vpop.f32.mrf.mxu0
  %v344 = vadd.f32 %v71, %v343
  %v345 = vpop.f32.mrf.mxu0
  %v346 = vadd.f32 %v71, %v345
  %347 = vmatmul.bf16.gmra.mxu0 %v254
  %v348 = vpop.f32.mrf.mxu0
  %v349 = vadd.f32 %v71, %v348
  %v350 = vpop.f32.mrf.mxu0
  %v351 = vadd.f32 %v71, %v350
  %352 = vmatmul.bf16.gmra.mxu0 %v257
  %v353 = vpop.f32.mrf.mxu0
  %v354 = vadd.f32 %v71, %v353
  %v355 = vpop.f32.mrf.mxu0
  %v356 = vadd.f32 %v71, %v355
  %357 = vmatmul.bf16.gmra.mxu0 %v260
  %v358 = vpop.f32.mrf.mxu0
  %v359 = vadd.f32 %v71, %v358
  %v360 = vpop.f32.mrf.mxu0
  %v361 = vadd.f32 %v71, %v360
  %362 = vmatmul.bf16.gmra.mxu0 %v263
  %v363 = vpop.f32.mrf.mxu0
  %v364 = vadd.f32 %v71, %v363
  %v365 = vpop.f32.mrf.mxu0
  %v366 = vadd.f32 %v71, %v365
  %367 = vdwg.mxu0
  %v368 = vmax.f32 %v279, 0.0
  %v369 = vmax.f32 %v281, 0.0
  %v370 = vmax.f32 %v284, 0.0
  %v371 = vmax.f32 %v286, 0.0
  %v372 = vmax.f32 %v289, 0.0
  %v373 = vmax.f32 %v291, 0.0
  %v374 = vmax.f32 %v294, 0.0
  %v375 = vmax.f32 %v296, 0.0
  %v376 = vmax.f32 %v299, 0.0
  %v377 = vmax.f32 %v301, 0.0
  %v378 = vmax.f32 %v304, 0.0
  %v379 = vmax.f32 %v306, 0.0
  %v380 = vmax.f32 %v309, 0.0
  %v381 = vmax.f32 %v311, 0.0
  %v382 = vmax.f32 %v314, 0.0
  %v383 = vmax.f32 %v316, 0.0
  %v384 = vmax.f32 %v319, 0.0
  %v385 = vmax.f32 %v321, 0.0
  %v386 = vmax.f32 %v324, 0.0
  %v387 = vmax.f32 %v326, 0.0
  %v388 = vmax.f32 %v329, 0.0
  %v389 = vmax.f32 %v331, 0.0
  %v390 = vmax.f32 %v334, 0.0
  %v391 = vmax.f32 %v336, 0.0
  %v392 = vmax.f32 %v339, 0.0
  %v393 = vmax.f32 %v341, 0.0
  %v394 = vmax.f32 %v344, 0.0
  %v395 = vmax.f32 %v346, 0.0
  %v396 = vmax.f32 %v349, 0.0
  %v397 = vmax.f32 %v351, 0.0
  %v398 = vmax.f32 %v354, 0.0
  %v399 = vmax.f32 %v356, 0.0
  %v400 = vmax.f32 %v359, 0.0
  %v401 = vmax.f32 %v361, 0.0
  %v402 = vmax.f32 %v364, 0.0
  %v403 = vmax.f32 %v366, 0.0
  %v404 = vld [vmem:[%s3] sm:$0xff]
  %v405 = vld [vmem:[%s3 + $0x8] sm:$0xff]
  %v406 = vld [vmem:[%s3 + $0x10] sm:$0xff]
  %vm407 = vcmask 261120
  %v409 = vsel %vm407, %v406, 0
  %411 = vmatpush.msra.mxu0 %v383
  %412 = vmatpush.msra.mxu0 %v382
  %413 = vmatpush.msra.mxu0 %v381
  %414 = vmatpush.msra.mxu0 %v380
  %415 = vmatpush.msra.mxu0 %v379
  %416 = vmatpush.msra.mxu0 %v378
  %417 = vmatpush.msra.mxu0 %v377
  %418 = vmatpush.msra.mxu0 %v376
  %419 = vmatpush.msra.mxu0 %v375
  %420 = vmatpush.msra.mxu0 %v374
  %421 = vmatpush.msra.mxu0 %v373
  %422 = vmatpush.msra.mxu0 %v372
  %423 = vmatpush.msra.mxu0 %v371
  %424 = vmatpush.msra.mxu0 %v370
  %425 = vmatpush.msra.mxu0 %v369
  %426 = vmatpush.msra.mxu0 %v368
  %427 = vmatmul.f32.gmra.mxu0 %v404
  %v428 = vpop.f32.mrf.mxu0
  %v429 = vadd.f32 0.0, %v428
  %430 = vdwg.mxu0
  %431 = vmatpush.msra.mxu0 %v399
  %432 = vmatpush.msra.mxu0 %v398
  %433 = vmatpush.msra.mxu0 %v397
  %434 = vmatpush.msra.mxu0 %v396
  %435 = vmatpush.msra.mxu0 %v395
  %436 = vmatpush.msra.mxu0 %v394
  %437 = vmatpush.msra.mxu0 %v393
  %438 = vmatpush.msra.mxu0 %v392
  %439 = vmatpush.msra.mxu0 %v391
  %440 = vmatpush.msra.mxu0 %v390
  %441 = vmatpush.msra.mxu0 %v389
  %442 = vmatpush.msra.mxu0 %v388
  %443 = vmatpush.msra.mxu0 %v387
  %444 = vmatpush.msra.mxu0 %v386
  %445 = vmatpush.msra.mxu0 %v385
  %446 = vmatpush.msra.mxu0 %v384
  %447 = vmatmul.f32.gmra.mxu0 %v405
  %v448 = vpop.f32.mrf.mxu0
  %v449 = vadd.f32 %v429, %v448
  %450 = vdwg.mxu0
  %451 = vmatpush.msra.mxu0 0.0
  %452 = vmatpush.msra.mxu0 0.0
  %453 = vmatpush.msra.mxu0 0.0
  %454 = vmatpush.msra.mxu0 0.0
  %455 = vmatpush.msra.mxu0 0.0
  %456 = vmatpush.msra.mxu0 0.0
  %457 = vmatpush.msra.mxu0 0.0
  %458 = vmatpush.msra.mxu0 0.0
  %459 = vmatpush.msra.mxu0 0.0
  %460 = vmatpush.msra.mxu0 0.0
  %461 = vmatpush.msra.mxu0 0.0
  %462 = vmatpush.msra.mxu0 0.0
  %463 = vmatpush.msra.mxu0 %v403
  %464 = vmatpush.msra.mxu0 %v402
  %465 = vmatpush.msra.mxu0 %v401
  %466 = vmatpush.msra.mxu0 %v400
  %467 = vmatmul.f32.gmra.mxu0 %v409
  %v468 = vpop.f32.mrf.mxu0
  %v469 = vadd.f32 %v449, %v468
  %470 = vdwg.mxu0
  %vm471 = vcmask 80896
  %v472 = vsel %vm471, %v469, -inf
  %473 = vmax.xlane.f32.xlu0 %v472
  %v474 = vpop.xlane.xlu0 %473
  %v475 = vsub.f32 %v469, %v474
  %v476 = vmul.f32 %v475, 1.442695
  %v477 = vpow.pop %v476
  %v478 = vsel %vm471, %v477, 0.0
  %479 = vadd.xlane.f32.xlu0 %v478
  %v480 = vpop.xlane.xlu0 %479
  %v481 = vlog2.pop %v480
  %v482 = vmul.f32 %v481, 0.6931472
  %v483 = vsub.f32 %v475, %v482
  %484 = vst.msk [vmem:[%s4] sm:$0xff] %vm471, %v483
  // Predicated region
  $region18: #{forward.11} parent=0 // pred_check
    _
  $region19: #{forward.11} parent=0 // pred_check_branch
    %486 = sbr.rel (0) target = $region21
  $region20: #{forward.11} parent=0 // pred_region
    _
  $region21: #{forward.11} parent=0 // pred_fallthru
    _
  // Predicated region
  $region22: #{forward.11} parent=0 // pred_check
    _
  $region23: #{forward.11} parent=0 // pred_check_branch
    %488 = sbr.rel (0) target = $region25
  $region24: #{forward.11} parent=0 // pred_region
    _
  $region25: #{forward.11} parent=0 // pred_fallthru
    _

</llo_original>
